<compile_context>
chip_gen: v5e
topology: v5e:2x2
jax: 0.10.0
libtpu: 0.0.40
codegen_flags: <defaults>
</compile_context>

<pallas_src>
import functools

import jax
import jax.numpy as jnp
from jax.experimental import pallas as pl
from jax.experimental.pallas import tpu as pltpu

EPS = 1e-5
_HIGHEST = jax.lax.Precision.HIGHEST


# ------------------------------------------------------------- tile sizing ---
def _largest_divisor(n, cap):
    for d in range(min(n, cap), 0, -1):
        if n % d == 0:
            return d
    return 1


def _channel_tile(c_out):
    # keep the second-to-last block dim a multiple of 8 (or the full dim)
    if c_out <= 128:
        return c_out
    for t in range(128, 7, -8):
        if c_out % t == 0:
            return t
    return c_out


def _batch_tile(n, c_in, tc, length, l_out, budget_bytes=8 << 20):
    # stay well under v7x's 64 MiB VMEM even with double-buffered blocks
    bn = _largest_divisor(n, 8)

    def live_bytes(t):
        return 8 * t * (c_in * length + tc * l_out)   # 2x-buffered f32 blocks

    while bn > 1 and live_bytes(bn) > budget_bytes:
        bn = _largest_divisor(n, bn - 1)
    return bn


# ------------------------------------------------------------------ kernel ---
def _branch1_kernel(x_ref, w1_ref, par_ref, o_ref, s1, q1, s2, q2,
                    *, stride, n_total):
    # x_ref  : (bn, C_in, L)    batch tile, native NCL layout
    # w1_ref : (tc, C_in)       pointwise-conv weight rows for this channel tile
    # par_ref: (tc, 8)          [wd(l-1), wd(l), wd(l+1), g1, b1, g2, b2, 0]
    # o_ref  : (bn, tc, L_out)  output tile, native NCL layout
    # s1/q1/s2/q2 : (tc, 1) f32 per-channel sum / sum-of-squares accumulators
    p = pl.program_id(1)
    b = pl.program_id(2)

    bn = x_ref.shape[0]
    length = x_ref.shape[2]
    l_out = o_ref.shape[2]

    w1 = w1_ref[...]
    par = par_ref[...]
    wd_m, wd_0, wd_p = par[:, 0:1], par[:, 1:2], par[:, 2:3]

    cnt1 = jnp.float32(n_total * length)
    cnt2 = jnp.float32(n_total * l_out)

    # 0/1 selection matrices: implement the three depthwise taps, the zero
    # padding AND the output stride in one shot on the otherwise-idle MXU
    # (no concatenate-pad copy, no lane-crossing slices).
    row = jax.lax.broadcasted_iota(jnp.int32, (length, l_out), 0)
    ctr = jax.lax.broadcasted_iota(jnp.int32, (length, l_out), 1) * stride
    sel_m = (row == ctr - 1).astype(jnp.float32)   # tap h[l-1]; col j=0 -> zero pad
    sel_0 = (row == ctr).astype(jnp.float32)       # tap h[l]
    sel_p = (row == ctr + 1).astype(jnp.float32)   # tap h[l+1]; last col may zero pad

    def pointwise(n):                               # (tc, L) = w1 @ x[n]
        return jnp.dot(w1, x_ref[n], precision=_HIGHEST,
                       preferred_element_type=jnp.float32)

    def bn_affine(s_ref, q_ref, cnt, gamma, beta):  # fold train-mode BN -> 1 FMA
        m = s_ref[...] / cnt
        v = jnp.maximum(q_ref[...] / cnt - m * m, 0.0)   # biased variance
        a = gamma * jax.lax.rsqrt(v + EPS)
        return a, beta - m * a

    def depthwise(h):                               # (tc, L) -> (tc, L_out)
        t_m = jnp.dot(h, sel_m, precision=_HIGHEST,
                      preferred_element_type=jnp.float32)
        t_0 = h if stride == 1 else jnp.dot(h, sel_0, precision=_HIGHEST,
                                            preferred_element_type=jnp.float32)
        t_p = jnp.dot(h, sel_p, precision=_HIGHEST,
                      preferred_element_type=jnp.float32)
        return wd_m * t_m + wd_0 * t_0 + wd_p * t_p

    @pl.when(jnp.logical_and(p == 0, b == 0))
    def _init():
        s1[...] = jnp.zeros_like(s1)
        q1[...] = jnp.zeros_like(q1)
        s2[...] = jnp.zeros_like(s2)
        q2[...] = jnp.zeros_like(q2)

    @pl.when(p == 0)                                # BN1 batch statistics
    def _phase0():
        for n in range(bn):
            y = pointwise(n)
            s1[...] += jnp.sum(y, axis=1, keepdims=True)
            q1[...] += jnp.sum(y * y, axis=1, keepdims=True)

    @pl.when(p == 1)                                # h, z and BN2 statistics
    def _phase1():
        a1, c1 = bn_affine(s1, q1, cnt1, par[:, 3:4], par[:, 4:5])
        for n in range(bn):
            h = jnp.maximum(pointwise(n) * a1 + c1, 0.0)
            z = depthwise(h)
            s2[...] += jnp.sum(z, axis=1, keepdims=True)
            q2[...] += jnp.sum(z * z, axis=1, keepdims=True)

    @pl.when(p == 2)                                # final normalize + store
    def _phase2():
        a1, c1 = bn_affine(s1, q1, cnt1, par[:, 3:4], par[:, 4:5])
        a2, c2 = bn_affine(s2, q2, cnt2, par[:, 5:6], par[:, 6:7])
        for n in range(bn):
            h = jnp.maximum(pointwise(n) * a1 + c1, 0.0)
            z = depthwise(h)
            o_ref[n] = jnp.maximum(z * a2 + c2, 0.0)   # direct (N, C, L) store


# ----------------------------------------------------------------- wrapper ---
@functools.partial(jax.jit, static_argnames=("stride",))
def branch1_forward(x, w1, wd, g1, b1, g2, b2, *, stride):
    """x: (N, C_in, L) -> (N, C_out, L_out), PyTorch NCL layout, float32."""
    x = x.astype(jnp.float32)
    n, c_in, length = x.shape
    c_out = w1.shape[0]
    l_out = (length - 1) // stride + 1          # k=3, pad=1

    # pack all small per-channel params into one lane-padded block
    par = jnp.stack(
        [wd[:, 0], wd[:, 1], wd[:, 2], g1, b1, g2, b2,
         jnp.zeros((c_out,), jnp.float32)], axis=1).astype(jnp.float32)

    tc = _channel_tile(c_out)
    bn = _batch_tile(n, c_in, tc, length, l_out)
    grid = (c_out // tc, 3, n // bn)            # (channel tiles, phase, batch tiles)

    kernel = functools.partial(_branch1_kernel, stride=stride, n_total=n)

    return pl.pallas_call(
        kernel,
        out_shape=jax.ShapeDtypeStruct((n, c_out, l_out), jnp.float32),
        grid_spec=pltpu.PrefetchScalarGridSpec(
            num_scalar_prefetch=0,
            grid=grid,
            in_specs=[
                pl.BlockSpec((bn, c_in, length), lambda c, p, b: (b, 0, 0)),
                pl.BlockSpec((tc, c_in), lambda c, p, b: (c, 0)),
                pl.BlockSpec((tc, 8), lambda c, p, b: (c, 0)),
            ],
            # output is only produced in phase 2; keep the block index constant
            # before that so the buffer is written back exactly once per tile.
            out_specs=pl.BlockSpec(
                (bn, tc, l_out),
                lambda c, p, b: (jnp.where(p == 2, b, 0), c, 0)),
            scratch_shapes=[pltpu.VMEM((tc, 1), jnp.float32)] * 4,
        ),
        compiler_params=pltpu.CompilerParams(
            dimension_semantics=("parallel", "arbitrary", "arbitrary"),
            vmem_limit_bytes=32 * 1024 * 1024,
        ),
    )(x, w1.astype(jnp.float32), par)


# --------------------------------------------------------------- reference ---
def branch1_reference(x, w1, wd, g1, b1, g2, b2, stride):
    y = jnp.einsum("oi,nil->nol", w1, x, precision=_HIGHEST)
    mean = jnp.mean(y, axis=(0, 2), keepdims=True)
    var = jnp.mean((y - mean) ** 2, axis=(0, 2), keepdims=True)
    h = jnp.maximum(g1[None, :, None] * (y - mean) * jax.lax.rsqrt(var + EPS)
                    + b1[None, :, None], 0.0)

    hp = jnp.pad(h, ((0, 0), (0, 0), (1, 1)))
    length = x.shape[2]
    l_out = (length - 1) // stride + 1
    idx = stride * jnp.arange(l_out)
    z = jnp.zeros((x.shape[0], w1.shape[0], l_out), jnp.float32)
    for k in range(3):
        z = z + wd[None, :, k:k + 1] * hp[:, :, idx + k]

    mean2 = jnp.mean(z, axis=(0, 2), keepdims=True)
    var2 = jnp.mean((z - mean2) ** 2, axis=(0, 2), keepdims=True)
    return jnp.maximum(g2[None, :, None] * (z - mean2) * jax.lax.rsqrt(var2 + EPS)
                       + b2[None, :, None], 0.0)


# -------------------------------------------------------------------- main ---
if __name__ == "__main__":
    key = jax.random.PRNGKey(0)
    k1, k2, k3 = jax.random.split(key, 3)

    N, C_IN, C_OUT, L = 2, 4, 8, 16
    x = jax.random.normal(k1, (N, C_IN, L), jnp.float32)
    w1 = 0.3 * jax.random.normal(k2, (C_OUT, C_IN), jnp.float32)   # Conv1d k=1 weight
    wd = 0.3 * jax.random.normal(k3, (C_OUT, 3), jnp.float32)      # depthwise k=3 weight
    g1 = 1.0 + 0.05 * jnp.arange(C_OUT, dtype=jnp.float32)         # BN1 gamma
    b1 = 0.02 * jnp.arange(C_OUT, dtype=jnp.float32) - 0.05        # BN1 beta
    g2 = 1.0 - 0.03 * jnp.arange(C_OUT, dtype=jnp.float32)         # BN2 gamma
    b2 = 0.01 * jnp.arange(C_OUT, dtype=jnp.float32)               # BN2 beta

    for stride in (1, 2):
        out = branch1_forward(x, w1, wd, g1, b1, g2, b2, stride=stride)
        out = jax.block_until_ready(out)
        ref = branch1_reference(x, w1, wd, g1, b1, g2, b2, stride)
        assert out.shape == ref.shape, (out.shape, ref.shape)
        assert jnp.allclose(out, ref, atol=1e-4, rtol=1e-4), \
            f"mismatch at stride={stride}"

    print("KERNEL_OK")
</pallas_src>

<mosaic_0001>
module attributes {stable_mosaic.version = 11 : i64} {
  func.func @_branch1_kernel(%arg0: i32, %arg1: i32, %arg2: i32, %arg3: memref<2x4x16xf32, #tpu.memory_space<vmem>>, %arg4: memref<8x4xf32, #tpu.memory_space<vmem>>, %arg5: memref<8x8xf32, #tpu.memory_space<vmem>>, %arg6: memref<2x8x16xf32, #tpu.memory_space<vmem>>, %arg7: memref<8x1xf32, #tpu.memory_space<vmem>>, %arg8: memref<8x1xf32, #tpu.memory_space<vmem>>, %arg9: memref<8x1xf32, #tpu.memory_space<vmem>>, %arg10: memref<8x1xf32, #tpu.memory_space<vmem>>) attributes {dimension_semantics = [#tpu.dimension_semantics<parallel>, #tpu.dimension_semantics<arbitrary>, #tpu.dimension_semantics<arbitrary>], iteration_bounds = array<i64: 1, 3, 1>, scalar_prefetch = 0 : i64, scratch_operands = 4 : i64, tpu.core_type = #tpu.core_type<tc>, window_params = [{transform_indices = @transform_0, window_bounds = array<i64: 2, 4, 16>}, {transform_indices = @transform_1, window_bounds = array<i64: 8, 4>}, {transform_indices = @transform_2, window_bounds = array<i64: 8, 8>}, {transform_indices = @transform_3, window_bounds = array<i64: 2, 8, 16>}]} {
    %c0 = arith.constant 0 : index
    %c0_0 = arith.constant 0 : index
    %0 = vector.load %arg4[%c0, %c0_0] : memref<8x4xf32, #tpu.memory_space<vmem>>, vector<8x4xf32>
    %c0_1 = arith.constant 0 : index
    %c0_2 = arith.constant 0 : index
    %1 = vector.load %arg5[%c0_1, %c0_2] : memref<8x8xf32, #tpu.memory_space<vmem>>, vector<8x8xf32>
    %2 = vector.extract_strided_slice %1 {offsets = [0, 0], sizes = [8, 1], strides = [1, 1]} : vector<8x8xf32> to vector<8x1xf32>
    %3 = vector.extract_strided_slice %1 {offsets = [0, 1], sizes = [8, 1], strides = [1, 1]} : vector<8x8xf32> to vector<8x1xf32>
    %4 = vector.extract_strided_slice %1 {offsets = [0, 2], sizes = [8, 1], strides = [1, 1]} : vector<8x8xf32> to vector<8x1xf32>
    %5 = tpu.iota {dimensions = array<i32: 0>} : vector<16x16xi32>
    %6 = tpu.iota {dimensions = array<i32: 1>} : vector<16x16xi32>
    %c1_i32 = arith.constant 1 : i32
    %7 = vector.broadcast %c1_i32 : i32 to vector<16x16xi32>
    %8 = arith.muli %6, %7 : vector<16x16xi32>
    %c1_i32_3 = arith.constant 1 : i32
    %9 = vector.broadcast %c1_i32_3 : i32 to vector<16x16xi32>
    %10 = arith.subi %8, %9 : vector<16x16xi32>
    %11 = arith.cmpi eq, %5, %10 : vector<16x16xi32>
    %12 = arith.extui %11 : vector<16x16xi1> to vector<16x16xi32>
    %13 = arith.sitofp %12 : vector<16x16xi32> to vector<16x16xf32>
    %c1_i32_4 = arith.constant 1 : i32
    %14 = vector.broadcast %c1_i32_4 : i32 to vector<16x16xi32>
    %15 = arith.addi %8, %14 : vector<16x16xi32>
    %16 = arith.cmpi eq, %5, %15 : vector<16x16xi32>
    %17 = arith.extui %16 : vector<16x16xi1> to vector<16x16xi32>
    %18 = arith.sitofp %17 : vector<16x16xi32> to vector<16x16xf32>
    %c0_i32 = arith.constant 0 : i32
    %19 = arith.cmpi eq, %arg1, %c0_i32 : i32
    %c0_i32_5 = arith.constant 0 : i32
    %20 = arith.cmpi eq, %arg2, %c0_i32_5 : i32
    %21 = arith.andi %19, %20 : i1
    %22 = arith.extui %21 : i1 to i32
    %c0_i32_6 = arith.constant 0 : i32
    %23 = arith.cmpi ne, %22, %c0_i32_6 : i32
    scf.if %23 {
      %cst_14 = arith.constant 0.000000e+00 : f32
      %33 = vector.broadcast %cst_14 : f32 to vector<8x1xf32>
      %c0_15 = arith.constant 0 : index
      %c0_16 = arith.constant 0 : index
      %34 = vector.load %arg7[%c0_15, %c0_16] : memref<8x1xf32, #tpu.memory_space<vmem>>, vector<8x1xf32>
      tpu.vector_store %arg7[%c0_15, %c0_16], %33 {strides = array<i32>} : memref<8x1xf32, #tpu.memory_space<vmem>>, vector<8x1xf32>,
      %cst_17 = arith.constant 0.000000e+00 : f32
      %35 = vector.broadcast %cst_17 : f32 to vector<8x1xf32>
      %c0_18 = arith.constant 0 : index
      %c0_19 = arith.constant 0 : index
      %36 = vector.load %arg8[%c0_18, %c0_19] : memref<8x1xf32, #tpu.memory_space<vmem>>, vector<8x1xf32>
      tpu.vector_store %arg8[%c0_18, %c0_19], %35 {strides = array<i32>} : memref<8x1xf32, #tpu.memory_space<vmem>>, vector<8x1xf32>,
      %cst_20 = arith.constant 0.000000e+00 : f32
      %37 = vector.broadcast %cst_20 : f32 to vector<8x1xf32>
      %c0_21 = arith.constant 0 : index
      %c0_22 = arith.constant 0 : index
      %38 = vector.load %arg9[%c0_21, %c0_22] : memref<8x1xf32, #tpu.memory_space<vmem>>, vector<8x1xf32>
      tpu.vector_store %arg9[%c0_21, %c0_22], %37 {strides = array<i32>} : memref<8x1xf32, #tpu.memory_space<vmem>>, vector<8x1xf32>,
      %cst_23 = arith.constant 0.000000e+00 : f32
      %39 = vector.broadcast %cst_23 : f32 to vector<8x1xf32>
      %c0_24 = arith.constant 0 : index
      %c0_25 = arith.constant 0 : index
      %40 = vector.load %arg10[%c0_24, %c0_25] : memref<8x1xf32, #tpu.memory_space<vmem>>, vector<8x1xf32>
      tpu.vector_store %arg10[%c0_24, %c0_25], %39 {strides = array<i32>} : memref<8x1xf32, #tpu.memory_space<vmem>>, vector<8x1xf32>,
    } else {
    }
    %c0_i32_7 = arith.constant 0 : i32
    %24 = arith.cmpi eq, %arg1, %c0_i32_7 : i32
    %25 = arith.extui %24 : i1 to i32
    %c0_i32_8 = arith.constant 0 : i32
    %26 = arith.cmpi ne, %25, %c0_i32_8 : i32
    scf.if %26 {
      %c0_14 = arith.constant 0 : index
      %c0_15 = arith.constant 0 : index
      %c0_16 = arith.constant 0 : index
      %33 = vector.load %arg3[%c0_14, %c0_15, %c0_16] : memref<2x4x16xf32, #tpu.memory_space<vmem>>, vector<1x4x16xf32>
      %34 = vector.shape_cast %33 : vector<1x4x16xf32> to vector<4x16xf32>
      %cst_17 = arith.constant dense<0.000000e+00> : vector<8x16xf32>
      %35 = tpu.matmul %0, %34, %cst_17 {dimension_numbers = #tpu.dot_dimension_numbers<[1], [0], [0], [1], [0, 0, 1, 1], [], []>, precision = #tpu.contract_precision<fp32>} : vector<8x4xf32>, vector<4x16xf32>, vector<8x16xf32> -> vector<8x16xf32>
      %c0_18 = arith.constant 0 : index
      %c0_19 = arith.constant 0 : index
      %36 = vector.load %arg7[%c0_18, %c0_19] : memref<8x1xf32, #tpu.memory_space<vmem>>, vector<8x1xf32>
      %cst_20 = arith.constant dense<0.000000e+00> : vector<8xf32>
      %37 = vector.multi_reduction <add>, %35, %cst_20 [1] : vector<8x16xf32> to vector<8xf32>
      %38 = vector.shape_cast %37 : vector<8xf32> to vector<8x1xf32>
      %39 = arith.addf %36, %38 : vector<8x1xf32>
      %c0_21 = arith.constant 0 : index
      %c0_22 = arith.constant 0 : index
      %40 = vector.load %arg7[%c0_21, %c0_22] : memref<8x1xf32, #tpu.memory_space<vmem>>, vector<8x1xf32>
      tpu.vector_store %arg7[%c0_21, %c0_22], %39 {strides = array<i32>} : memref<8x1xf32, #tpu.memory_space<vmem>>, vector<8x1xf32>,
      %c0_23 = arith.constant 0 : index
      %c0_24 = arith.constant 0 : index
      %41 = vector.load %arg8[%c0_23, %c0_24] : memref<8x1xf32, #tpu.memory_space<vmem>>, vector<8x1xf32>
      %42 = arith.mulf %35, %35 : vector<8x16xf32>
      %cst_25 = arith.constant dense<0.000000e+00> : vector<8xf32>
      %43 = vector.multi_reduction <add>, %42, %cst_25 [1] : vector<8x16xf32> to vector<8xf32>
      %44 = vector.shape_cast %43 : vector<8xf32> to vector<8x1xf32>
      %45 = arith.addf %41, %44 : vector<8x1xf32>
      %c0_26 = arith.constant 0 : index
      %c0_27 = arith.constant 0 : index
      %46 = vector.load %arg8[%c0_26, %c0_27] : memref<8x1xf32, #tpu.memory_space<vmem>>, vector<8x1xf32>
      tpu.vector_store %arg8[%c0_26, %c0_27], %45 {strides = array<i32>} : memref<8x1xf32, #tpu.memory_space<vmem>>, vector<8x1xf32>,
      %c1 = arith.constant 1 : index
      %c0_28 = arith.constant 0 : index
      %c0_29 = arith.constant 0 : index
      %47 = vector.load %arg3[%c1, %c0_28, %c0_29] : memref<2x4x16xf32, #tpu.memory_space<vmem>>, vector<1x4x16xf32>
      %48 = vector.shape_cast %47 : vector<1x4x16xf32> to vector<4x16xf32>
      %cst_30 = arith.constant dense<0.000000e+00> : vector<8x16xf32>
      %49 = tpu.matmul %0, %48, %cst_30 {dimension_numbers = #tpu.dot_dimension_numbers<[1], [0], [0], [1], [0, 0, 1, 1], [], []>, precision = #tpu.contract_precision<fp32>} : vector<8x4xf32>, vector<4x16xf32>, vector<8x16xf32> -> vector<8x16xf32>
      %c0_31 = arith.constant 0 : index
      %c0_32 = arith.constant 0 : index
      %50 = vector.load %arg7[%c0_31, %c0_32] : memref<8x1xf32, #tpu.memory_space<vmem>>, vector<8x1xf32>
      %cst_33 = arith.constant dense<0.000000e+00> : vector<8xf32>
      %51 = vector.multi_reduction <add>, %49, %cst_33 [1] : vector<8x16xf32> to vector<8xf32>
      %52 = vector.shape_cast %51 : vector<8xf32> to vector<8x1xf32>
      %53 = arith.addf %50, %52 : vector<8x1xf32>
      %c0_34 = arith.constant 0 : index
      %c0_35 = arith.constant 0 : index
      %54 = vector.load %arg7[%c0_34, %c0_35] : memref<8x1xf32, #tpu.memory_space<vmem>>, vector<8x1xf32>
      tpu.vector_store %arg7[%c0_34, %c0_35], %53 {strides = array<i32>} : memref<8x1xf32, #tpu.memory_space<vmem>>, vector<8x1xf32>,
      %c0_36 = arith.constant 0 : index
      %c0_37 = arith.constant 0 : index
      %55 = vector.load %arg8[%c0_36, %c0_37] : memref<8x1xf32, #tpu.memory_space<vmem>>, vector<8x1xf32>
      %56 = arith.mulf %49, %49 : vector<8x16xf32>
      %cst_38 = arith.constant dense<0.000000e+00> : vector<8xf32>
      %57 = vector.multi_reduction <add>, %56, %cst_38 [1] : vector<8x16xf32> to vector<8xf32>
      %58 = vector.shape_cast %57 : vector<8xf32> to vector<8x1xf32>
      %59 = arith.addf %55, %58 : vector<8x1xf32>
      %c0_39 = arith.constant 0 : index
      %c0_40 = arith.constant 0 : index
      %60 = vector.load %arg8[%c0_39, %c0_40] : memref<8x1xf32, #tpu.memory_space<vmem>>, vector<8x1xf32>
      tpu.vector_store %arg8[%c0_39, %c0_40], %59 {strides = array<i32>} : memref<8x1xf32, #tpu.memory_space<vmem>>, vector<8x1xf32>,
    } else {
    }
    %c1_i32_9 = arith.constant 1 : i32
    %27 = arith.cmpi eq, %arg1, %c1_i32_9 : i32
    %28 = arith.extui %27 : i1 to i32
    %cst = arith.constant 3.200000e+01 : f32
    %c0_i32_10 = arith.constant 0 : i32
    %29 = arith.cmpi ne, %28, %c0_i32_10 : i32
    scf.if %29 {
      %33 = vector.extract_strided_slice %1 {offsets = [0, 3], sizes = [8, 1], strides = [1, 1]} : vector<8x8xf32> to vector<8x1xf32>
      %34 = vector.extract_strided_slice %1 {offsets = [0, 4], sizes = [8, 1], strides = [1, 1]} : vector<8x8xf32> to vector<8x1xf32>
      %c0_14 = arith.constant 0 : index
      %c0_15 = arith.constant 0 : index
      %35 = vector.load %arg7[%c0_14, %c0_15] : memref<8x1xf32, #tpu.memory_space<vmem>>, vector<8x1xf32>
      %36 = vector.broadcast %cst : f32 to vector<8x1xf32>
      %37 = arith.divf %35, %36 : vector<8x1xf32>
      %c0_16 = arith.constant 0 : index
      %c0_17 = arith.constant 0 : index
      %38 = vector.load %arg8[%c0_16, %c0_17] : memref<8x1xf32, #tpu.memory_space<vmem>>, vector<8x1xf32>
      %39 = vector.broadcast %cst : f32 to vector<8x1xf32>
      %40 = arith.divf %38, %39 : vector<8x1xf32>
      %41 = arith.mulf %37, %37 : vector<8x1xf32>
      %42 = arith.subf %40, %41 : vector<8x1xf32>
      %cst_18 = arith.constant 0.000000e+00 : f32
      %43 = vector.broadcast %cst_18 : f32 to vector<8x1xf32>
      %44 = arith.maximumf %42, %43 : vector<8x1xf32>
      %cst_19 = arith.constant 9.99999974E-6 : f32
      %45 = vector.broadcast %cst_19 : f32 to vector<8x1xf32>
      %46 = arith.addf %44, %45 : vector<8x1xf32>
      %47 = math.rsqrt %46 : vector<8x1xf32>
      %48 = arith.mulf %33, %47 : vector<8x1xf32>
      %49 = arith.mulf %37, %48 : vector<8x1xf32>
      %50 = arith.subf %34, %49 : vector<8x1xf32>
      %c0_20 = arith.constant 0 : index
      %c0_21 = arith.constant 0 : index
      %c0_22 = arith.constant 0 : index
      %51 = vector.load %arg3[%c0_20, %c0_21, %c0_22] : memref<2x4x16xf32, #tpu.memory_space<vmem>>, vector<1x4x16xf32>
      %52 = vector.shape_cast %51 : vector<1x4x16xf32> to vector<4x16xf32>
      %cst_23 = arith.constant dense<0.000000e+00> : vector<8x16xf32>
      %53 = tpu.matmul %0, %52, %cst_23 {dimension_numbers = #tpu.dot_dimension_numbers<[1], [0], [0], [1], [0, 0, 1, 1], [], []>, precision = #tpu.contract_precision<fp32>} : vector<8x4xf32>, vector<4x16xf32>, vector<8x16xf32> -> vector<8x16xf32>
      %54 = vector.broadcast %48 : vector<8x1xf32> to vector<8x16xf32>
      %55 = arith.mulf %53, %54 : vector<8x16xf32>
      %56 = vector.broadcast %50 : vector<8x1xf32> to vector<8x16xf32>
      %57 = arith.addf %55, %56 : vector<8x16xf32>
      %cst_24 = arith.constant 0.000000e+00 : f32
      %58 = vector.broadcast %cst_24 : f32 to vector<8x16xf32>
      %59 = arith.maximumf %57, %58 : vector<8x16xf32>
      %cst_25 = arith.constant dense<0.000000e+00> : vector<8x16xf32>
      %60 = tpu.matmul %59, %13, %cst_25 {dimension_numbers = #tpu.dot_dimension_numbers<[1], [0], [0], [1], [0, 0, 1, 1], [], []>, precision = #tpu.contract_precision<fp32>} : vector<8x16xf32>, vector<16x16xf32>, vector<8x16xf32> -> vector<8x16xf32>
      %cst_26 = arith.constant dense<0.000000e+00> : vector<8x16xf32>
      %61 = tpu.matmul %59, %18, %cst_26 {dimension_numbers = #tpu.dot_dimension_numbers<[1], [0], [0], [1], [0, 0, 1, 1], [], []>, precision = #tpu.contract_precision<fp32>} : vector<8x16xf32>, vector<16x16xf32>, vector<8x16xf32> -> vector<8x16xf32>
      %62 = vector.broadcast %2 : vector<8x1xf32> to vector<8x16xf32>
      %63 = arith.mulf %62, %60 : vector<8x16xf32>
      %64 = vector.broadcast %3 : vector<8x1xf32> to vector<8x16xf32>
      %65 = arith.mulf %64, %59 : vector<8x16xf32>
      %66 = arith.addf %63, %65 : vector<8x16xf32>
      %67 = vector.broadcast %4 : vector<8x1xf32> to vector<8x16xf32>
      %68 = arith.mulf %67, %61 : vector<8x16xf32>
      %69 = arith.addf %66, %68 : vector<8x16xf32>
      %c0_27 = arith.constant 0 : index
      %c0_28 = arith.constant 0 : index
      %70 = vector.load %arg9[%c0_27, %c0_28] : memref<8x1xf32, #tpu.memory_space<vmem>>, vector<8x1xf32>
      %cst_29 = arith.constant dense<0.000000e+00> : vector<8xf32>
      %71 = vector.multi_reduction <add>, %69, %cst_29 [1] : vector<8x16xf32> to vector<8xf32>
      %72 = vector.shape_cast %71 : vector<8xf32> to vector<8x1xf32>
      %73 = arith.addf %70, %72 : vector<8x1xf32>
      %c0_30 = arith.constant 0 : index
      %c0_31 = arith.constant 0 : index
      %74 = vector.load %arg9[%c0_30, %c0_31] : memref<8x1xf32, #tpu.memory_space<vmem>>, vector<8x1xf32>
      tpu.vector_store %arg9[%c0_30, %c0_31], %73 {strides = array<i32>} : memref<8x1xf32, #tpu.memory_space<vmem>>, vector<8x1xf32>,
      %c0_32 = arith.constant 0 : index
      %c0_33 = arith.constant 0 : index
      %75 = vector.load %arg10[%c0_32, %c0_33] : memref<8x1xf32, #tpu.memory_space<vmem>>, vector<8x1xf32>
      %76 = arith.mulf %69, %69 : vector<8x16xf32>
      %cst_34 = arith.constant dense<0.000000e+00> : vector<8xf32>
      %77 = vector.multi_reduction <add>, %76, %cst_34 [1] : vector<8x16xf32> to vector<8xf32>
      %78 = vector.shape_cast %77 : vector<8xf32> to vector<8x1xf32>
      %79 = arith.addf %75, %78 : vector<8x1xf32>
      %c0_35 = arith.constant 0 : index
      %c0_36 = arith.constant 0 : index
      %80 = vector.load %arg10[%c0_35, %c0_36] : memref<8x1xf32, #tpu.memory_space<vmem>>, vector<8x1xf32>
      tpu.vector_store %arg10[%c0_35, %c0_36], %79 {strides = array<i32>} : memref<8x1xf32, #tpu.memory_space<vmem>>, vector<8x1xf32>,
      %c1 = arith.constant 1 : index
      %c0_37 = arith.constant 0 : index
      %c0_38 = arith.constant 0 : index
      %81 = vector.load %arg3[%c1, %c0_37, %c0_38] : memref<2x4x16xf32, #tpu.memory_space<vmem>>, vector<1x4x16xf32>
      %82 = vector.shape_cast %81 : vector<1x4x16xf32> to vector<4x16xf32>
      %cst_39 = arith.constant dense<0.000000e+00> : vector<8x16xf32>
      %83 = tpu.matmul %0, %82, %cst_39 {dimension_numbers = #tpu.dot_dimension_numbers<[1], [0], [0], [1], [0, 0, 1, 1], [], []>, precision = #tpu.contract_precision<fp32>} : vector<8x4xf32>, vector<4x16xf32>, vector<8x16xf32> -> vector<8x16xf32>
      %84 = vector.broadcast %48 : vector<8x1xf32> to vector<8x16xf32>
      %85 = arith.mulf %83, %84 : vector<8x16xf32>
      %86 = vector.broadcast %50 : vector<8x1xf32> to vector<8x16xf32>
      %87 = arith.addf %85, %86 : vector<8x16xf32>
      %cst_40 = arith.constant 0.000000e+00 : f32
      %88 = vector.broadcast %cst_40 : f32 to vector<8x16xf32>
      %89 = arith.maximumf %87, %88 : vector<8x16xf32>
      %cst_41 = arith.constant dense<0.000000e+00> : vector<8x16xf32>
      %90 = tpu.matmul %89, %13, %cst_41 {dimension_numbers = #tpu.dot_dimension_numbers<[1], [0], [0], [1], [0, 0, 1, 1], [], []>, precision = #tpu.contract_precision<fp32>} : vector<8x16xf32>, vector<16x16xf32>, vector<8x16xf32> -> vector<8x16xf32>
      %cst_42 = arith.constant dense<0.000000e+00> : vector<8x16xf32>
      %91 = tpu.matmul %89, %18, %cst_42 {dimension_numbers = #tpu.dot_dimension_numbers<[1], [0], [0], [1], [0, 0, 1, 1], [], []>, precision = #tpu.contract_precision<fp32>} : vector<8x16xf32>, vector<16x16xf32>, vector<8x16xf32> -> vector<8x16xf32>
      %92 = vector.broadcast %2 : vector<8x1xf32> to vector<8x16xf32>
      %93 = arith.mulf %92, %90 : vector<8x16xf32>
      %94 = vector.broadcast %3 : vector<8x1xf32> to vector<8x16xf32>
      %95 = arith.mulf %94, %89 : vector<8x16xf32>
      %96 = arith.addf %93, %95 : vector<8x16xf32>
      %97 = vector.broadcast %4 : vector<8x1xf32> to vector<8x16xf32>
      %98 = arith.mulf %97, %91 : vector<8x16xf32>
      %99 = arith.addf %96, %98 : vector<8x16xf32>
      %c0_43 = arith.constant 0 : index
      %c0_44 = arith.constant 0 : index
      %100 = vector.load %arg9[%c0_43, %c0_44] : memref<8x1xf32, #tpu.memory_space<vmem>>, vector<8x1xf32>
      %cst_45 = arith.constant dense<0.000000e+00> : vector<8xf32>
      %101 = vector.multi_reduction <add>, %99, %cst_45 [1] : vector<8x16xf32> to vector<8xf32>
      %102 = vector.shape_cast %101 : vector<8xf32> to vector<8x1xf32>
      %103 = arith.addf %100, %102 : vector<8x1xf32>
      %c0_46 = arith.constant 0 : index
      %c0_47 = arith.constant 0 : index
      %104 = vector.load %arg9[%c0_46, %c0_47] : memref<8x1xf32, #tpu.memory_space<vmem>>, vector<8x1xf32>
      tpu.vector_store %arg9[%c0_46, %c0_47], %103 {strides = array<i32>} : memref<8x1xf32, #tpu.memory_space<vmem>>, vector<8x1xf32>,
      %c0_48 = arith.constant 0 : index
      %c0_49 = arith.constant 0 : index
      %105 = vector.load %arg10[%c0_48, %c0_49] : memref<8x1xf32, #tpu.memory_space<vmem>>, vector<8x1xf32>
      %106 = arith.mulf %99, %99 : vector<8x16xf32>
      %cst_50 = arith.constant dense<0.000000e+00> : vector<8xf32>
      %107 = vector.multi_reduction <add>, %106, %cst_50 [1] : vector<8x16xf32> to vector<8xf32>
      %108 = vector.shape_cast %107 : vector<8xf32> to vector<8x1xf32>
      %109 = arith.addf %105, %108 : vector<8x1xf32>
      %c0_51 = arith.constant 0 : index
      %c0_52 = arith.constant 0 : index
      %110 = vector.load %arg10[%c0_51, %c0_52] : memref<8x1xf32, #tpu.memory_space<vmem>>, vector<8x1xf32>
      tpu.vector_store %arg10[%c0_51, %c0_52], %109 {strides = array<i32>} : memref<8x1xf32, #tpu.memory_space<vmem>>, vector<8x1xf32>,
    } else {
    }
    %c2_i32 = arith.constant 2 : i32
    %30 = arith.cmpi eq, %arg1, %c2_i32 : i32
    %31 = arith.extui %30 : i1 to i32
    %cst_11 = arith.constant 3.200000e+01 : f32
    %cst_12 = arith.constant 3.200000e+01 : f32
    %c0_i32_13 = arith.constant 0 : i32
    %32 = arith.cmpi ne, %31, %c0_i32_13 : i32
    scf.if %32 {
      %33 = vector.extract_strided_slice %1 {offsets = [0, 3], sizes = [8, 1], strides = [1, 1]} : vector<8x8xf32> to vector<8x1xf32>
      %34 = vector.extract_strided_slice %1 {offsets = [0, 4], sizes = [8, 1], strides = [1, 1]} : vector<8x8xf32> to vector<8x1xf32>
      %c0_14 = arith.constant 0 : index
      %c0_15 = arith.constant 0 : index
      %35 = vector.load %arg7[%c0_14, %c0_15] : memref<8x1xf32, #tpu.memory_space<vmem>>, vector<8x1xf32>
      %36 = vector.broadcast %cst_11 : f32 to vector<8x1xf32>
      %37 = arith.divf %35, %36 : vector<8x1xf32>
      %c0_16 = arith.constant 0 : index
      %c0_17 = arith.constant 0 : index
      %38 = vector.load %arg8[%c0_16, %c0_17] : memref<8x1xf32, #tpu.memory_space<vmem>>, vector<8x1xf32>
      %39 = vector.broadcast %cst_11 : f32 to vector<8x1xf32>
      %40 = arith.divf %38, %39 : vector<8x1xf32>
      %41 = arith.mulf %37, %37 : vector<8x1xf32>
      %42 = arith.subf %40, %41 : vector<8x1xf32>
      %cst_18 = arith.constant 0.000000e+00 : f32
      %43 = vector.broadcast %cst_18 : f32 to vector<8x1xf32>
      %44 = arith.maximumf %42, %43 : vector<8x1xf32>
      %cst_19 = arith.constant 9.99999974E-6 : f32
      %45 = vector.broadcast %cst_19 : f32 to vector<8x1xf32>
      %46 = arith.addf %44, %45 : vector<8x1xf32>
      %47 = math.rsqrt %46 : vector<8x1xf32>
      %48 = arith.mulf %33, %47 : vector<8x1xf32>
      %49 = arith.mulf %37, %48 : vector<8x1xf32>
      %50 = arith.subf %34, %49 : vector<8x1xf32>
      %51 = vector.extract_strided_slice %1 {offsets = [0, 5], sizes = [8, 1], strides = [1, 1]} : vector<8x8xf32> to vector<8x1xf32>
      %52 = vector.extract_strided_slice %1 {offsets = [0, 6], sizes = [8, 1], strides = [1, 1]} : vector<8x8xf32> to vector<8x1xf32>
      %c0_20 = arith.constant 0 : index
      %c0_21 = arith.constant 0 : index
      %53 = vector.load %arg9[%c0_20, %c0_21] : memref<8x1xf32, #tpu.memory_space<vmem>>, vector<8x1xf32>
      %54 = vector.broadcast %cst_12 : f32 to vector<8x1xf32>
      %55 = arith.divf %53, %54 : vector<8x1xf32>
      %c0_22 = arith.constant 0 : index
      %c0_23 = arith.constant 0 : index
      %56 = vector.load %arg10[%c0_22, %c0_23] : memref<8x1xf32, #tpu.memory_space<vmem>>, vector<8x1xf32>
      %57 = vector.broadcast %cst_12 : f32 to vector<8x1xf32>
      %58 = arith.divf %56, %57 : vector<8x1xf32>
      %59 = arith.mulf %55, %55 : vector<8x1xf32>
      %60 = arith.subf %58, %59 : vector<8x1xf32>
      %cst_24 = arith.constant 0.000000e+00 : f32
      %61 = vector.broadcast %cst_24 : f32 to vector<8x1xf32>
      %62 = arith.maximumf %60, %61 : vector<8x1xf32>
      %cst_25 = arith.constant 9.99999974E-6 : f32
      %63 = vector.broadcast %cst_25 : f32 to vector<8x1xf32>
      %64 = arith.addf %62, %63 : vector<8x1xf32>
      %65 = math.rsqrt %64 : vector<8x1xf32>
      %66 = arith.mulf %51, %65 : vector<8x1xf32>
      %67 = arith.mulf %55, %66 : vector<8x1xf32>
      %68 = arith.subf %52, %67 : vector<8x1xf32>
      %c0_26 = arith.constant 0 : index
      %c0_27 = arith.constant 0 : index
      %c0_28 = arith.constant 0 : index
      %69 = vector.load %arg3[%c0_26, %c0_27, %c0_28] : memref<2x4x16xf32, #tpu.memory_space<vmem>>, vector<1x4x16xf32>
      %70 = vector.shape_cast %69 : vector<1x4x16xf32> to vector<4x16xf32>
      %cst_29 = arith.constant dense<0.000000e+00> : vector<8x16xf32>
      %71 = tpu.matmul %0, %70, %cst_29 {dimension_numbers = #tpu.dot_dimension_numbers<[1], [0], [0], [1], [0, 0, 1, 1], [], []>, precision = #tpu.contract_precision<fp32>} : vector<8x4xf32>, vector<4x16xf32>, vector<8x16xf32> -> vector<8x16xf32>
      %72 = vector.broadcast %48 : vector<8x1xf32> to vector<8x16xf32>
      %73 = arith.mulf %71, %72 : vector<8x16xf32>
      %74 = vector.broadcast %50 : vector<8x1xf32> to vector<8x16xf32>
      %75 = arith.addf %73, %74 : vector<8x16xf32>
      %cst_30 = arith.constant 0.000000e+00 : f32
      %76 = vector.broadcast %cst_30 : f32 to vector<8x16xf32>
      %77 = arith.maximumf %75, %76 : vector<8x16xf32>
      %cst_31 = arith.constant dense<0.000000e+00> : vector<8x16xf32>
      %78 = tpu.matmul %77, %13, %cst_31 {dimension_numbers = #tpu.dot_dimension_numbers<[1], [0], [0], [1], [0, 0, 1, 1], [], []>, precision = #tpu.contract_precision<fp32>} : vector<8x16xf32>, vector<16x16xf32>, vector<8x16xf32> -> vector<8x16xf32>
      %cst_32 = arith.constant dense<0.000000e+00> : vector<8x16xf32>
      %79 = tpu.matmul %77, %18, %cst_32 {dimension_numbers = #tpu.dot_dimension_numbers<[1], [0], [0], [1], [0, 0, 1, 1], [], []>, precision = #tpu.contract_precision<fp32>} : vector<8x16xf32>, vector<16x16xf32>, vector<8x16xf32> -> vector<8x16xf32>
      %80 = vector.broadcast %2 : vector<8x1xf32> to vector<8x16xf32>
      %81 = arith.mulf %80, %78 : vector<8x16xf32>
      %82 = vector.broadcast %3 : vector<8x1xf32> to vector<8x16xf32>
      %83 = arith.mulf %82, %77 : vector<8x16xf32>
      %84 = arith.addf %81, %83 : vector<8x16xf32>
      %85 = vector.broadcast %4 : vector<8x1xf32> to vector<8x16xf32>
      %86 = arith.mulf %85, %79 : vector<8x16xf32>
      %87 = arith.addf %84, %86 : vector<8x16xf32>
      %88 = vector.broadcast %66 : vector<8x1xf32> to vector<8x16xf32>
      %89 = arith.mulf %87, %88 : vector<8x16xf32>
      %90 = vector.broadcast %68 : vector<8x1xf32> to vector<8x16xf32>
      %91 = arith.addf %89, %90 : vector<8x16xf32>
      %cst_33 = arith.constant 0.000000e+00 : f32
      %92 = vector.broadcast %cst_33 : f32 to vector<8x16xf32>
      %93 = arith.maximumf %91, %92 : vector<8x16xf32>
      %c0_34 = arith.constant 0 : index
      %c0_35 = arith.constant 0 : index
      %c0_36 = arith.constant 0 : index
      %94 = vector.load %arg6[%c0_34, %c0_35, %c0_36] : memref<2x8x16xf32, #tpu.memory_space<vmem>>, vector<1x8x16xf32>
      %95 = vector.shape_cast %94 : vector<1x8x16xf32> to vector<8x16xf32>
      %96 = vector.shape_cast %93 : vector<8x16xf32> to vector<1x8x16xf32>
      tpu.vector_store %arg6[%c0_34, %c0_35, %c0_36], %96 {strides = array<i32>} : memref<2x8x16xf32, #tpu.memory_space<vmem>>, vector<1x8x16xf32>,
      %c1 = arith.constant 1 : index
      %c0_37 = arith.constant 0 : index
      %c0_38 = arith.constant 0 : index
      %97 = vector.load %arg3[%c1, %c0_37, %c0_38] : memref<2x4x16xf32, #tpu.memory_space<vmem>>, vector<1x4x16xf32>
      %98 = vector.shape_cast %97 : vector<1x4x16xf32> to vector<4x16xf32>
      %cst_39 = arith.constant dense<0.000000e+00> : vector<8x16xf32>
      %99 = tpu.matmul %0, %98, %cst_39 {dimension_numbers = #tpu.dot_dimension_numbers<[1], [0], [0], [1], [0, 0, 1, 1], [], []>, precision = #tpu.contract_precision<fp32>} : vector<8x4xf32>, vector<4x16xf32>, vector<8x16xf32> -> vector<8x16xf32>
      %100 = vector.broadcast %48 : vector<8x1xf32> to vector<8x16xf32>
      %101 = arith.mulf %99, %100 : vector<8x16xf32>
      %102 = vector.broadcast %50 : vector<8x1xf32> to vector<8x16xf32>
      %103 = arith.addf %101, %102 : vector<8x16xf32>
      %cst_40 = arith.constant 0.000000e+00 : f32
      %104 = vector.broadcast %cst_40 : f32 to vector<8x16xf32>
      %105 = arith.maximumf %103, %104 : vector<8x16xf32>
      %cst_41 = arith.constant dense<0.000000e+00> : vector<8x16xf32>
      %106 = tpu.matmul %105, %13, %cst_41 {dimension_numbers = #tpu.dot_dimension_numbers<[1], [0], [0], [1], [0, 0, 1, 1], [], []>, precision = #tpu.contract_precision<fp32>} : vector<8x16xf32>, vector<16x16xf32>, vector<8x16xf32> -> vector<8x16xf32>
      %cst_42 = arith.constant dense<0.000000e+00> : vector<8x16xf32>
      %107 = tpu.matmul %105, %18, %cst_42 {dimension_numbers = #tpu.dot_dimension_numbers<[1], [0], [0], [1], [0, 0, 1, 1], [], []>, precision = #tpu.contract_precision<fp32>} : vector<8x16xf32>, vector<16x16xf32>, vector<8x16xf32> -> vector<8x16xf32>
      %108 = vector.broadcast %2 : vector<8x1xf32> to vector<8x16xf32>
      %109 = arith.mulf %108, %106 : vector<8x16xf32>
      %110 = vector.broadcast %3 : vector<8x1xf32> to vector<8x16xf32>
      %111 = arith.mulf %110, %105 : vector<8x16xf32>
      %112 = arith.addf %109, %111 : vector<8x16xf32>
      %113 = vector.broadcast %4 : vector<8x1xf32> to vector<8x16xf32>
      %114 = arith.mulf %113, %107 : vector<8x16xf32>
      %115 = arith.addf %112, %114 : vector<8x16xf32>
      %116 = vector.broadcast %66 : vector<8x1xf32> to vector<8x16xf32>
      %117 = arith.mulf %115, %116 : vector<8x16xf32>
      %118 = vector.broadcast %68 : vector<8x1xf32> to vector<8x16xf32>
      %119 = arith.addf %117, %118 : vector<8x16xf32>
      %cst_43 = arith.constant 0.000000e+00 : f32
      %120 = vector.broadcast %cst_43 : f32 to vector<8x16xf32>
      %121 = arith.maximumf %119, %120 : vector<8x16xf32>
      %c1_44 = arith.constant 1 : index
      %c0_45 = arith.constant 0 : index
      %c0_46 = arith.constant 0 : index
      %122 = vector.load %arg6[%c1_44, %c0_45, %c0_46] : memref<2x8x16xf32, #tpu.memory_space<vmem>>, vector<1x8x16xf32>
      %123 = vector.shape_cast %122 : vector<1x8x16xf32> to vector<8x16xf32>
      %124 = vector.shape_cast %121 : vector<8x16xf32> to vector<1x8x16xf32>
      tpu.vector_store %arg6[%c1_44, %c0_45, %c0_46], %124 {strides = array<i32>} : memref<2x8x16xf32, #tpu.memory_space<vmem>>, vector<1x8x16xf32>,
    } else {
    }
    return
  }
  func.func @transform_0(%arg0: i32, %arg1: i32, %arg2: i32) -> (i32, i32, i32) {
    %c0_i32 = arith.constant 0 : i32
    %c0_i32_0 = arith.constant 0 : i32
    %c0_i32_1 = arith.constant 0 : i32
    return %arg2, %c0_i32, %c0_i32_0 : i32, i32, i32
  }
  func.func @transform_1(%arg0: i32, %arg1: i32, %arg2: i32) -> (i32, i32) {
    %c0_i32 = arith.constant 0 : i32
    %c0_i32_0 = arith.constant 0 : i32
    return %arg0, %c0_i32 : i32, i32
  }
  func.func @transform_2(%arg0: i32, %arg1: i32, %arg2: i32) -> (i32, i32) {
    %c0_i32 = arith.constant 0 : i32
    %c0_i32_0 = arith.constant 0 : i32
    return %arg0, %c0_i32 : i32, i32
  }
  func.func @transform_3(%arg0: i32, %arg1: i32, %arg2: i32) -> (i32, i32, i32) {
    %c2_i32 = arith.constant 2 : i32
    %0 = arith.cmpi eq, %arg1, %c2_i32 : i32
    %c0_i32 = arith.constant 0 : i32
    %1 = arith.select %0, %arg2, %c0_i32 : i32
    %c0_i32_0 = arith.constant 0 : i32
    %c0_i32_1 = arith.constant 0 : i32
    return %1, %arg0, %c0_i32_0 : i32, i32, i32
  }
}

</mosaic_0001>

<llo_original>
// kernel: branch1_forward.1
$region0: #{branch1_forward.1}
  #allocation0 [shape = 'u32[]', space=smem, size = 0x4, offset = 0x4, fixed_abs, tag = 'smem constant byte address 0x4 - core index']
  #allocation1 [shape = 'u32[72,128]{1,0:T(1,128)}', space=vmem, size = 0x9000, scoped, tag = 'internal scratch']
  #allocation2 [shape = 'f32[8,1]{1,0:T(8,128)}', space=vmem, size = 0x1000, scoped, tag = 'scratch operand']
  #allocation3 [shape = 'f32[8,1]{1,0:T(8,128)}', space=vmem, size = 0x1000, scoped, tag = 'scratch operand']
  #allocation4 [shape = 'f32[8,1]{1,0:T(8,128)}', space=vmem, size = 0x1000, scoped, tag = 'scratch operand']
  #allocation5 [shape = 'f32[8,1]{1,0:T(8,128)}', space=vmem, size = 0x1000, scoped, tag = 'scratch operand']
  %s0 = inlined_call_operand.vmem [shape: f32[2,4,16], index: 0, kind: input, shape index: {}]
  %s1 = inlined_call_operand.vmem [shape: f32[8,4], index: 1, kind: input, shape index: {}]
  %s2 = inlined_call_operand.vmem [shape: f32[8,8], index: 2, kind: input, shape index: {}]
  %s3 = inlined_call_operand.hbm [shape: f32[2,8,16], index: 3, kind: output, shape index: {}]
  %s4 = sld [smem:[#allocation0]]
  $region61: #{branch1_forward.1} parent=0
    _
  %s6 = ssub.s32 1, %s4
  %s7 = scalar_select 0, %s6, %s4
  $region1: #{branch1_forward.1} parent=0
    #allocation6 [shape = 'u8[16384]{0}', space=vmem, size = 0x4000, scoped, tag = 'output window, operand 0']
    #allocation7 [shape = 's32[2]{0}', space=sflag, size = 0x8, scoped, tag = 'scoped memory for branch1_forward.1']
    %8 = vsyncpa [#allocation7], 0
    %s9 = scalar_lea.sflag [#allocation7], 1
    %10 = vsyncpa %s9, 0
    loop: start=0, step=1, limit=5
    $region2: #{branch1_forward.1} parent=1 // loop_pre_header
      _
    $region3: #{branch1_forward.1} parent=1 // loop_header
      %s12 = sphi 0, %s16
      %p13 = scmp.ge.s32.totalorder %s12, 5
      %s19 = sphi 0, %s38
      %s20 = sphi 0, %s34
      %s21 = sphi 0, %s30
      %s22 = sphi 0, %s19
      %s23 = sphi 0, %s20
      %s24 = sphi 0, %s21
      %s25 = sphi 0, %s22
      %s26 = sphi 0, %s23
      %s27 = sphi 0, %s24
      %s41 = sphi 0, %s43
      %s44 = sphi 0, %s41
      %s45 = sphi 0, %s44
      %s61 = sphi 0, %s45
      %s67 = sphi 0, %s69
      %s70 = sphi 0, %s67
      %s71 = sphi 0, %s70
      %s87 = sphi 0, %s71
      %s93 = sphi 0, %s95
      %s96 = sphi 0, %s93
      %s97 = sphi 0, %s96
      %s113 = sphi 0, %s97
      %s125 = sphi 0, %s127
      %s128 = sphi 0, %s125
      %s129 = sphi 0, %s128
      %s145 = sphi 0, %s129
    $region4: #{branch1_forward.1} parent=1 // loop_header_branch
      %15 = sbr.rel (%p13) target = $region8
    $region5: #{branch1_forward.1} parent=1 // loop_body
      %s17 = ssub.s32 %s12, 1
      %s18 = ssub.s32 %s12, 2
      %s28 = sadd.s32 1, %s21
      %p29 = scmp.ge.s32.totalorder %s28, 1
      %s30 = scalar_select %p29, 0, %s28
      %s31 = sadd.s32 1, %s20
      %s32 = scalar_select %p29, %s31, %s20
      %p33 = scmp.ge.s32.totalorder %s32, 3
      %s34 = scalar_select %p33, 0, %s32
      %s35 = sadd.s32 1, %s19
      %s36 = scalar_select %p33, %s35, %s19
      %p37 = scmp.ge.s32.totalorder %s36, 1
      %s38 = scalar_select %p37, 0, %s36
      %s39 = ssub.s32 %s21, %s30
      %p40 = scmp.eq.s32.totalorder %s39, 0
      %s42 = sadd.s32 %s41, 1
      %s43 = scalar_select %p40, %s41, %s42
      %p46 = pneg %p40
      %p47 = scmp.eq.s32.totalorder %s12, 2
      %p48 = por %p46, %p47
      %p49 = scmp.ne.s32.totalorder %s41, %s44
      %p50 = scmp.eq.s32.totalorder %s12, 0
      %p51 = por %p49, %p50
      %p52 = scmp.ne.s32.totalorder %s41, %s44
      %p53 = scmp.eq.s32.totalorder %s17, 2
      %p54 = por %p52, %p53
      %p55 = scmp.ne.s32.totalorder %s44, %s45
      %p56 = scmp.eq.s32.totalorder %s17, 0
      %p57 = por %p55, %p56
      %p58 = scmp.ne.s32.totalorder %s44, %s45
      %p59 = scmp.eq.s32.totalorder %s18, 2
      %p60 = por %p58, %p59
      %p62 = scmp.ne.s32.totalorder %s45, %s61
      %p63 = scmp.eq.s32.totalorder %s18, 0
      %p64 = por %p62, %p63
      %s65 = ssub.s32 %s19, %s38
      %p66 = scmp.eq.s32.totalorder %s65, 0
      %s68 = sadd.s32 %s67, 1
      %s69 = scalar_select %p66, %s67, %s68
      %p72 = pneg %p66
      %p73 = scmp.eq.s32.totalorder %s12, 2
      %p74 = por %p72, %p73
      %p75 = scmp.ne.s32.totalorder %s67, %s70
      %p76 = scmp.eq.s32.totalorder %s12, 0
      %p77 = por %p75, %p76
      %p78 = scmp.ne.s32.totalorder %s67, %s70
      %p79 = scmp.eq.s32.totalorder %s17, 2
      %p80 = por %p78, %p79
      %p81 = scmp.ne.s32.totalorder %s70, %s71
      %p82 = scmp.eq.s32.totalorder %s17, 0
      %p83 = por %p81, %p82
      %p84 = scmp.ne.s32.totalorder %s70, %s71
      %p85 = scmp.eq.s32.totalorder %s18, 2
      %p86 = por %p84, %p85
      %p88 = scmp.ne.s32.totalorder %s71, %s87
      %p89 = scmp.eq.s32.totalorder %s18, 0
      %p90 = por %p88, %p89
      %s91 = ssub.s32 %s19, %s38
      %p92 = scmp.eq.s32.totalorder %s91, 0
      %s94 = sadd.s32 %s93, 1
      %s95 = scalar_select %p92, %s93, %s94
      %p98 = pneg %p92
      %p99 = scmp.eq.s32.totalorder %s12, 2
      %p100 = por %p98, %p99
      %p101 = scmp.ne.s32.totalorder %s93, %s96
      %p102 = scmp.eq.s32.totalorder %s12, 0
      %p103 = por %p101, %p102
      %p104 = scmp.ne.s32.totalorder %s93, %s96
      %p105 = scmp.eq.s32.totalorder %s17, 2
      %p106 = por %p104, %p105
      %p107 = scmp.ne.s32.totalorder %s96, %s97
      %p108 = scmp.eq.s32.totalorder %s17, 0
      %p109 = por %p107, %p108
      %p110 = scmp.ne.s32.totalorder %s96, %s97
      %p111 = scmp.eq.s32.totalorder %s18, 2
      %p112 = por %p110, %p111
      %p114 = scmp.ne.s32.totalorder %s97, %s113
      %p115 = scmp.eq.s32.totalorder %s18, 0
      %p116 = por %p114, %p115
      %p117 = scmp.eq.s32.totalorder %s20, 2
      %s118 = scalar_select %p117, %s21, 0
      %p119 = scmp.eq.s32.totalorder %s34, 2
      %s120 = scalar_select %p119, %s30, 0
      %s121 = ssub.s32 %s118, %s120
      %s122 = ssub.s32 %s19, %s38
      %s123 = sor.u32 %s121, %s122
      %p124 = scmp.eq.s32.totalorder %s123, 0
      %s126 = sadd.s32 %s125, 1
      %s127 = scalar_select %p124, %s125, %s126
      %p130 = pneg %p124
      %p131 = scmp.eq.s32.totalorder %s12, 2
      %p132 = por %p130, %p131
      %p133 = scmp.ne.s32.totalorder %s125, %s128
      %p134 = scmp.eq.s32.totalorder %s12, 0
      %p135 = por %p133, %p134
      %p136 = scmp.ne.s32.totalorder %s125, %s128
      %p137 = scmp.eq.s32.totalorder %s17, 2
      %p138 = por %p136, %p137
      %p139 = scmp.ne.s32.totalorder %s128, %s129
      %p140 = scmp.eq.s32.totalorder %s17, 0
      %p141 = por %p139, %p140
      %p142 = scmp.ne.s32.totalorder %s128, %s129
      %p143 = scmp.eq.s32.totalorder %s18, 2
      %p144 = por %p142, %p143
      %p146 = scmp.ne.s32.totalorder %s129, %s145
      %p147 = scmp.eq.s32.totalorder %s18, 0
      %p148 = por %p146, %p147
      %p149 = scmp.le.s32.totalorder 1, %s12
      %p150 = scmp.lt.s32.totalorder %s12, 4
      %p151 = pnand %p149, %p150
      %p152 = pneg %p151
      // Predicated region
      $region9: #{branch1_forward.1} parent=5 // pred_check
        _
      $region10: #{branch1_forward.1} parent=5 // pred_check_branch
        %154 = sbr.rel (%p151) target = $region12
      $region11: #{branch1_forward.1} parent=5 // pred_region
        %s155 = ssub.s32 %s12, 1
        // Predicated region
        $region13: #{branch1_forward.1} parent=11 // pred_check
          %p156 = pneg %p57
        $region14: #{branch1_forward.1} parent=11 // pred_check_branch
          %158 = sbr.rel (%p156) target = $region16
        $region15: #{branch1_forward.1} parent=11 // pred_region
          %s159 = smul.u32 2, %s24
          %p160 = scmp.lt.s32.totalorder %s159, 1
          %s161 = scalar_select %p160, %s159, 1
          %s162 = smul.addr %s161, 4
          %s163 = scalar_lea.vmem %s0, %s162
          %s164 = smul.u32 2, %s24
        $region16: #{branch1_forward.1} parent=11 // pred_fallthru
          _
        // Predicated region
        $region17: #{branch1_forward.1} parent=11 // pred_check
          %p165 = pneg %p83
        $region18: #{branch1_forward.1} parent=11 // pred_check_branch
          %167 = sbr.rel (%p165) target = $region20
        $region19: #{branch1_forward.1} parent=11 // pred_region
          %p168 = scmp.lt.s32.totalorder %s22, 0
          %s169 = scalar_select %p168, %s22, 0
          %s170 = smul.addr %s169, 8
          %s171 = scalar_lea.vmem %s1, %s170
        $region20: #{branch1_forward.1} parent=11 // pred_fallthru
          _
        // Predicated region
        $region21: #{branch1_forward.1} parent=11 // pred_check
          %p172 = pneg %p109
        $region22: #{branch1_forward.1} parent=11 // pred_check_branch
          %174 = sbr.rel (%p172) target = $region24
        $region23: #{branch1_forward.1} parent=11 // pred_region
          %p175 = scmp.lt.s32.totalorder %s22, 0
          %s176 = scalar_select %p175, %s22, 0
          %s177 = smul.addr %s176, 8
          %s178 = scalar_lea.vmem %s2, %s177
        $region24: #{branch1_forward.1} parent=11 // pred_fallthru
          _
      $region12: #{branch1_forward.1} parent=5 // pred_fallthru
        _
      %p179 = scmp.lt.s32.totalorder %s12, 3
      // Predicated region
      $region25: #{branch1_forward.1} parent=5 // pred_check
        %p180 = pneg %p179
      $region26: #{branch1_forward.1} parent=5 // pred_check_branch
        %182 = sbr.rel (%p180) target = $region28
      $region27: #{branch1_forward.1} parent=5 // pred_region
        _
      $region28: #{branch1_forward.1} parent=5 // pred_fallthru
        _
      %p183 = scmp.le.s32.totalorder 1, %s12
      %p184 = scmp.lt.s32.totalorder %s12, 4
      %p185 = pnand %p183, %p184
      %p186 = pneg %p185
      // Predicated region
      $region29: #{branch1_forward.1} parent=5 // pred_check
        _
      $region30: #{branch1_forward.1} parent=5 // pred_check_branch
        %188 = sbr.rel (%p185) target = $region32
      $region31: #{branch1_forward.1} parent=5 // pred_region
        %s189 = ssub.s32 %s12, 1
        %s190 = smul.u32 2, %s24
        %p191 = scmp.lt.s32.totalorder %s190, 1
        %s192 = scalar_select %p191, %s190, 1
        %s193 = smul.addr %s192, 4
        %s194 = scalar_lea.vmem %s0, %s193
        %p195 = pneg %p57
        %p196 = pneg %p54
        %p197 = scmp.lt.s32.totalorder %s22, 0
        %s198 = scalar_select %p197, %s22, 0
        %s199 = smul.addr %s198, 8
        %s200 = scalar_lea.vmem %s1, %s199
        %p201 = pneg %p83
        %p202 = pneg %p80
        %p203 = scmp.lt.s32.totalorder %s22, 0
        %s204 = scalar_select %p203, %s22, 0
        %s205 = smul.addr %s204, 8
        %s206 = scalar_lea.vmem %s2, %s205
        %p207 = pneg %p109
        %p208 = pneg %p106
        %p209 = pneg %p141
        %p210 = pneg %p138
        %s211 = sand.u32 %s128, 1
        %s212 = scalar_lea.sflag [#allocation7], %s211
        %s213 = sand.u32 %s128, 1
        %s214 = smul.addr %s213, 16
        %s215 = scalar_lea.vmem [#allocation6], %s214
        %s216 = smul.u32 2, %s24
        %p217 = scmp.lt.s32.totalorder %s216, 1
        %s218 = scalar_select %p217, %s216, 1
        %s219 = smul.addr %s218, 4
        %s220 = scalar_lea.vmem %s0, %s219
        %s221 = smul.u32 2, %s24
        %p222 = scmp.lt.s32.totalorder %s22, 0
        %s223 = scalar_select %p222, %s22, 0
        %s224 = smul.addr %s223, 8
        %s225 = scalar_lea.vmem %s1, %s224
        %p226 = scmp.lt.s32.totalorder %s22, 0
        %s227 = scalar_select %p226, %s22, 0
        %s228 = smul.addr %s227, 8
        %s229 = scalar_lea.vmem %s2, %s228
        %p230 = scmp.eq.s32.totalorder %s23, 2
        %s231 = scalar_select %p230, %s24, 0
        %s232 = smul.u32 2, %s231
        %v233 = vld [vmem:[%s225] sm:$0xff]
        %v234 = vld [vmem:[%s229] sm:$0xff]
        %v235 = vlaneseq
        %v236 = vshrl.u32 %v235, 7
        %v237 = vadd.s32 %v236, 8
        %v238 = vlaneseq
        %v239 = vand.u32 %v238, 127
        %v240 = vsub.s32 %v239, 1
        %vm241 = vcmp.eq.s32.totalorder %v236, %v240
        %vm242 = vcmp.eq.s32.totalorder %v237, %v240
        %v243 = vsel %vm241, 1, 0
        %v244 = vsel %vm242, 1, 0
        %v245 = vcvt.s32.f32 %v243
        %v246 = vcvt.s32.f32 %v244
        %v247 = vadd.s32 %v239, 1
        %vm248 = vcmp.eq.s32.totalorder %v236, %v247
        %vm249 = vcmp.eq.s32.totalorder %v237, %v247
        %v250 = vsel %vm248, 1, 0
        %v251 = vsel %vm249, 1, 0
        %v252 = vcvt.s32.f32 %v250
        %v253 = vcvt.s32.f32 %v251
        %p254 = scmp.eq.s32.totalorder %s23, 0
        %p255 = scmp.eq.s32.totalorder %s24, 0
        %p256 = pnand %p254, %p255
        %p257 = pneg %p256
        // Predicated region
        $region33: #{branch1_forward.1} parent=31 // pred_check
          _
        $region34: #{branch1_forward.1} parent=31 // pred_check_branch
          %259 = sbr.rel (%p256) target = $region36
        $region35: #{branch1_forward.1} parent=31 // pred_region
          %vm260 = vcmask 7168
          %261 = vst.msk [vmem:[#allocation2] sm:$0xff] %vm260, 0.0
          %262 = vst.msk [vmem:[#allocation3] sm:$0xff] %vm260, 0.0
          %263 = vst.msk [vmem:[#allocation4] sm:$0xff] %vm260, 0.0
          %264 = vst.msk [vmem:[#allocation5] sm:$0xff] %vm260, 0.0
        $region36: #{branch1_forward.1} parent=31 // pred_fallthru
          _
        // Predicated region
        $region37: #{branch1_forward.1} parent=31 // pred_check
          %p265 = pneg %p254
        $region38: #{branch1_forward.1} parent=31 // pred_check_branch
          %267 = sbr.rel (%p265) target = $region40
        $region39: #{branch1_forward.1} parent=31 // pred_region
          %v268 = vld [vmem:[%s220] sm:$0xf]
          %vm269 = vcmask 31744
          %v271 = vsel %vm269, %v233, 0
          %vm273 = vcmask 1043456
          %v275 = vsel %vm273, %v268, 0
          %277 = vmatpush.msra.mxu0 0.0
          %278 = vmatpush.msra.mxu0 0.0
          %279 = vmatpush.msra.mxu0 0.0
          %280 = vmatpush.msra.mxu0 0.0
          %281 = vmatpush.msra.mxu0 0.0
          %282 = vmatpush.msra.mxu0 0.0
          %283 = vmatpush.msra.mxu0 0.0
          %284 = vmatpush.msra.mxu0 0.0
          %285 = vmatpush.msra.mxu0 0.0
          %286 = vmatpush.msra.mxu0 0.0
          %287 = vmatpush.msra.mxu0 0.0
          %288 = vmatpush.msra.mxu0 0.0
          %289 = vmatpush.msra.mxu0 0.0
          %290 = vmatpush.msra.mxu0 0.0
          %291 = vmatpush.msra.mxu0 0.0
          %v292 = vand.u32 %v275, 4294901760
          %293 = vmatpush.msra.mxu0 %v292
          %v294 = vand.u32 %v271, 4294901760
          %v295 = vsub.f32 %v271, %v294
          %v296 = vand.u32 %v295, 4294901760
          %v297 = vsub.f32 %v295, %v296
          %v298 = vand.u32 %v297, 4294901760
          %299 = vmatmul.f32.gmra.mxu0 %v298
          %v300 = vpop.f32.mrf.mxu0
          %v301 = vadd.f32 0.0, %v300
          %302 = vdwg.mxu0
          %303 = vmatpush.msra.mxu0 0.0
          %304 = vmatpush.msra.mxu0 0.0
          %305 = vmatpush.msra.mxu0 0.0
          %306 = vmatpush.msra.mxu0 0.0
          %307 = vmatpush.msra.mxu0 0.0
          %308 = vmatpush.msra.mxu0 0.0
          %309 = vmatpush.msra.mxu0 0.0
          %310 = vmatpush.msra.mxu0 0.0
          %311 = vmatpush.msra.mxu0 0.0
          %312 = vmatpush.msra.mxu0 0.0
          %313 = vmatpush.msra.mxu0 0.0
          %314 = vmatpush.msra.mxu0 0.0
          %315 = vmatpush.msra.mxu0 0.0
          %316 = vmatpush.msra.mxu0 0.0
          %317 = vmatpush.msra.mxu0 0.0
          %v318 = vand.u32 %v275, 4294901760
          %v319 = vsub.f32 %v275, %v318
          %v320 = vand.u32 %v319, 4294901760
          %v321 = vsub.f32 %v319, %v320
          %v322 = vand.u32 %v321, 4294901760
          %323 = vmatpush.msra.mxu0 %v322
          %v324 = vand.u32 %v271, 4294901760
          %325 = vmatmul.f32.gmra.mxu0 %v324
          %v326 = vpop.f32.mrf.mxu0
          %v327 = vadd.f32 %v301, %v326
          %328 = vdwg.mxu0
          %329 = vmatpush.msra.mxu0 0.0
          %330 = vmatpush.msra.mxu0 0.0
          %331 = vmatpush.msra.mxu0 0.0
          %332 = vmatpush.msra.mxu0 0.0
          %333 = vmatpush.msra.mxu0 0.0
          %334 = vmatpush.msra.mxu0 0.0
          %335 = vmatpush.msra.mxu0 0.0
          %336 = vmatpush.msra.mxu0 0.0
          %337 = vmatpush.msra.mxu0 0.0
          %338 = vmatpush.msra.mxu0 0.0
          %339 = vmatpush.msra.mxu0 0.0
          %340 = vmatpush.msra.mxu0 0.0
          %341 = vmatpush.msra.mxu0 0.0
          %342 = vmatpush.msra.mxu0 0.0
          %343 = vmatpush.msra.mxu0 0.0
          %v344 = vand.u32 %v275, 4294901760
          %v345 = vsub.f32 %v275, %v344
          %346 = vmatpush.msra.mxu0 %v345
          %v347 = vand.u32 %v271, 4294901760
          %v348 = vsub.f32 %v271, %v347
          %349 = vmatmul.f32.gmra.mxu0 %v348
          %v350 = vpop.f32.mrf.mxu0
          %v351 = vadd.f32 %v327, %v350
          %352 = vdwg.mxu0
          %353 = vmatpush.msra.mxu0 0.0
          %354 = vmatpush.msra.mxu0 0.0
          %355 = vmatpush.msra.mxu0 0.0
          %356 = vmatpush.msra.mxu0 0.0
          %357 = vmatpush.msra.mxu0 0.0
          %358 = vmatpush.msra.mxu0 0.0
          %359 = vmatpush.msra.mxu0 0.0
          %360 = vmatpush.msra.mxu0 0.0
          %361 = vmatpush.msra.mxu0 0.0
          %362 = vmatpush.msra.mxu0 0.0
          %363 = vmatpush.msra.mxu0 0.0
          %364 = vmatpush.msra.mxu0 0.0
          %365 = vmatpush.msra.mxu0 0.0
          %366 = vmatpush.msra.mxu0 0.0
          %367 = vmatpush.msra.mxu0 0.0
          %v368 = vand.u32 %v275, 4294901760
          %369 = vmatpush.msra.mxu0 %v368
          %v370 = vand.u32 %v271, 4294901760
          %v371 = vsub.f32 %v271, %v370
          %v372 = vand.u32 %v371, 4294901760
          %373 = vmatmul.f32.gmra.mxu0 %v372
          %v374 = vpop.f32.mrf.mxu0
          %v375 = vadd.f32 %v351, %v374
          %376 = vdwg.mxu0
          %377 = vmatpush.msra.mxu0 0.0
          %378 = vmatpush.msra.mxu0 0.0
          %379 = vmatpush.msra.mxu0 0.0
          %380 = vmatpush.msra.mxu0 0.0
          %381 = vmatpush.msra.mxu0 0.0
          %382 = vmatpush.msra.mxu0 0.0
          %383 = vmatpush.msra.mxu0 0.0
          %384 = vmatpush.msra.mxu0 0.0
          %385 = vmatpush.msra.mxu0 0.0
          %386 = vmatpush.msra.mxu0 0.0
          %387 = vmatpush.msra.mxu0 0.0
          %388 = vmatpush.msra.mxu0 0.0
          %389 = vmatpush.msra.mxu0 0.0
          %390 = vmatpush.msra.mxu0 0.0
          %391 = vmatpush.msra.mxu0 0.0
          %v392 = vand.u32 %v275, 4294901760
          %v393 = vsub.f32 %v275, %v392
          %v394 = vand.u32 %v393, 4294901760
          %395 = vmatpush.msra.mxu0 %v394
          %v396 = vand.u32 %v271, 4294901760
          %397 = vmatmul.f32.gmra.mxu0 %v396
          %v398 = vpop.f32.mrf.mxu0
          %v399 = vadd.f32 %v375, %v398
          %400 = vdwg.mxu0
          %401 = vmatpush.msra.mxu0 0.0
          %402 = vmatpush.msra.mxu0 0.0
          %403 = vmatpush.msra.mxu0 0.0
          %404 = vmatpush.msra.mxu0 0.0
          %405 = vmatpush.msra.mxu0 0.0
          %406 = vmatpush.msra.mxu0 0.0
          %407 = vmatpush.msra.mxu0 0.0
          %408 = vmatpush.msra.mxu0 0.0
          %409 = vmatpush.msra.mxu0 0.0
          %410 = vmatpush.msra.mxu0 0.0
          %411 = vmatpush.msra.mxu0 0.0
          %412 = vmatpush.msra.mxu0 0.0
          %413 = vmatpush.msra.mxu0 0.0
          %414 = vmatpush.msra.mxu0 0.0
          %415 = vmatpush.msra.mxu0 0.0
          %v416 = vand.u32 %v275, 4294901760
          %417 = vmatpush.msra.mxu0 %v416
          %v418 = vand.u32 %v271, 4294901760
          %419 = vmatmul.f32.gmra.mxu0 %v418
          %v420 = vpop.f32.mrf.mxu0
          %v421 = vadd.f32 %v399, %v420
          %422 = vdwg.mxu0
          %v423 = vld [vmem:[#allocation2] sm:$0xff]
          %vm424 = vcmask 130048
          %v425 = vsel %vm424, %v421, 0.0
          %426 = vadd.xlane.f32.xlu0 %v425
          %v427 = vpop.xlane.xlu0 %426
          %v428 = vadd.f32 %v423, %v427
          %vm429 = vcmask 7168
          %430 = vst.msk [vmem:[#allocation2] sm:$0xff] %vm429, %v428
          %v431 = vld [vmem:[#allocation3] sm:$0xff]
          %v432 = vmul.f32 %v421, %v421
          %v433 = vsel %vm424, %v432, 0.0
          %434 = vadd.xlane.f32.xlu0 %v433
          %v435 = vpop.xlane.xlu0 %434
          %v436 = vadd.f32 %v431, %v435
          %437 = vst.msk [vmem:[#allocation3] sm:$0xff] %vm429, %v436
          %s438 = scalar_lea.vmem %s220, 4
          %v439 = vld [vmem:[%s438] sm:$0xf]
          %v441 = vsel %vm273, %v439, 0
          %443 = vmatpush.msra.mxu0 0.0
          %444 = vmatpush.msra.mxu0 0.0
          %445 = vmatpush.msra.mxu0 0.0
          %446 = vmatpush.msra.mxu0 0.0
          %447 = vmatpush.msra.mxu0 0.0
          %448 = vmatpush.msra.mxu0 0.0
          %449 = vmatpush.msra.mxu0 0.0
          %450 = vmatpush.msra.mxu0 0.0
          %451 = vmatpush.msra.mxu0 0.0
          %452 = vmatpush.msra.mxu0 0.0
          %453 = vmatpush.msra.mxu0 0.0
          %454 = vmatpush.msra.mxu0 0.0
          %455 = vmatpush.msra.mxu0 0.0
          %456 = vmatpush.msra.mxu0 0.0
          %457 = vmatpush.msra.mxu0 0.0
          %v458 = vand.u32 %v441, 4294901760
          %459 = vmatpush.msra.mxu0 %v458
          %v460 = vand.u32 %v271, 4294901760
          %v461 = vsub.f32 %v271, %v460
          %v462 = vand.u32 %v461, 4294901760
          %v463 = vsub.f32 %v461, %v462
          %v464 = vand.u32 %v463, 4294901760
          %465 = vmatmul.f32.gmra.mxu0 %v464
          %v466 = vpop.f32.mrf.mxu0
          %v467 = vadd.f32 0.0, %v466
          %468 = vdwg.mxu0
          %469 = vmatpush.msra.mxu0 0.0
          %470 = vmatpush.msra.mxu0 0.0
          %471 = vmatpush.msra.mxu0 0.0
          %472 = vmatpush.msra.mxu0 0.0
          %473 = vmatpush.msra.mxu0 0.0
          %474 = vmatpush.msra.mxu0 0.0
          %475 = vmatpush.msra.mxu0 0.0
          %476 = vmatpush.msra.mxu0 0.0
          %477 = vmatpush.msra.mxu0 0.0
          %478 = vmatpush.msra.mxu0 0.0
          %479 = vmatpush.msra.mxu0 0.0
          %480 = vmatpush.msra.mxu0 0.0
          %481 = vmatpush.msra.mxu0 0.0
          %482 = vmatpush.msra.mxu0 0.0
          %483 = vmatpush.msra.mxu0 0.0
          %v484 = vand.u32 %v441, 4294901760
          %v485 = vsub.f32 %v441, %v484
          %v486 = vand.u32 %v485, 4294901760
          %v487 = vsub.f32 %v485, %v486
          %v488 = vand.u32 %v487, 4294901760
          %489 = vmatpush.msra.mxu0 %v488
          %v490 = vand.u32 %v271, 4294901760
          %491 = vmatmul.f32.gmra.mxu0 %v490
          %v492 = vpop.f32.mrf.mxu0
          %v493 = vadd.f32 %v467, %v492
          %494 = vdwg.mxu0
          %495 = vmatpush.msra.mxu0 0.0
          %496 = vmatpush.msra.mxu0 0.0
          %497 = vmatpush.msra.mxu0 0.0
          %498 = vmatpush.msra.mxu0 0.0
          %499 = vmatpush.msra.mxu0 0.0
          %500 = vmatpush.msra.mxu0 0.0
          %501 = vmatpush.msra.mxu0 0.0
          %502 = vmatpush.msra.mxu0 0.0
          %503 = vmatpush.msra.mxu0 0.0
          %504 = vmatpush.msra.mxu0 0.0
          %505 = vmatpush.msra.mxu0 0.0
          %506 = vmatpush.msra.mxu0 0.0
          %507 = vmatpush.msra.mxu0 0.0
          %508 = vmatpush.msra.mxu0 0.0
          %509 = vmatpush.msra.mxu0 0.0
          %v510 = vand.u32 %v441, 4294901760
          %v511 = vsub.f32 %v441, %v510
          %512 = vmatpush.msra.mxu0 %v511
          %v513 = vand.u32 %v271, 4294901760
          %v514 = vsub.f32 %v271, %v513
          %515 = vmatmul.f32.gmra.mxu0 %v514
          %v516 = vpop.f32.mrf.mxu0
          %v517 = vadd.f32 %v493, %v516
          %518 = vdwg.mxu0
          %519 = vmatpush.msra.mxu0 0.0
          %520 = vmatpush.msra.mxu0 0.0
          %521 = vmatpush.msra.mxu0 0.0
          %522 = vmatpush.msra.mxu0 0.0
          %523 = vmatpush.msra.mxu0 0.0
          %524 = vmatpush.msra.mxu0 0.0
          %525 = vmatpush.msra.mxu0 0.0
          %526 = vmatpush.msra.mxu0 0.0
          %527 = vmatpush.msra.mxu0 0.0
          %528 = vmatpush.msra.mxu0 0.0
          %529 = vmatpush.msra.mxu0 0.0
          %530 = vmatpush.msra.mxu0 0.0
          %531 = vmatpush.msra.mxu0 0.0
          %532 = vmatpush.msra.mxu0 0.0
          %533 = vmatpush.msra.mxu0 0.0
          %v534 = vand.u32 %v441, 4294901760
          %535 = vmatpush.msra.mxu0 %v534
          %v536 = vand.u32 %v271, 4294901760
          %v537 = vsub.f32 %v271, %v536
          %v538 = vand.u32 %v537, 4294901760
          %539 = vmatmul.f32.gmra.mxu0 %v538
          %v540 = vpop.f32.mrf.mxu0
          %v541 = vadd.f32 %v517, %v540
          %542 = vdwg.mxu0
          %543 = vmatpush.msra.mxu0 0.0
          %544 = vmatpush.msra.mxu0 0.0
          %545 = vmatpush.msra.mxu0 0.0
          %546 = vmatpush.msra.mxu0 0.0
          %547 = vmatpush.msra.mxu0 0.0
          %548 = vmatpush.msra.mxu0 0.0
          %549 = vmatpush.msra.mxu0 0.0
          %550 = vmatpush.msra.mxu0 0.0
          %551 = vmatpush.msra.mxu0 0.0
          %552 = vmatpush.msra.mxu0 0.0
          %553 = vmatpush.msra.mxu0 0.0
          %554 = vmatpush.msra.mxu0 0.0
          %555 = vmatpush.msra.mxu0 0.0
          %556 = vmatpush.msra.mxu0 0.0
          %557 = vmatpush.msra.mxu0 0.0
          %v558 = vand.u32 %v441, 4294901760
          %v559 = vsub.f32 %v441, %v558
          %v560 = vand.u32 %v559, 4294901760
          %561 = vmatpush.msra.mxu0 %v560
          %v562 = vand.u32 %v271, 4294901760
          %563 = vmatmul.f32.gmra.mxu0 %v562
          %v564 = vpop.f32.mrf.mxu0
          %v565 = vadd.f32 %v541, %v564
          %566 = vdwg.mxu0
          %567 = vmatpush.msra.mxu0 0.0
          %568 = vmatpush.msra.mxu0 0.0
          %569 = vmatpush.msra.mxu0 0.0
          %570 = vmatpush.msra.mxu0 0.0
          %571 = vmatpush.msra.mxu0 0.0
          %572 = vmatpush.msra.mxu0 0.0
          %573 = vmatpush.msra.mxu0 0.0
          %574 = vmatpush.msra.mxu0 0.0
          %575 = vmatpush.msra.mxu0 0.0
          %576 = vmatpush.msra.mxu0 0.0
          %577 = vmatpush.msra.mxu0 0.0
          %578 = vmatpush.msra.mxu0 0.0
          %579 = vmatpush.msra.mxu0 0.0
          %580 = vmatpush.msra.mxu0 0.0
          %581 = vmatpush.msra.mxu0 0.0
          %v582 = vand.u32 %v441, 4294901760
          %583 = vmatpush.msra.mxu0 %v582
          %v584 = vand.u32 %v271, 4294901760
          %585 = vmatmul.f32.gmra.mxu0 %v584
          %v586 = vpop.f32.mrf.mxu0
          %v587 = vadd.f32 %v565, %v586
          %588 = vdwg.mxu0
          %v589 = vld [vmem:[#allocation2] sm:$0xff]
          %v590 = vsel %vm424, %v587, 0.0
          %591 = vadd.xlane.f32.xlu0 %v590
          %v592 = vpop.xlane.xlu0 %591
          %v593 = vadd.f32 %v589, %v592
          %594 = vst.msk [vmem:[#allocation2] sm:$0xff] %vm429, %v593
          %v595 = vld [vmem:[#allocation3] sm:$0xff]
          %v596 = vmul.f32 %v587, %v587
          %v597 = vsel %vm424, %v596, 0.0
          %598 = vadd.xlane.f32.xlu0 %v597
          %v599 = vpop.xlane.xlu0 %598
          %v600 = vadd.f32 %v595, %v599
          %601 = vst.msk [vmem:[#allocation3] sm:$0xff] %vm429, %v600
        $region40: #{branch1_forward.1} parent=31 // pred_fallthru
          _
        %p602 = scmp.eq.s32.totalorder %s23, 1
        // Predicated region
        $region41: #{branch1_forward.1} parent=31 // pred_check
          %p603 = pneg %p602
        $region42: #{branch1_forward.1} parent=31 // pred_check_branch
          %605 = sbr.rel (%p603) target = $region44
        $region43: #{branch1_forward.1} parent=31 // pred_region
          %v606 = vld [vmem:[#allocation2] sm:$0xff]
          %v607 = vrcp.pop 32.0
          %v608 = vmul.f32 32.0, %v607
          %v609 = vsub.f32 1.0, %v608
          %v610 = vmul.f32 %v607, %v609
          %v611 = vadd.f32 %v607, %v610
          %vm612 = vweird.f32 %v607
          %v613 = vsel %vm612, %v607, %v611
          %v614 = vmul.f32 %v606, %v613
          %v615 = vld [vmem:[#allocation3] sm:$0xff]
          %v616 = vmul.f32 %v615, %v613
          %v617 = vmul.f32 %v614, %v614
          %v618 = vsub.f32 %v616, %v617
          %v619 = vmax.f32 %v618, 0.0
          %v620 = vadd.f32 %v619, 1e-05
          %v621 = vrsqrt.pop %v620
          %v622 = vmul.f32 %v621, %v620
          %v623 = vmul.f32 %v622, %v621
          %v624 = vmul.f32 0.5, %v623
          %v625 = vsub.f32 1.5, %v624
          %v626 = vmul.f32 %v621, %v625
          %vm627 = vweird.f32 %v620
          %vm628 = vweird.f32 %v621
          %vm629 = vmor %vm627, %vm628
          %v630 = vsel %vm629, %v621, %v626
          %632 = vrot.lane.b32.xlu0 %v630, 3
          %v633 = vpop.permute.xlu0 %632
          %v635 = vmul.f32 %v234, %v633
          %637 = vrot.lane.b32.xlu0 %v635, 125
          %v638 = vpop.permute.xlu0 %637
          %v640 = vmul.f32 %v614, %v638
          %642 = vrot.lane.b32.xlu0 %v640, 4
          %v643 = vpop.permute.xlu0 %642
          %v645 = vsub.f32 %v234, %v643
          %v646 = vld [vmem:[%s220] sm:$0xf]
          %vm647 = vcmask 31744
          %v649 = vsel %vm647, %v233, 0
          %vm651 = vcmask 1043456
          %v653 = vsel %vm651, %v646, 0
          %655 = vmatpush.msra.mxu0 0.0
          %656 = vmatpush.msra.mxu0 0.0
          %657 = vmatpush.msra.mxu0 0.0
          %658 = vmatpush.msra.mxu0 0.0
          %659 = vmatpush.msra.mxu0 0.0
          %660 = vmatpush.msra.mxu0 0.0
          %661 = vmatpush.msra.mxu0 0.0
          %662 = vmatpush.msra.mxu0 0.0
          %663 = vmatpush.msra.mxu0 0.0
          %664 = vmatpush.msra.mxu0 0.0
          %665 = vmatpush.msra.mxu0 0.0
          %666 = vmatpush.msra.mxu0 0.0
          %667 = vmatpush.msra.mxu0 0.0
          %668 = vmatpush.msra.mxu0 0.0
          %669 = vmatpush.msra.mxu0 0.0
          %v670 = vand.u32 %v653, 4294901760
          %671 = vmatpush.msra.mxu0 %v670
          %v672 = vand.u32 %v649, 4294901760
          %v673 = vsub.f32 %v649, %v672
          %v674 = vand.u32 %v673, 4294901760
          %v675 = vsub.f32 %v673, %v674
          %v676 = vand.u32 %v675, 4294901760
          %677 = vmatmul.f32.gmra.mxu0 %v676
          %v678 = vpop.f32.mrf.mxu0
          %v679 = vadd.f32 0.0, %v678
          %680 = vdwg.mxu0
          %681 = vmatpush.msra.mxu0 0.0
          %682 = vmatpush.msra.mxu0 0.0
          %683 = vmatpush.msra.mxu0 0.0
          %684 = vmatpush.msra.mxu0 0.0
          %685 = vmatpush.msra.mxu0 0.0
          %686 = vmatpush.msra.mxu0 0.0
          %687 = vmatpush.msra.mxu0 0.0
          %688 = vmatpush.msra.mxu0 0.0
          %689 = vmatpush.msra.mxu0 0.0
          %690 = vmatpush.msra.mxu0 0.0
          %691 = vmatpush.msra.mxu0 0.0
          %692 = vmatpush.msra.mxu0 0.0
          %693 = vmatpush.msra.mxu0 0.0
          %694 = vmatpush.msra.mxu0 0.0
          %695 = vmatpush.msra.mxu0 0.0
          %v696 = vand.u32 %v653, 4294901760
          %v697 = vsub.f32 %v653, %v696
          %v698 = vand.u32 %v697, 4294901760
          %v699 = vsub.f32 %v697, %v698
          %v700 = vand.u32 %v699, 4294901760
          %701 = vmatpush.msra.mxu0 %v700
          %v702 = vand.u32 %v649, 4294901760
          %703 = vmatmul.f32.gmra.mxu0 %v702
          %v704 = vpop.f32.mrf.mxu0
          %v705 = vadd.f32 %v679, %v704
          %706 = vdwg.mxu0
          %707 = vmatpush.msra.mxu0 0.0
          %708 = vmatpush.msra.mxu0 0.0
          %709 = vmatpush.msra.mxu0 0.0
          %710 = vmatpush.msra.mxu0 0.0
          %711 = vmatpush.msra.mxu0 0.0
          %712 = vmatpush.msra.mxu0 0.0
          %713 = vmatpush.msra.mxu0 0.0
          %714 = vmatpush.msra.mxu0 0.0
          %715 = vmatpush.msra.mxu0 0.0
          %716 = vmatpush.msra.mxu0 0.0
          %717 = vmatpush.msra.mxu0 0.0
          %718 = vmatpush.msra.mxu0 0.0
          %719 = vmatpush.msra.mxu0 0.0
          %720 = vmatpush.msra.mxu0 0.0
          %721 = vmatpush.msra.mxu0 0.0
          %v722 = vand.u32 %v653, 4294901760
          %v723 = vsub.f32 %v653, %v722
          %724 = vmatpush.msra.mxu0 %v723
          %v725 = vand.u32 %v649, 4294901760
          %v726 = vsub.f32 %v649, %v725
          %727 = vmatmul.f32.gmra.mxu0 %v726
          %v728 = vpop.f32.mrf.mxu0
          %v729 = vadd.f32 %v705, %v728
          %730 = vdwg.mxu0
          %731 = vmatpush.msra.mxu0 0.0
          %732 = vmatpush.msra.mxu0 0.0
          %733 = vmatpush.msra.mxu0 0.0
          %734 = vmatpush.msra.mxu0 0.0
          %735 = vmatpush.msra.mxu0 0.0
          %736 = vmatpush.msra.mxu0 0.0
          %737 = vmatpush.msra.mxu0 0.0
          %738 = vmatpush.msra.mxu0 0.0
          %739 = vmatpush.msra.mxu0 0.0
          %740 = vmatpush.msra.mxu0 0.0
          %741 = vmatpush.msra.mxu0 0.0
          %742 = vmatpush.msra.mxu0 0.0
          %743 = vmatpush.msra.mxu0 0.0
          %744 = vmatpush.msra.mxu0 0.0
          %745 = vmatpush.msra.mxu0 0.0
          %v746 = vand.u32 %v653, 4294901760
          %747 = vmatpush.msra.mxu0 %v746
          %v748 = vand.u32 %v649, 4294901760
          %v749 = vsub.f32 %v649, %v748
          %v750 = vand.u32 %v749, 4294901760
          %751 = vmatmul.f32.gmra.mxu0 %v750
          %v752 = vpop.f32.mrf.mxu0
          %v753 = vadd.f32 %v729, %v752
          %754 = vdwg.mxu0
          %755 = vmatpush.msra.mxu0 0.0
          %756 = vmatpush.msra.mxu0 0.0
          %757 = vmatpush.msra.mxu0 0.0
          %758 = vmatpush.msra.mxu0 0.0
          %759 = vmatpush.msra.mxu0 0.0
          %760 = vmatpush.msra.mxu0 0.0
          %761 = vmatpush.msra.mxu0 0.0
          %762 = vmatpush.msra.mxu0 0.0
          %763 = vmatpush.msra.mxu0 0.0
          %764 = vmatpush.msra.mxu0 0.0
          %765 = vmatpush.msra.mxu0 0.0
          %766 = vmatpush.msra.mxu0 0.0
          %767 = vmatpush.msra.mxu0 0.0
          %768 = vmatpush.msra.mxu0 0.0
          %769 = vmatpush.msra.mxu0 0.0
          %v770 = vand.u32 %v653, 4294901760
          %v771 = vsub.f32 %v653, %v770
          %v772 = vand.u32 %v771, 4294901760
          %773 = vmatpush.msra.mxu0 %v772
          %v774 = vand.u32 %v649, 4294901760
          %775 = vmatmul.f32.gmra.mxu0 %v774
          %v776 = vpop.f32.mrf.mxu0
          %v777 = vadd.f32 %v753, %v776
          %778 = vdwg.mxu0
          %779 = vmatpush.msra.mxu0 0.0
          %780 = vmatpush.msra.mxu0 0.0
          %781 = vmatpush.msra.mxu0 0.0
          %782 = vmatpush.msra.mxu0 0.0
          %783 = vmatpush.msra.mxu0 0.0
          %784 = vmatpush.msra.mxu0 0.0
          %785 = vmatpush.msra.mxu0 0.0
          %786 = vmatpush.msra.mxu0 0.0
          %787 = vmatpush.msra.mxu0 0.0
          %788 = vmatpush.msra.mxu0 0.0
          %789 = vmatpush.msra.mxu0 0.0
          %790 = vmatpush.msra.mxu0 0.0
          %791 = vmatpush.msra.mxu0 0.0
          %792 = vmatpush.msra.mxu0 0.0
          %793 = vmatpush.msra.mxu0 0.0
          %v794 = vand.u32 %v653, 4294901760
          %795 = vmatpush.msra.mxu0 %v794
          %v796 = vand.u32 %v649, 4294901760
          %797 = vmatmul.f32.gmra.mxu0 %v796
          %v798 = vpop.f32.mrf.mxu0
          %v799 = vadd.f32 %v777, %v798
          %800 = vdwg.mxu0
          %801 = vset.pattern.permute.xlu0 3
          %802 = vperm.xlu0 %801, %v635
          %v803 = vpop.permute.xlu0 %802
          %v805 = vmul.f32 %v799, %v803
          %807 = vset.pattern.permute.xlu0 4
          %808 = vperm.xlu0 %807, %v645
          %v809 = vpop.permute.xlu0 %808
          %v811 = vadd.f32 %v805, %v809
          %v812 = vmax.f32 %v811, 0.0
          %vm813 = vcmask 130048
          %v815 = vsel %vm813, %v812, 0
          %817 = vmatpush.msra.mxu0 0.0
          %818 = vmatpush.msra.mxu0 0.0
          %819 = vmatpush.msra.mxu0 0.0
          %820 = vmatpush.msra.mxu0 0.0
          %821 = vmatpush.msra.mxu0 0.0
          %822 = vmatpush.msra.mxu0 0.0
          %823 = vmatpush.msra.mxu0 0.0
          %824 = vmatpush.msra.mxu0 0.0
          %825 = vmatpush.msra.mxu0 0.0
          %826 = vmatpush.msra.mxu0 0.0
          %827 = vmatpush.msra.mxu0 0.0
          %828 = vmatpush.msra.mxu0 0.0
          %829 = vmatpush.msra.mxu0 0.0
          %830 = vmatpush.msra.mxu0 0.0
          %v831 = vand.u32 %v246, 4294901760
          %832 = vmatpush.msra.mxu0 %v831
          %v833 = vand.u32 %v245, 4294901760
          %834 = vmatpush.msra.mxu0 %v833
          %v835 = vand.u32 %v815, 4294901760
          %v836 = vsub.f32 %v815, %v835
          %v837 = vand.u32 %v836, 4294901760
          %v838 = vsub.f32 %v836, %v837
          %v839 = vand.u32 %v838, 4294901760
          %840 = vmatmul.f32.gmra.mxu0 %v839
          %v841 = vpop.f32.mrf.mxu0
          %v842 = vadd.f32 0.0, %v841
          %843 = vdwg.mxu0
          %844 = vmatpush.msra.mxu0 0.0
          %845 = vmatpush.msra.mxu0 0.0
          %846 = vmatpush.msra.mxu0 0.0
          %847 = vmatpush.msra.mxu0 0.0
          %848 = vmatpush.msra.mxu0 0.0
          %849 = vmatpush.msra.mxu0 0.0
          %850 = vmatpush.msra.mxu0 0.0
          %851 = vmatpush.msra.mxu0 0.0
          %852 = vmatpush.msra.mxu0 0.0
          %853 = vmatpush.msra.mxu0 0.0
          %854 = vmatpush.msra.mxu0 0.0
          %855 = vmatpush.msra.mxu0 0.0
          %856 = vmatpush.msra.mxu0 0.0
          %857 = vmatpush.msra.mxu0 0.0
          %v858 = vand.u32 %v246, 4294901760
          %v859 = vsub.f32 %v246, %v858
          %v860 = vand.u32 %v859, 4294901760
          %v861 = vsub.f32 %v859, %v860
          %v862 = vand.u32 %v861, 4294901760
          %863 = vmatpush.msra.mxu0 %v862
          %v864 = vand.u32 %v245, 4294901760
          %v865 = vsub.f32 %v245, %v864
          %v866 = vand.u32 %v865, 4294901760
          %v867 = vsub.f32 %v865, %v866
          %v868 = vand.u32 %v867, 4294901760
          %869 = vmatpush.msra.mxu0 %v868
          %v870 = vand.u32 %v815, 4294901760
          %871 = vmatmul.f32.gmra.mxu0 %v870
          %v872 = vpop.f32.mrf.mxu0
          %v873 = vadd.f32 %v842, %v872
          %874 = vdwg.mxu0
          %875 = vmatpush.msra.mxu0 0.0
          %876 = vmatpush.msra.mxu0 0.0
          %877 = vmatpush.msra.mxu0 0.0
          %878 = vmatpush.msra.mxu0 0.0
          %879 = vmatpush.msra.mxu0 0.0
          %880 = vmatpush.msra.mxu0 0.0
          %881 = vmatpush.msra.mxu0 0.0
          %882 = vmatpush.msra.mxu0 0.0
          %883 = vmatpush.msra.mxu0 0.0
          %884 = vmatpush.msra.mxu0 0.0
          %885 = vmatpush.msra.mxu0 0.0
          %886 = vmatpush.msra.mxu0 0.0
          %887 = vmatpush.msra.mxu0 0.0
          %888 = vmatpush.msra.mxu0 0.0
          %v889 = vand.u32 %v246, 4294901760
          %v890 = vsub.f32 %v246, %v889
          %891 = vmatpush.msra.mxu0 %v890
          %v892 = vand.u32 %v245, 4294901760
          %v893 = vsub.f32 %v245, %v892
          %894 = vmatpush.msra.mxu0 %v893
          %v895 = vand.u32 %v815, 4294901760
          %v896 = vsub.f32 %v815, %v895
          %897 = vmatmul.f32.gmra.mxu0 %v896
          %v898 = vpop.f32.mrf.mxu0
          %v899 = vadd.f32 %v873, %v898
          %900 = vdwg.mxu0
          %901 = vmatpush.msra.mxu0 0.0
          %902 = vmatpush.msra.mxu0 0.0
          %903 = vmatpush.msra.mxu0 0.0
          %904 = vmatpush.msra.mxu0 0.0
          %905 = vmatpush.msra.mxu0 0.0
          %906 = vmatpush.msra.mxu0 0.0
          %907 = vmatpush.msra.mxu0 0.0
          %908 = vmatpush.msra.mxu0 0.0
          %909 = vmatpush.msra.mxu0 0.0
          %910 = vmatpush.msra.mxu0 0.0
          %911 = vmatpush.msra.mxu0 0.0
          %912 = vmatpush.msra.mxu0 0.0
          %913 = vmatpush.msra.mxu0 0.0
          %914 = vmatpush.msra.mxu0 0.0
          %v915 = vand.u32 %v246, 4294901760
          %916 = vmatpush.msra.mxu0 %v915
          %v917 = vand.u32 %v245, 4294901760
          %918 = vmatpush.msra.mxu0 %v917
          %v919 = vand.u32 %v815, 4294901760
          %v920 = vsub.f32 %v815, %v919
          %v921 = vand.u32 %v920, 4294901760
          %922 = vmatmul.f32.gmra.mxu0 %v921
          %v923 = vpop.f32.mrf.mxu0
          %v924 = vadd.f32 %v899, %v923
          %925 = vdwg.mxu0
          %926 = vmatpush.msra.mxu0 0.0
          %927 = vmatpush.msra.mxu0 0.0
          %928 = vmatpush.msra.mxu0 0.0
          %929 = vmatpush.msra.mxu0 0.0
          %930 = vmatpush.msra.mxu0 0.0
          %931 = vmatpush.msra.mxu0 0.0
          %932 = vmatpush.msra.mxu0 0.0
          %933 = vmatpush.msra.mxu0 0.0
          %934 = vmatpush.msra.mxu0 0.0
          %935 = vmatpush.msra.mxu0 0.0
          %936 = vmatpush.msra.mxu0 0.0
          %937 = vmatpush.msra.mxu0 0.0
          %938 = vmatpush.msra.mxu0 0.0
          %939 = vmatpush.msra.mxu0 0.0
          %v940 = vand.u32 %v246, 4294901760
          %v941 = vsub.f32 %v246, %v940
          %v942 = vand.u32 %v941, 4294901760
          %943 = vmatpush.msra.mxu0 %v942
          %v944 = vand.u32 %v245, 4294901760
          %v945 = vsub.f32 %v245, %v944
          %v946 = vand.u32 %v945, 4294901760
          %947 = vmatpush.msra.mxu0 %v946
          %v948 = vand.u32 %v815, 4294901760
          %949 = vmatmul.f32.gmra.mxu0 %v948
          %v950 = vpop.f32.mrf.mxu0
          %v951 = vadd.f32 %v924, %v950
          %952 = vdwg.mxu0
          %953 = vmatpush.msra.mxu0 0.0
          %954 = vmatpush.msra.mxu0 0.0
          %955 = vmatpush.msra.mxu0 0.0
          %956 = vmatpush.msra.mxu0 0.0
          %957 = vmatpush.msra.mxu0 0.0
          %958 = vmatpush.msra.mxu0 0.0
          %959 = vmatpush.msra.mxu0 0.0
          %960 = vmatpush.msra.mxu0 0.0
          %961 = vmatpush.msra.mxu0 0.0
          %962 = vmatpush.msra.mxu0 0.0
          %963 = vmatpush.msra.mxu0 0.0
          %964 = vmatpush.msra.mxu0 0.0
          %965 = vmatpush.msra.mxu0 0.0
          %966 = vmatpush.msra.mxu0 0.0
          %v967 = vand.u32 %v246, 4294901760
          %968 = vmatpush.msra.mxu0 %v967
          %v969 = vand.u32 %v245, 4294901760
          %970 = vmatpush.msra.mxu0 %v969
          %v971 = vand.u32 %v815, 4294901760
          %972 = vmatmul.f32.gmra.mxu0 %v971
          %v973 = vpop.f32.mrf.mxu0
          %v974 = vadd.f32 %v951, %v973
          %975 = vdwg.mxu0
          %976 = vmatpush.msra.mxu0 0.0
          %977 = vmatpush.msra.mxu0 0.0
          %978 = vmatpush.msra.mxu0 0.0
          %979 = vmatpush.msra.mxu0 0.0
          %980 = vmatpush.msra.mxu0 0.0
          %981 = vmatpush.msra.mxu0 0.0
          %982 = vmatpush.msra.mxu0 0.0
          %983 = vmatpush.msra.mxu0 0.0
          %984 = vmatpush.msra.mxu0 0.0
          %985 = vmatpush.msra.mxu0 0.0
          %986 = vmatpush.msra.mxu0 0.0
          %987 = vmatpush.msra.mxu0 0.0
          %988 = vmatpush.msra.mxu0 0.0
          %989 = vmatpush.msra.mxu0 0.0
          %v990 = vand.u32 %v253, 4294901760
          %991 = vmatpush.msra.mxu0 %v990
          %v992 = vand.u32 %v252, 4294901760
          %993 = vmatpush.msra.mxu0 %v992
          %v994 = vand.u32 %v815, 4294901760
          %v995 = vsub.f32 %v815, %v994
          %v996 = vand.u32 %v995, 4294901760
          %v997 = vsub.f32 %v995, %v996
          %v998 = vand.u32 %v997, 4294901760
          %999 = vmatmul.f32.gmra.mxu0 %v998
          %v1000 = vpop.f32.mrf.mxu0
          %v1001 = vadd.f32 0.0, %v1000
          %1002 = vdwg.mxu0
          %1003 = vmatpush.msra.mxu0 0.0
          %1004 = vmatpush.msra.mxu0 0.0
          %1005 = vmatpush.msra.mxu0 0.0
          %1006 = vmatpush.msra.mxu0 0.0
          %1007 = vmatpush.msra.mxu0 0.0
          %1008 = vmatpush.msra.mxu0 0.0
          %1009 = vmatpush.msra.mxu0 0.0
          %1010 = vmatpush.msra.mxu0 0.0
          %1011 = vmatpush.msra.mxu0 0.0
          %1012 = vmatpush.msra.mxu0 0.0
          %1013 = vmatpush.msra.mxu0 0.0
          %1014 = vmatpush.msra.mxu0 0.0
          %1015 = vmatpush.msra.mxu0 0.0
          %1016 = vmatpush.msra.mxu0 0.0
          %v1017 = vand.u32 %v253, 4294901760
          %v1018 = vsub.f32 %v253, %v1017
          %v1019 = vand.u32 %v1018, 4294901760
          %v1020 = vsub.f32 %v1018, %v1019
          %v1021 = vand.u32 %v1020, 4294901760
          %1022 = vmatpush.msra.mxu0 %v1021
          %v1023 = vand.u32 %v252, 4294901760
          %v1024 = vsub.f32 %v252, %v1023
          %v1025 = vand.u32 %v1024, 4294901760
          %v1026 = vsub.f32 %v1024, %v1025
          %v1027 = vand.u32 %v1026, 4294901760
          %1028 = vmatpush.msra.mxu0 %v1027
          %v1029 = vand.u32 %v815, 4294901760
          %1030 = vmatmul.f32.gmra.mxu0 %v1029
          %v1031 = vpop.f32.mrf.mxu0
          %v1032 = vadd.f32 %v1001, %v1031
          %1033 = vdwg.mxu0
          %1034 = vmatpush.msra.mxu0 0.0
          %1035 = vmatpush.msra.mxu0 0.0
          %1036 = vmatpush.msra.mxu0 0.0
          %1037 = vmatpush.msra.mxu0 0.0
          %1038 = vmatpush.msra.mxu0 0.0
          %1039 = vmatpush.msra.mxu0 0.0
          %1040 = vmatpush.msra.mxu0 0.0
          %1041 = vmatpush.msra.mxu0 0.0
          %1042 = vmatpush.msra.mxu0 0.0
          %1043 = vmatpush.msra.mxu0 0.0
          %1044 = vmatpush.msra.mxu0 0.0
          %1045 = vmatpush.msra.mxu0 0.0
          %1046 = vmatpush.msra.mxu0 0.0
          %1047 = vmatpush.msra.mxu0 0.0
          %v1048 = vand.u32 %v253, 4294901760
          %v1049 = vsub.f32 %v253, %v1048
          %1050 = vmatpush.msra.mxu0 %v1049
          %v1051 = vand.u32 %v252, 4294901760
          %v1052 = vsub.f32 %v252, %v1051
          %1053 = vmatpush.msra.mxu0 %v1052
          %v1054 = vand.u32 %v815, 4294901760
          %v1055 = vsub.f32 %v815, %v1054
          %1056 = vmatmul.f32.gmra.mxu0 %v1055
          %v1057 = vpop.f32.mrf.mxu0
          %v1058 = vadd.f32 %v1032, %v1057
          %1059 = vdwg.mxu0
          %1060 = vmatpush.msra.mxu0 0.0
          %1061 = vmatpush.msra.mxu0 0.0
          %1062 = vmatpush.msra.mxu0 0.0
          %1063 = vmatpush.msra.mxu0 0.0
          %1064 = vmatpush.msra.mxu0 0.0
          %1065 = vmatpush.msra.mxu0 0.0
          %1066 = vmatpush.msra.mxu0 0.0
          %1067 = vmatpush.msra.mxu0 0.0
          %1068 = vmatpush.msra.mxu0 0.0
          %1069 = vmatpush.msra.mxu0 0.0
          %1070 = vmatpush.msra.mxu0 0.0
          %1071 = vmatpush.msra.mxu0 0.0
          %1072 = vmatpush.msra.mxu0 0.0
          %1073 = vmatpush.msra.mxu0 0.0
          %v1074 = vand.u32 %v253, 4294901760
          %1075 = vmatpush.msra.mxu0 %v1074
          %v1076 = vand.u32 %v252, 4294901760
          %1077 = vmatpush.msra.mxu0 %v1076
          %v1078 = vand.u32 %v815, 4294901760
          %v1079 = vsub.f32 %v815, %v1078
          %v1080 = vand.u32 %v1079, 4294901760
          %1081 = vmatmul.f32.gmra.mxu0 %v1080
          %v1082 = vpop.f32.mrf.mxu0
          %v1083 = vadd.f32 %v1058, %v1082
          %1084 = vdwg.mxu0
          %1085 = vmatpush.msra.mxu0 0.0
          %1086 = vmatpush.msra.mxu0 0.0
          %1087 = vmatpush.msra.mxu0 0.0
          %1088 = vmatpush.msra.mxu0 0.0
          %1089 = vmatpush.msra.mxu0 0.0
          %1090 = vmatpush.msra.mxu0 0.0
          %1091 = vmatpush.msra.mxu0 0.0
          %1092 = vmatpush.msra.mxu0 0.0
          %1093 = vmatpush.msra.mxu0 0.0
          %1094 = vmatpush.msra.mxu0 0.0
          %1095 = vmatpush.msra.mxu0 0.0
          %1096 = vmatpush.msra.mxu0 0.0
          %1097 = vmatpush.msra.mxu0 0.0
          %1098 = vmatpush.msra.mxu0 0.0
          %v1099 = vand.u32 %v253, 4294901760
          %v1100 = vsub.f32 %v253, %v1099
          %v1101 = vand.u32 %v1100, 4294901760
          %1102 = vmatpush.msra.mxu0 %v1101
          %v1103 = vand.u32 %v252, 4294901760
          %v1104 = vsub.f32 %v252, %v1103
          %v1105 = vand.u32 %v1104, 4294901760
          %1106 = vmatpush.msra.mxu0 %v1105
          %v1107 = vand.u32 %v815, 4294901760
          %1108 = vmatmul.f32.gmra.mxu0 %v1107
          %v1109 = vpop.f32.mrf.mxu0
          %v1110 = vadd.f32 %v1083, %v1109
          %1111 = vdwg.mxu0
          %1112 = vmatpush.msra.mxu0 0.0
          %1113 = vmatpush.msra.mxu0 0.0
          %1114 = vmatpush.msra.mxu0 0.0
          %1115 = vmatpush.msra.mxu0 0.0
          %1116 = vmatpush.msra.mxu0 0.0
          %1117 = vmatpush.msra.mxu0 0.0
          %1118 = vmatpush.msra.mxu0 0.0
          %1119 = vmatpush.msra.mxu0 0.0
          %1120 = vmatpush.msra.mxu0 0.0
          %1121 = vmatpush.msra.mxu0 0.0
          %1122 = vmatpush.msra.mxu0 0.0
          %1123 = vmatpush.msra.mxu0 0.0
          %1124 = vmatpush.msra.mxu0 0.0
          %1125 = vmatpush.msra.mxu0 0.0
          %v1126 = vand.u32 %v253, 4294901760
          %1127 = vmatpush.msra.mxu0 %v1126
          %v1128 = vand.u32 %v252, 4294901760
          %1129 = vmatpush.msra.mxu0 %v1128
          %v1130 = vand.u32 %v815, 4294901760
          %1131 = vmatmul.f32.gmra.mxu0 %v1130
          %v1132 = vpop.f32.mrf.mxu0
          %v1133 = vadd.f32 %v1110, %v1132
          %1134 = vdwg.mxu0
          %1136 = vset.pattern.permute.xlu0 0
          %1137 = vperm.xlu0 %1136, %v234
          %v1138 = vpop.permute.xlu0 %1137
          %v1140 = vmul.f32 %v1138, %v974
          %1141 = vset.pattern.permute.xlu0 1
          %1142 = vperm.xlu0 %1141, %v234
          %v1143 = vpop.permute.xlu0 %1142
          %v1145 = vmul.f32 %v1143, %v812
          %v1146 = vadd.f32 %v1140, %v1145
          %1147 = vset.pattern.permute.xlu0 2
          %1148 = vperm.xlu0 %1147, %v234
          %v1149 = vpop.permute.xlu0 %1148
          %v1151 = vmul.f32 %v1149, %v1133
          %v1152 = vadd.f32 %v1146, %v1151
          %v1153 = vld [vmem:[#allocation4] sm:$0xff]
          %v1154 = vsel %vm813, %v1152, 0.0
          %1155 = vadd.xlane.f32.xlu0 %v1154
          %v1156 = vpop.xlane.xlu0 %1155
          %v1157 = vadd.f32 %v1153, %v1156
          %vm1158 = vcmask 7168
          %1159 = vst.msk [vmem:[#allocation4] sm:$0xff] %vm1158, %v1157
          %v1160 = vld [vmem:[#allocation5] sm:$0xff]
          %v1161 = vmul.f32 %v1152, %v1152
          %v1162 = vsel %vm813, %v1161, 0.0
          %1163 = vadd.xlane.f32.xlu0 %v1162
          %v1164 = vpop.xlane.xlu0 %1163
          %v1165 = vadd.f32 %v1160, %v1164
          %1166 = vst.msk [vmem:[#allocation5] sm:$0xff] %vm1158, %v1165
          %s1167 = scalar_lea.vmem %s220, 4
          %v1168 = vld [vmem:[%s1167] sm:$0xf]
          %v1170 = vsel %vm651, %v1168, 0
          %1172 = vmatpush.msra.mxu0 0.0
          %1173 = vmatpush.msra.mxu0 0.0
          %1174 = vmatpush.msra.mxu0 0.0
          %1175 = vmatpush.msra.mxu0 0.0
          %1176 = vmatpush.msra.mxu0 0.0
          %1177 = vmatpush.msra.mxu0 0.0
          %1178 = vmatpush.msra.mxu0 0.0
          %1179 = vmatpush.msra.mxu0 0.0
          %1180 = vmatpush.msra.mxu0 0.0
          %1181 = vmatpush.msra.mxu0 0.0
          %1182 = vmatpush.msra.mxu0 0.0
          %1183 = vmatpush.msra.mxu0 0.0
          %1184 = vmatpush.msra.mxu0 0.0
          %1185 = vmatpush.msra.mxu0 0.0
          %1186 = vmatpush.msra.mxu0 0.0
          %v1187 = vand.u32 %v1170, 4294901760
          %1188 = vmatpush.msra.mxu0 %v1187
          %v1189 = vand.u32 %v649, 4294901760
          %v1190 = vsub.f32 %v649, %v1189
          %v1191 = vand.u32 %v1190, 4294901760
          %v1192 = vsub.f32 %v1190, %v1191
          %v1193 = vand.u32 %v1192, 4294901760
          %1194 = vmatmul.f32.gmra.mxu0 %v1193
          %v1195 = vpop.f32.mrf.mxu0
          %v1196 = vadd.f32 0.0, %v1195
          %1197 = vdwg.mxu0
          %1198 = vmatpush.msra.mxu0 0.0
          %1199 = vmatpush.msra.mxu0 0.0
          %1200 = vmatpush.msra.mxu0 0.0
          %1201 = vmatpush.msra.mxu0 0.0
          %1202 = vmatpush.msra.mxu0 0.0
          %1203 = vmatpush.msra.mxu0 0.0
          %1204 = vmatpush.msra.mxu0 0.0
          %1205 = vmatpush.msra.mxu0 0.0
          %1206 = vmatpush.msra.mxu0 0.0
          %1207 = vmatpush.msra.mxu0 0.0
          %1208 = vmatpush.msra.mxu0 0.0
          %1209 = vmatpush.msra.mxu0 0.0
          %1210 = vmatpush.msra.mxu0 0.0
          %1211 = vmatpush.msra.mxu0 0.0
          %1212 = vmatpush.msra.mxu0 0.0
          %v1213 = vand.u32 %v1170, 4294901760
          %v1214 = vsub.f32 %v1170, %v1213
          %v1215 = vand.u32 %v1214, 4294901760
          %v1216 = vsub.f32 %v1214, %v1215
          %v1217 = vand.u32 %v1216, 4294901760
          %1218 = vmatpush.msra.mxu0 %v1217
          %v1219 = vand.u32 %v649, 4294901760
          %1220 = vmatmul.f32.gmra.mxu0 %v1219
          %v1221 = vpop.f32.mrf.mxu0
          %v1222 = vadd.f32 %v1196, %v1221
          %1223 = vdwg.mxu0
          %1224 = vmatpush.msra.mxu0 0.0
          %1225 = vmatpush.msra.mxu0 0.0
          %1226 = vmatpush.msra.mxu0 0.0
          %1227 = vmatpush.msra.mxu0 0.0
          %1228 = vmatpush.msra.mxu0 0.0
          %1229 = vmatpush.msra.mxu0 0.0
          %1230 = vmatpush.msra.mxu0 0.0
          %1231 = vmatpush.msra.mxu0 0.0
          %1232 = vmatpush.msra.mxu0 0.0
          %1233 = vmatpush.msra.mxu0 0.0
          %1234 = vmatpush.msra.mxu0 0.0
          %1235 = vmatpush.msra.mxu0 0.0
          %1236 = vmatpush.msra.mxu0 0.0
          %1237 = vmatpush.msra.mxu0 0.0
          %1238 = vmatpush.msra.mxu0 0.0
          %v1239 = vand.u32 %v1170, 4294901760
          %v1240 = vsub.f32 %v1170, %v1239
          %1241 = vmatpush.msra.mxu0 %v1240
          %v1242 = vand.u32 %v649, 4294901760
          %v1243 = vsub.f32 %v649, %v1242
          %1244 = vmatmul.f32.gmra.mxu0 %v1243
          %v1245 = vpop.f32.mrf.mxu0
          %v1246 = vadd.f32 %v1222, %v1245
          %1247 = vdwg.mxu0
          %1248 = vmatpush.msra.mxu0 0.0
          %1249 = vmatpush.msra.mxu0 0.0
          %1250 = vmatpush.msra.mxu0 0.0
          %1251 = vmatpush.msra.mxu0 0.0
          %1252 = vmatpush.msra.mxu0 0.0
          %1253 = vmatpush.msra.mxu0 0.0
          %1254 = vmatpush.msra.mxu0 0.0
          %1255 = vmatpush.msra.mxu0 0.0
          %1256 = vmatpush.msra.mxu0 0.0
          %1257 = vmatpush.msra.mxu0 0.0
          %1258 = vmatpush.msra.mxu0 0.0
          %1259 = vmatpush.msra.mxu0 0.0
          %1260 = vmatpush.msra.mxu0 0.0
          %1261 = vmatpush.msra.mxu0 0.0
          %1262 = vmatpush.msra.mxu0 0.0
          %v1263 = vand.u32 %v1170, 4294901760
          %1264 = vmatpush.msra.mxu0 %v1263
          %v1265 = vand.u32 %v649, 4294901760
          %v1266 = vsub.f32 %v649, %v1265
          %v1267 = vand.u32 %v1266, 4294901760
          %1268 = vmatmul.f32.gmra.mxu0 %v1267
          %v1269 = vpop.f32.mrf.mxu0
          %v1270 = vadd.f32 %v1246, %v1269
          %1271 = vdwg.mxu0
          %1272 = vmatpush.msra.mxu0 0.0
          %1273 = vmatpush.msra.mxu0 0.0
          %1274 = vmatpush.msra.mxu0 0.0
          %1275 = vmatpush.msra.mxu0 0.0
          %1276 = vmatpush.msra.mxu0 0.0
          %1277 = vmatpush.msra.mxu0 0.0
          %1278 = vmatpush.msra.mxu0 0.0
          %1279 = vmatpush.msra.mxu0 0.0
          %1280 = vmatpush.msra.mxu0 0.0
          %1281 = vmatpush.msra.mxu0 0.0
          %1282 = vmatpush.msra.mxu0 0.0
          %1283 = vmatpush.msra.mxu0 0.0
          %1284 = vmatpush.msra.mxu0 0.0
          %1285 = vmatpush.msra.mxu0 0.0
          %1286 = vmatpush.msra.mxu0 0.0
          %v1287 = vand.u32 %v1170, 4294901760
          %v1288 = vsub.f32 %v1170, %v1287
          %v1289 = vand.u32 %v1288, 4294901760
          %1290 = vmatpush.msra.mxu0 %v1289
          %v1291 = vand.u32 %v649, 4294901760
          %1292 = vmatmul.f32.gmra.mxu0 %v1291
          %v1293 = vpop.f32.mrf.mxu0
          %v1294 = vadd.f32 %v1270, %v1293
          %1295 = vdwg.mxu0
          %1296 = vmatpush.msra.mxu0 0.0
          %1297 = vmatpush.msra.mxu0 0.0
          %1298 = vmatpush.msra.mxu0 0.0
          %1299 = vmatpush.msra.mxu0 0.0
          %1300 = vmatpush.msra.mxu0 0.0
          %1301 = vmatpush.msra.mxu0 0.0
          %1302 = vmatpush.msra.mxu0 0.0
          %1303 = vmatpush.msra.mxu0 0.0
          %1304 = vmatpush.msra.mxu0 0.0
          %1305 = vmatpush.msra.mxu0 0.0
          %1306 = vmatpush.msra.mxu0 0.0
          %1307 = vmatpush.msra.mxu0 0.0
          %1308 = vmatpush.msra.mxu0 0.0
          %1309 = vmatpush.msra.mxu0 0.0
          %1310 = vmatpush.msra.mxu0 0.0
          %v1311 = vand.u32 %v1170, 4294901760
          %1312 = vmatpush.msra.mxu0 %v1311
          %v1313 = vand.u32 %v649, 4294901760
          %1314 = vmatmul.f32.gmra.mxu0 %v1313
          %v1315 = vpop.f32.mrf.mxu0
          %v1316 = vadd.f32 %v1294, %v1315
          %1317 = vdwg.mxu0
          %v1318 = vmul.f32 %v1316, %v803
          %v1319 = vadd.f32 %v1318, %v809
          %v1320 = vmax.f32 %v1319, 0.0
          %v1322 = vsel %vm813, %v1320, 0
          %1324 = vmatpush.msra.mxu0 0.0
          %1325 = vmatpush.msra.mxu0 0.0
          %1326 = vmatpush.msra.mxu0 0.0
          %1327 = vmatpush.msra.mxu0 0.0
          %1328 = vmatpush.msra.mxu0 0.0
          %1329 = vmatpush.msra.mxu0 0.0
          %1330 = vmatpush.msra.mxu0 0.0
          %1331 = vmatpush.msra.mxu0 0.0
          %1332 = vmatpush.msra.mxu0 0.0
          %1333 = vmatpush.msra.mxu0 0.0
          %1334 = vmatpush.msra.mxu0 0.0
          %1335 = vmatpush.msra.mxu0 0.0
          %1336 = vmatpush.msra.mxu0 0.0
          %1337 = vmatpush.msra.mxu0 0.0
          %v1338 = vand.u32 %v246, 4294901760
          %1339 = vmatpush.msra.mxu0 %v1338
          %v1340 = vand.u32 %v245, 4294901760
          %1341 = vmatpush.msra.mxu0 %v1340
          %v1342 = vand.u32 %v1322, 4294901760
          %v1343 = vsub.f32 %v1322, %v1342
          %v1344 = vand.u32 %v1343, 4294901760
          %v1345 = vsub.f32 %v1343, %v1344
          %v1346 = vand.u32 %v1345, 4294901760
          %1347 = vmatmul.f32.gmra.mxu0 %v1346
          %v1348 = vpop.f32.mrf.mxu0
          %v1349 = vadd.f32 0.0, %v1348
          %1350 = vdwg.mxu0
          %1351 = vmatpush.msra.mxu0 0.0
          %1352 = vmatpush.msra.mxu0 0.0
          %1353 = vmatpush.msra.mxu0 0.0
          %1354 = vmatpush.msra.mxu0 0.0
          %1355 = vmatpush.msra.mxu0 0.0
          %1356 = vmatpush.msra.mxu0 0.0
          %1357 = vmatpush.msra.mxu0 0.0
          %1358 = vmatpush.msra.mxu0 0.0
          %1359 = vmatpush.msra.mxu0 0.0
          %1360 = vmatpush.msra.mxu0 0.0
          %1361 = vmatpush.msra.mxu0 0.0
          %1362 = vmatpush.msra.mxu0 0.0
          %1363 = vmatpush.msra.mxu0 0.0
          %1364 = vmatpush.msra.mxu0 0.0
          %v1365 = vand.u32 %v246, 4294901760
          %v1366 = vsub.f32 %v246, %v1365
          %v1367 = vand.u32 %v1366, 4294901760
          %v1368 = vsub.f32 %v1366, %v1367
          %v1369 = vand.u32 %v1368, 4294901760
          %1370 = vmatpush.msra.mxu0 %v1369
          %v1371 = vand.u32 %v245, 4294901760
          %v1372 = vsub.f32 %v245, %v1371
          %v1373 = vand.u32 %v1372, 4294901760
          %v1374 = vsub.f32 %v1372, %v1373
          %v1375 = vand.u32 %v1374, 4294901760
          %1376 = vmatpush.msra.mxu0 %v1375
          %v1377 = vand.u32 %v1322, 4294901760
          %1378 = vmatmul.f32.gmra.mxu0 %v1377
          %v1379 = vpop.f32.mrf.mxu0
          %v1380 = vadd.f32 %v1349, %v1379
          %1381 = vdwg.mxu0
          %1382 = vmatpush.msra.mxu0 0.0
          %1383 = vmatpush.msra.mxu0 0.0
          %1384 = vmatpush.msra.mxu0 0.0
          %1385 = vmatpush.msra.mxu0 0.0
          %1386 = vmatpush.msra.mxu0 0.0
          %1387 = vmatpush.msra.mxu0 0.0
          %1388 = vmatpush.msra.mxu0 0.0
          %1389 = vmatpush.msra.mxu0 0.0
          %1390 = vmatpush.msra.mxu0 0.0
          %1391 = vmatpush.msra.mxu0 0.0
          %1392 = vmatpush.msra.mxu0 0.0
          %1393 = vmatpush.msra.mxu0 0.0
          %1394 = vmatpush.msra.mxu0 0.0
          %1395 = vmatpush.msra.mxu0 0.0
          %v1396 = vand.u32 %v246, 4294901760
          %v1397 = vsub.f32 %v246, %v1396
          %1398 = vmatpush.msra.mxu0 %v1397
          %v1399 = vand.u32 %v245, 4294901760
          %v1400 = vsub.f32 %v245, %v1399
          %1401 = vmatpush.msra.mxu0 %v1400
          %v1402 = vand.u32 %v1322, 4294901760
          %v1403 = vsub.f32 %v1322, %v1402
          %1404 = vmatmul.f32.gmra.mxu0 %v1403
          %v1405 = vpop.f32.mrf.mxu0
          %v1406 = vadd.f32 %v1380, %v1405
          %1407 = vdwg.mxu0
          %1408 = vmatpush.msra.mxu0 0.0
          %1409 = vmatpush.msra.mxu0 0.0
          %1410 = vmatpush.msra.mxu0 0.0
          %1411 = vmatpush.msra.mxu0 0.0
          %1412 = vmatpush.msra.mxu0 0.0
          %1413 = vmatpush.msra.mxu0 0.0
          %1414 = vmatpush.msra.mxu0 0.0
          %1415 = vmatpush.msra.mxu0 0.0
          %1416 = vmatpush.msra.mxu0 0.0
          %1417 = vmatpush.msra.mxu0 0.0
          %1418 = vmatpush.msra.mxu0 0.0
          %1419 = vmatpush.msra.mxu0 0.0
          %1420 = vmatpush.msra.mxu0 0.0
          %1421 = vmatpush.msra.mxu0 0.0
          %v1422 = vand.u32 %v246, 4294901760
          %1423 = vmatpush.msra.mxu0 %v1422
          %v1424 = vand.u32 %v245, 4294901760
          %1425 = vmatpush.msra.mxu0 %v1424
          %v1426 = vand.u32 %v1322, 4294901760
          %v1427 = vsub.f32 %v1322, %v1426
          %v1428 = vand.u32 %v1427, 4294901760
          %1429 = vmatmul.f32.gmra.mxu0 %v1428
          %v1430 = vpop.f32.mrf.mxu0
          %v1431 = vadd.f32 %v1406, %v1430
          %1432 = vdwg.mxu0
          %1433 = vmatpush.msra.mxu0 0.0
          %1434 = vmatpush.msra.mxu0 0.0
          %1435 = vmatpush.msra.mxu0 0.0
          %1436 = vmatpush.msra.mxu0 0.0
          %1437 = vmatpush.msra.mxu0 0.0
          %1438 = vmatpush.msra.mxu0 0.0
          %1439 = vmatpush.msra.mxu0 0.0
          %1440 = vmatpush.msra.mxu0 0.0
          %1441 = vmatpush.msra.mxu0 0.0
          %1442 = vmatpush.msra.mxu0 0.0
          %1443 = vmatpush.msra.mxu0 0.0
          %1444 = vmatpush.msra.mxu0 0.0
          %1445 = vmatpush.msra.mxu0 0.0
          %1446 = vmatpush.msra.mxu0 0.0
          %v1447 = vand.u32 %v246, 4294901760
          %v1448 = vsub.f32 %v246, %v1447
          %v1449 = vand.u32 %v1448, 4294901760
          %1450 = vmatpush.msra.mxu0 %v1449
          %v1451 = vand.u32 %v245, 4294901760
          %v1452 = vsub.f32 %v245, %v1451
          %v1453 = vand.u32 %v1452, 4294901760
          %1454 = vmatpush.msra.mxu0 %v1453
          %v1455 = vand.u32 %v1322, 4294901760
          %1456 = vmatmul.f32.gmra.mxu0 %v1455
          %v1457 = vpop.f32.mrf.mxu0
          %v1458 = vadd.f32 %v1431, %v1457
          %1459 = vdwg.mxu0
          %1460 = vmatpush.msra.mxu0 0.0
          %1461 = vmatpush.msra.mxu0 0.0
          %1462 = vmatpush.msra.mxu0 0.0
          %1463 = vmatpush.msra.mxu0 0.0
          %1464 = vmatpush.msra.mxu0 0.0
          %1465 = vmatpush.msra.mxu0 0.0
          %1466 = vmatpush.msra.mxu0 0.0
          %1467 = vmatpush.msra.mxu0 0.0
          %1468 = vmatpush.msra.mxu0 0.0
          %1469 = vmatpush.msra.mxu0 0.0
          %1470 = vmatpush.msra.mxu0 0.0
          %1471 = vmatpush.msra.mxu0 0.0
          %1472 = vmatpush.msra.mxu0 0.0
          %1473 = vmatpush.msra.mxu0 0.0
          %v1474 = vand.u32 %v246, 4294901760
          %1475 = vmatpush.msra.mxu0 %v1474
          %v1476 = vand.u32 %v245, 4294901760
          %1477 = vmatpush.msra.mxu0 %v1476
          %v1478 = vand.u32 %v1322, 4294901760
          %1479 = vmatmul.f32.gmra.mxu0 %v1478
          %v1480 = vpop.f32.mrf.mxu0
          %v1481 = vadd.f32 %v1458, %v1480
          %1482 = vdwg.mxu0
          %1483 = vmatpush.msra.mxu0 0.0
          %1484 = vmatpush.msra.mxu0 0.0
          %1485 = vmatpush.msra.mxu0 0.0
          %1486 = vmatpush.msra.mxu0 0.0
          %1487 = vmatpush.msra.mxu0 0.0
          %1488 = vmatpush.msra.mxu0 0.0
          %1489 = vmatpush.msra.mxu0 0.0
          %1490 = vmatpush.msra.mxu0 0.0
          %1491 = vmatpush.msra.mxu0 0.0
          %1492 = vmatpush.msra.mxu0 0.0
          %1493 = vmatpush.msra.mxu0 0.0
          %1494 = vmatpush.msra.mxu0 0.0
          %1495 = vmatpush.msra.mxu0 0.0
          %1496 = vmatpush.msra.mxu0 0.0
          %v1497 = vand.u32 %v253, 4294901760
          %1498 = vmatpush.msra.mxu0 %v1497
          %v1499 = vand.u32 %v252, 4294901760
          %1500 = vmatpush.msra.mxu0 %v1499
          %v1501 = vand.u32 %v1322, 4294901760
          %v1502 = vsub.f32 %v1322, %v1501
          %v1503 = vand.u32 %v1502, 4294901760
          %v1504 = vsub.f32 %v1502, %v1503
          %v1505 = vand.u32 %v1504, 4294901760
          %1506 = vmatmul.f32.gmra.mxu0 %v1505
          %v1507 = vpop.f32.mrf.mxu0
          %v1508 = vadd.f32 0.0, %v1507
          %1509 = vdwg.mxu0
          %1510 = vmatpush.msra.mxu0 0.0
          %1511 = vmatpush.msra.mxu0 0.0
          %1512 = vmatpush.msra.mxu0 0.0
          %1513 = vmatpush.msra.mxu0 0.0
          %1514 = vmatpush.msra.mxu0 0.0
          %1515 = vmatpush.msra.mxu0 0.0
          %1516 = vmatpush.msra.mxu0 0.0
          %1517 = vmatpush.msra.mxu0 0.0
          %1518 = vmatpush.msra.mxu0 0.0
          %1519 = vmatpush.msra.mxu0 0.0
          %1520 = vmatpush.msra.mxu0 0.0
          %1521 = vmatpush.msra.mxu0 0.0
          %1522 = vmatpush.msra.mxu0 0.0
          %1523 = vmatpush.msra.mxu0 0.0
          %v1524 = vand.u32 %v253, 4294901760
          %v1525 = vsub.f32 %v253, %v1524
          %v1526 = vand.u32 %v1525, 4294901760
          %v1527 = vsub.f32 %v1525, %v1526
          %v1528 = vand.u32 %v1527, 4294901760
          %1529 = vmatpush.msra.mxu0 %v1528
          %v1530 = vand.u32 %v252, 4294901760
          %v1531 = vsub.f32 %v252, %v1530
          %v1532 = vand.u32 %v1531, 4294901760
          %v1533 = vsub.f32 %v1531, %v1532
          %v1534 = vand.u32 %v1533, 4294901760
          %1535 = vmatpush.msra.mxu0 %v1534
          %v1536 = vand.u32 %v1322, 4294901760
          %1537 = vmatmul.f32.gmra.mxu0 %v1536
          %v1538 = vpop.f32.mrf.mxu0
          %v1539 = vadd.f32 %v1508, %v1538
          %1540 = vdwg.mxu0
          %1541 = vmatpush.msra.mxu0 0.0
          %1542 = vmatpush.msra.mxu0 0.0
          %1543 = vmatpush.msra.mxu0 0.0
          %1544 = vmatpush.msra.mxu0 0.0
          %1545 = vmatpush.msra.mxu0 0.0
          %1546 = vmatpush.msra.mxu0 0.0
          %1547 = vmatpush.msra.mxu0 0.0
          %1548 = vmatpush.msra.mxu0 0.0
          %1549 = vmatpush.msra.mxu0 0.0
          %1550 = vmatpush.msra.mxu0 0.0
          %1551 = vmatpush.msra.mxu0 0.0
          %1552 = vmatpush.msra.mxu0 0.0
          %1553 = vmatpush.msra.mxu0 0.0
          %1554 = vmatpush.msra.mxu0 0.0
          %v1555 = vand.u32 %v253, 4294901760
          %v1556 = vsub.f32 %v253, %v1555
          %1557 = vmatpush.msra.mxu0 %v1556
          %v1558 = vand.u32 %v252, 4294901760
          %v1559 = vsub.f32 %v252, %v1558
          %1560 = vmatpush.msra.mxu0 %v1559
          %v1561 = vand.u32 %v1322, 4294901760
          %v1562 = vsub.f32 %v1322, %v1561
          %1563 = vmatmul.f32.gmra.mxu0 %v1562
          %v1564 = vpop.f32.mrf.mxu0
          %v1565 = vadd.f32 %v1539, %v1564
          %1566 = vdwg.mxu0
          %1567 = vmatpush.msra.mxu0 0.0
          %1568 = vmatpush.msra.mxu0 0.0
          %1569 = vmatpush.msra.mxu0 0.0
          %1570 = vmatpush.msra.mxu0 0.0
          %1571 = vmatpush.msra.mxu0 0.0
          %1572 = vmatpush.msra.mxu0 0.0
          %1573 = vmatpush.msra.mxu0 0.0
          %1574 = vmatpush.msra.mxu0 0.0
          %1575 = vmatpush.msra.mxu0 0.0
          %1576 = vmatpush.msra.mxu0 0.0
          %1577 = vmatpush.msra.mxu0 0.0
          %1578 = vmatpush.msra.mxu0 0.0
          %1579 = vmatpush.msra.mxu0 0.0
          %1580 = vmatpush.msra.mxu0 0.0
          %v1581 = vand.u32 %v253, 4294901760
          %1582 = vmatpush.msra.mxu0 %v1581
          %v1583 = vand.u32 %v252, 4294901760
          %1584 = vmatpush.msra.mxu0 %v1583
          %v1585 = vand.u32 %v1322, 4294901760
          %v1586 = vsub.f32 %v1322, %v1585
          %v1587 = vand.u32 %v1586, 4294901760
          %1588 = vmatmul.f32.gmra.mxu0 %v1587
          %v1589 = vpop.f32.mrf.mxu0
          %v1590 = vadd.f32 %v1565, %v1589
          %1591 = vdwg.mxu0
          %1592 = vmatpush.msra.mxu0 0.0
          %1593 = vmatpush.msra.mxu0 0.0
          %1594 = vmatpush.msra.mxu0 0.0
          %1595 = vmatpush.msra.mxu0 0.0
          %1596 = vmatpush.msra.mxu0 0.0
          %1597 = vmatpush.msra.mxu0 0.0
          %1598 = vmatpush.msra.mxu0 0.0
          %1599 = vmatpush.msra.mxu0 0.0
          %1600 = vmatpush.msra.mxu0 0.0
          %1601 = vmatpush.msra.mxu0 0.0
          %1602 = vmatpush.msra.mxu0 0.0
          %1603 = vmatpush.msra.mxu0 0.0
          %1604 = vmatpush.msra.mxu0 0.0
          %1605 = vmatpush.msra.mxu0 0.0
          %v1606 = vand.u32 %v253, 4294901760
          %v1607 = vsub.f32 %v253, %v1606
          %v1608 = vand.u32 %v1607, 4294901760
          %1609 = vmatpush.msra.mxu0 %v1608
          %v1610 = vand.u32 %v252, 4294901760
          %v1611 = vsub.f32 %v252, %v1610
          %v1612 = vand.u32 %v1611, 4294901760
          %1613 = vmatpush.msra.mxu0 %v1612
          %v1614 = vand.u32 %v1322, 4294901760
          %1615 = vmatmul.f32.gmra.mxu0 %v1614
          %v1616 = vpop.f32.mrf.mxu0
          %v1617 = vadd.f32 %v1590, %v1616
          %1618 = vdwg.mxu0
          %1619 = vmatpush.msra.mxu0 0.0
          %1620 = vmatpush.msra.mxu0 0.0
          %1621 = vmatpush.msra.mxu0 0.0
          %1622 = vmatpush.msra.mxu0 0.0
          %1623 = vmatpush.msra.mxu0 0.0
          %1624 = vmatpush.msra.mxu0 0.0
          %1625 = vmatpush.msra.mxu0 0.0
          %1626 = vmatpush.msra.mxu0 0.0
          %1627 = vmatpush.msra.mxu0 0.0
          %1628 = vmatpush.msra.mxu0 0.0
          %1629 = vmatpush.msra.mxu0 0.0
          %1630 = vmatpush.msra.mxu0 0.0
          %1631 = vmatpush.msra.mxu0 0.0
          %1632 = vmatpush.msra.mxu0 0.0
          %v1633 = vand.u32 %v253, 4294901760
          %1634 = vmatpush.msra.mxu0 %v1633
          %v1635 = vand.u32 %v252, 4294901760
          %1636 = vmatpush.msra.mxu0 %v1635
          %v1637 = vand.u32 %v1322, 4294901760
          %1638 = vmatmul.f32.gmra.mxu0 %v1637
          %v1639 = vpop.f32.mrf.mxu0
          %v1640 = vadd.f32 %v1617, %v1639
          %1641 = vdwg.mxu0
          %v1642 = vmul.f32 %v1138, %v1481
          %v1643 = vmul.f32 %v1143, %v1320
          %v1644 = vadd.f32 %v1642, %v1643
          %v1645 = vmul.f32 %v1149, %v1640
          %v1646 = vadd.f32 %v1644, %v1645
          %v1647 = vld [vmem:[#allocation4] sm:$0xff]
          %v1648 = vsel %vm813, %v1646, 0.0
          %1649 = vadd.xlane.f32.xlu0 %v1648
          %v1650 = vpop.xlane.xlu0 %1649
          %v1651 = vadd.f32 %v1647, %v1650
          %1652 = vst.msk [vmem:[#allocation4] sm:$0xff] %vm1158, %v1651
          %v1653 = vld [vmem:[#allocation5] sm:$0xff]
          %v1654 = vmul.f32 %v1646, %v1646
          %v1655 = vsel %vm813, %v1654, 0.0
          %1656 = vadd.xlane.f32.xlu0 %v1655
          %v1657 = vpop.xlane.xlu0 %1656
          %v1658 = vadd.f32 %v1653, %v1657
          %1659 = vst.msk [vmem:[#allocation5] sm:$0xff] %vm1158, %v1658
        $region44: #{branch1_forward.1} parent=31 // pred_fallthru
          _
        %p1660 = scmp.eq.s32.totalorder %s23, 2
        // Predicated region
        $region45: #{branch1_forward.1} parent=31 // pred_check
          %p1661 = pneg %p1660
        $region46: #{branch1_forward.1} parent=31 // pred_check_branch
          %1663 = sbr.rel (%p1661) target = $region48
        $region47: #{branch1_forward.1} parent=31 // pred_region
          %v1664 = vld [vmem:[#allocation2] sm:$0xff]
          %v1665 = vrcp.pop 32.0
          %v1666 = vmul.f32 32.0, %v1665
          %v1667 = vsub.f32 1.0, %v1666
          %v1668 = vmul.f32 %v1665, %v1667
          %v1669 = vadd.f32 %v1665, %v1668
          %vm1670 = vweird.f32 %v1665
          %v1671 = vsel %vm1670, %v1665, %v1669
          %v1672 = vmul.f32 %v1664, %v1671
          %v1673 = vld [vmem:[#allocation3] sm:$0xff]
          %v1674 = vmul.f32 %v1673, %v1671
          %v1675 = vmul.f32 %v1672, %v1672
          %v1676 = vsub.f32 %v1674, %v1675
          %v1677 = vmax.f32 %v1676, 0.0
          %v1678 = vadd.f32 %v1677, 1e-05
          %v1679 = vrsqrt.pop %v1678
          %v1680 = vmul.f32 %v1679, %v1678
          %v1681 = vmul.f32 %v1680, %v1679
          %v1682 = vmul.f32 0.5, %v1681
          %v1683 = vsub.f32 1.5, %v1682
          %v1684 = vmul.f32 %v1679, %v1683
          %vm1685 = vweird.f32 %v1678
          %vm1686 = vweird.f32 %v1679
          %vm1687 = vmor %vm1685, %vm1686
          %v1688 = vsel %vm1687, %v1679, %v1684
          %1690 = vrot.lane.b32.xlu0 %v1688, 3
          %v1691 = vpop.permute.xlu0 %1690
          %v1693 = vmul.f32 %v234, %v1691
          %1695 = vrot.lane.b32.xlu0 %v1693, 125
          %v1696 = vpop.permute.xlu0 %1695
          %v1698 = vmul.f32 %v1672, %v1696
          %1700 = vrot.lane.b32.xlu0 %v1698, 4
          %v1701 = vpop.permute.xlu0 %1700
          %v1703 = vsub.f32 %v234, %v1701
          %v1704 = vld [vmem:[#allocation4] sm:$0xff]
          %v1705 = vmul.f32 %v1704, %v1671
          %v1706 = vld [vmem:[#allocation5] sm:$0xff]
          %v1707 = vmul.f32 %v1706, %v1671
          %v1708 = vmul.f32 %v1705, %v1705
          %v1709 = vsub.f32 %v1707, %v1708
          %v1710 = vmax.f32 %v1709, 0.0
          %v1711 = vadd.f32 %v1710, 1e-05
          %v1712 = vrsqrt.pop %v1711
          %v1713 = vmul.f32 %v1712, %v1711
          %v1714 = vmul.f32 %v1713, %v1712
          %v1715 = vmul.f32 0.5, %v1714
          %v1716 = vsub.f32 1.5, %v1715
          %v1717 = vmul.f32 %v1712, %v1716
          %vm1718 = vweird.f32 %v1711
          %vm1719 = vweird.f32 %v1712
          %vm1720 = vmor %vm1718, %vm1719
          %v1721 = vsel %vm1720, %v1712, %v1717
          %1723 = vrot.lane.b32.xlu0 %v1721, 5
          %v1724 = vpop.permute.xlu0 %1723
          %v1726 = vmul.f32 %v234, %v1724
          %1728 = vrot.lane.b32.xlu0 %v1726, 123
          %v1729 = vpop.permute.xlu0 %1728
          %v1731 = vmul.f32 %v1705, %v1729
          %1733 = vrot.lane.b32.xlu0 %v1731, 6
          %v1734 = vpop.permute.xlu0 %1733
          %v1736 = vsub.f32 %v234, %v1734
          %v1737 = vld [vmem:[%s220] sm:$0xf]
          %vm1738 = vcmask 31744
          %v1740 = vsel %vm1738, %v233, 0
          %vm1742 = vcmask 1043456
          %v1744 = vsel %vm1742, %v1737, 0
          %1746 = vmatpush.msra.mxu0 0.0
          %1747 = vmatpush.msra.mxu0 0.0
          %1748 = vmatpush.msra.mxu0 0.0
          %1749 = vmatpush.msra.mxu0 0.0
          %1750 = vmatpush.msra.mxu0 0.0
          %1751 = vmatpush.msra.mxu0 0.0
          %1752 = vmatpush.msra.mxu0 0.0
          %1753 = vmatpush.msra.mxu0 0.0
          %1754 = vmatpush.msra.mxu0 0.0
          %1755 = vmatpush.msra.mxu0 0.0
          %1756 = vmatpush.msra.mxu0 0.0
          %1757 = vmatpush.msra.mxu0 0.0
          %1758 = vmatpush.msra.mxu0 0.0
          %1759 = vmatpush.msra.mxu0 0.0
          %1760 = vmatpush.msra.mxu0 0.0
          %v1761 = vand.u32 %v1744, 4294901760
          %1762 = vmatpush.msra.mxu0 %v1761
          %v1763 = vand.u32 %v1740, 4294901760
          %v1764 = vsub.f32 %v1740, %v1763
          %v1765 = vand.u32 %v1764, 4294901760
          %v1766 = vsub.f32 %v1764, %v1765
          %v1767 = vand.u32 %v1766, 4294901760
          %1768 = vmatmul.f32.gmra.mxu0 %v1767
          %v1769 = vpop.f32.mrf.mxu0
          %v1770 = vadd.f32 0.0, %v1769
          %1771 = vdwg.mxu0
          %1772 = vmatpush.msra.mxu0 0.0
          %1773 = vmatpush.msra.mxu0 0.0
          %1774 = vmatpush.msra.mxu0 0.0
          %1775 = vmatpush.msra.mxu0 0.0
          %1776 = vmatpush.msra.mxu0 0.0
          %1777 = vmatpush.msra.mxu0 0.0
          %1778 = vmatpush.msra.mxu0 0.0
          %1779 = vmatpush.msra.mxu0 0.0
          %1780 = vmatpush.msra.mxu0 0.0
          %1781 = vmatpush.msra.mxu0 0.0
          %1782 = vmatpush.msra.mxu0 0.0
          %1783 = vmatpush.msra.mxu0 0.0
          %1784 = vmatpush.msra.mxu0 0.0
          %1785 = vmatpush.msra.mxu0 0.0
          %1786 = vmatpush.msra.mxu0 0.0
          %v1787 = vand.u32 %v1744, 4294901760
          %v1788 = vsub.f32 %v1744, %v1787
          %v1789 = vand.u32 %v1788, 4294901760
          %v1790 = vsub.f32 %v1788, %v1789
          %v1791 = vand.u32 %v1790, 4294901760
          %1792 = vmatpush.msra.mxu0 %v1791
          %v1793 = vand.u32 %v1740, 4294901760
          %1794 = vmatmul.f32.gmra.mxu0 %v1793
          %v1795 = vpop.f32.mrf.mxu0
          %v1796 = vadd.f32 %v1770, %v1795
          %1797 = vdwg.mxu0
          %1798 = vmatpush.msra.mxu0 0.0
          %1799 = vmatpush.msra.mxu0 0.0
          %1800 = vmatpush.msra.mxu0 0.0
          %1801 = vmatpush.msra.mxu0 0.0
          %1802 = vmatpush.msra.mxu0 0.0
          %1803 = vmatpush.msra.mxu0 0.0
          %1804 = vmatpush.msra.mxu0 0.0
          %1805 = vmatpush.msra.mxu0 0.0
          %1806 = vmatpush.msra.mxu0 0.0
          %1807 = vmatpush.msra.mxu0 0.0
          %1808 = vmatpush.msra.mxu0 0.0
          %1809 = vmatpush.msra.mxu0 0.0
          %1810 = vmatpush.msra.mxu0 0.0
          %1811 = vmatpush.msra.mxu0 0.0
          %1812 = vmatpush.msra.mxu0 0.0
          %v1813 = vand.u32 %v1744, 4294901760
          %v1814 = vsub.f32 %v1744, %v1813
          %1815 = vmatpush.msra.mxu0 %v1814
          %v1816 = vand.u32 %v1740, 4294901760
          %v1817 = vsub.f32 %v1740, %v1816
          %1818 = vmatmul.f32.gmra.mxu0 %v1817
          %v1819 = vpop.f32.mrf.mxu0
          %v1820 = vadd.f32 %v1796, %v1819
          %1821 = vdwg.mxu0
          %1822 = vmatpush.msra.mxu0 0.0
          %1823 = vmatpush.msra.mxu0 0.0
          %1824 = vmatpush.msra.mxu0 0.0
          %1825 = vmatpush.msra.mxu0 0.0
          %1826 = vmatpush.msra.mxu0 0.0
          %1827 = vmatpush.msra.mxu0 0.0
          %1828 = vmatpush.msra.mxu0 0.0
          %1829 = vmatpush.msra.mxu0 0.0
          %1830 = vmatpush.msra.mxu0 0.0
          %1831 = vmatpush.msra.mxu0 0.0
          %1832 = vmatpush.msra.mxu0 0.0
          %1833 = vmatpush.msra.mxu0 0.0
          %1834 = vmatpush.msra.mxu0 0.0
          %1835 = vmatpush.msra.mxu0 0.0
          %1836 = vmatpush.msra.mxu0 0.0
          %v1837 = vand.u32 %v1744, 4294901760
          %1838 = vmatpush.msra.mxu0 %v1837
          %v1839 = vand.u32 %v1740, 4294901760
          %v1840 = vsub.f32 %v1740, %v1839
          %v1841 = vand.u32 %v1840, 4294901760
          %1842 = vmatmul.f32.gmra.mxu0 %v1841
          %v1843 = vpop.f32.mrf.mxu0
          %v1844 = vadd.f32 %v1820, %v1843
          %1845 = vdwg.mxu0
          %1846 = vmatpush.msra.mxu0 0.0
          %1847 = vmatpush.msra.mxu0 0.0
          %1848 = vmatpush.msra.mxu0 0.0
          %1849 = vmatpush.msra.mxu0 0.0
          %1850 = vmatpush.msra.mxu0 0.0
          %1851 = vmatpush.msra.mxu0 0.0
          %1852 = vmatpush.msra.mxu0 0.0
          %1853 = vmatpush.msra.mxu0 0.0
          %1854 = vmatpush.msra.mxu0 0.0
          %1855 = vmatpush.msra.mxu0 0.0
          %1856 = vmatpush.msra.mxu0 0.0
          %1857 = vmatpush.msra.mxu0 0.0
          %1858 = vmatpush.msra.mxu0 0.0
          %1859 = vmatpush.msra.mxu0 0.0
          %1860 = vmatpush.msra.mxu0 0.0
          %v1861 = vand.u32 %v1744, 4294901760
          %v1862 = vsub.f32 %v1744, %v1861
          %v1863 = vand.u32 %v1862, 4294901760
          %1864 = vmatpush.msra.mxu0 %v1863
          %v1865 = vand.u32 %v1740, 4294901760
          %1866 = vmatmul.f32.gmra.mxu0 %v1865
          %v1867 = vpop.f32.mrf.mxu0
          %v1868 = vadd.f32 %v1844, %v1867
          %1869 = vdwg.mxu0
          %1870 = vmatpush.msra.mxu0 0.0
          %1871 = vmatpush.msra.mxu0 0.0
          %1872 = vmatpush.msra.mxu0 0.0
          %1873 = vmatpush.msra.mxu0 0.0
          %1874 = vmatpush.msra.mxu0 0.0
          %1875 = vmatpush.msra.mxu0 0.0
          %1876 = vmatpush.msra.mxu0 0.0
          %1877 = vmatpush.msra.mxu0 0.0
          %1878 = vmatpush.msra.mxu0 0.0
          %1879 = vmatpush.msra.mxu0 0.0
          %1880 = vmatpush.msra.mxu0 0.0
          %1881 = vmatpush.msra.mxu0 0.0
          %1882 = vmatpush.msra.mxu0 0.0
          %1883 = vmatpush.msra.mxu0 0.0
          %1884 = vmatpush.msra.mxu0 0.0
          %v1885 = vand.u32 %v1744, 4294901760
          %1886 = vmatpush.msra.mxu0 %v1885
          %v1887 = vand.u32 %v1740, 4294901760
          %1888 = vmatmul.f32.gmra.mxu0 %v1887
          %v1889 = vpop.f32.mrf.mxu0
          %v1890 = vadd.f32 %v1868, %v1889
          %1891 = vdwg.mxu0
          %1892 = vset.pattern.permute.xlu0 3
          %1893 = vperm.xlu0 %1892, %v1693
          %v1894 = vpop.permute.xlu0 %1893
          %v1896 = vmul.f32 %v1890, %v1894
          %1898 = vset.pattern.permute.xlu0 4
          %1899 = vperm.xlu0 %1898, %v1703
          %v1900 = vpop.permute.xlu0 %1899
          %v1902 = vadd.f32 %v1896, %v1900
          %v1903 = vmax.f32 %v1902, 0.0
          %vm1904 = vcmask 130048
          %v1906 = vsel %vm1904, %v1903, 0
          %1908 = vmatpush.msra.mxu0 0.0
          %1909 = vmatpush.msra.mxu0 0.0
          %1910 = vmatpush.msra.mxu0 0.0
          %1911 = vmatpush.msra.mxu0 0.0
          %1912 = vmatpush.msra.mxu0 0.0
          %1913 = vmatpush.msra.mxu0 0.0
          %1914 = vmatpush.msra.mxu0 0.0
          %1915 = vmatpush.msra.mxu0 0.0
          %1916 = vmatpush.msra.mxu0 0.0
          %1917 = vmatpush.msra.mxu0 0.0
          %1918 = vmatpush.msra.mxu0 0.0
          %1919 = vmatpush.msra.mxu0 0.0
          %1920 = vmatpush.msra.mxu0 0.0
          %1921 = vmatpush.msra.mxu0 0.0
          %v1922 = vand.u32 %v246, 4294901760
          %1923 = vmatpush.msra.mxu0 %v1922
          %v1924 = vand.u32 %v245, 4294901760
          %1925 = vmatpush.msra.mxu0 %v1924
          %v1926 = vand.u32 %v1906, 4294901760
          %v1927 = vsub.f32 %v1906, %v1926
          %v1928 = vand.u32 %v1927, 4294901760
          %v1929 = vsub.f32 %v1927, %v1928
          %v1930 = vand.u32 %v1929, 4294901760
          %1931 = vmatmul.f32.gmra.mxu0 %v1930
          %v1932 = vpop.f32.mrf.mxu0
          %v1933 = vadd.f32 0.0, %v1932
          %1934 = vdwg.mxu0
          %1935 = vmatpush.msra.mxu0 0.0
          %1936 = vmatpush.msra.mxu0 0.0
          %1937 = vmatpush.msra.mxu0 0.0
          %1938 = vmatpush.msra.mxu0 0.0
          %1939 = vmatpush.msra.mxu0 0.0
          %1940 = vmatpush.msra.mxu0 0.0
          %1941 = vmatpush.msra.mxu0 0.0
          %1942 = vmatpush.msra.mxu0 0.0
          %1943 = vmatpush.msra.mxu0 0.0
          %1944 = vmatpush.msra.mxu0 0.0
          %1945 = vmatpush.msra.mxu0 0.0
          %1946 = vmatpush.msra.mxu0 0.0
          %1947 = vmatpush.msra.mxu0 0.0
          %1948 = vmatpush.msra.mxu0 0.0
          %v1949 = vand.u32 %v246, 4294901760
          %v1950 = vsub.f32 %v246, %v1949
          %v1951 = vand.u32 %v1950, 4294901760
          %v1952 = vsub.f32 %v1950, %v1951
          %v1953 = vand.u32 %v1952, 4294901760
          %1954 = vmatpush.msra.mxu0 %v1953
          %v1955 = vand.u32 %v245, 4294901760
          %v1956 = vsub.f32 %v245, %v1955
          %v1957 = vand.u32 %v1956, 4294901760
          %v1958 = vsub.f32 %v1956, %v1957
          %v1959 = vand.u32 %v1958, 4294901760
          %1960 = vmatpush.msra.mxu0 %v1959
          %v1961 = vand.u32 %v1906, 4294901760
          %1962 = vmatmul.f32.gmra.mxu0 %v1961
          %v1963 = vpop.f32.mrf.mxu0
          %v1964 = vadd.f32 %v1933, %v1963
          %1965 = vdwg.mxu0
          %1966 = vmatpush.msra.mxu0 0.0
          %1967 = vmatpush.msra.mxu0 0.0
          %1968 = vmatpush.msra.mxu0 0.0
          %1969 = vmatpush.msra.mxu0 0.0
          %1970 = vmatpush.msra.mxu0 0.0
          %1971 = vmatpush.msra.mxu0 0.0
          %1972 = vmatpush.msra.mxu0 0.0
          %1973 = vmatpush.msra.mxu0 0.0
          %1974 = vmatpush.msra.mxu0 0.0
          %1975 = vmatpush.msra.mxu0 0.0
          %1976 = vmatpush.msra.mxu0 0.0
          %1977 = vmatpush.msra.mxu0 0.0
          %1978 = vmatpush.msra.mxu0 0.0
          %1979 = vmatpush.msra.mxu0 0.0
          %v1980 = vand.u32 %v246, 4294901760
          %v1981 = vsub.f32 %v246, %v1980
          %1982 = vmatpush.msra.mxu0 %v1981
          %v1983 = vand.u32 %v245, 4294901760
          %v1984 = vsub.f32 %v245, %v1983
          %1985 = vmatpush.msra.mxu0 %v1984
          %v1986 = vand.u32 %v1906, 4294901760
          %v1987 = vsub.f32 %v1906, %v1986
          %1988 = vmatmul.f32.gmra.mxu0 %v1987
          %v1989 = vpop.f32.mrf.mxu0
          %v1990 = vadd.f32 %v1964, %v1989
          %1991 = vdwg.mxu0
          %1992 = vmatpush.msra.mxu0 0.0
          %1993 = vmatpush.msra.mxu0 0.0
          %1994 = vmatpush.msra.mxu0 0.0
          %1995 = vmatpush.msra.mxu0 0.0
          %1996 = vmatpush.msra.mxu0 0.0
          %1997 = vmatpush.msra.mxu0 0.0
          %1998 = vmatpush.msra.mxu0 0.0
          %1999 = vmatpush.msra.mxu0 0.0
          %2000 = vmatpush.msra.mxu0 0.0
          %2001 = vmatpush.msra.mxu0 0.0
          %2002 = vmatpush.msra.mxu0 0.0
          %2003 = vmatpush.msra.mxu0 0.0
          %2004 = vmatpush.msra.mxu0 0.0
          %2005 = vmatpush.msra.mxu0 0.0
          %v2006 = vand.u32 %v246, 4294901760
          %2007 = vmatpush.msra.mxu0 %v2006
          %v2008 = vand.u32 %v245, 4294901760
          %2009 = vmatpush.msra.mxu0 %v2008
          %v2010 = vand.u32 %v1906, 4294901760
          %v2011 = vsub.f32 %v1906, %v2010
          %v2012 = vand.u32 %v2011, 4294901760
          %2013 = vmatmul.f32.gmra.mxu0 %v2012
          %v2014 = vpop.f32.mrf.mxu0
          %v2015 = vadd.f32 %v1990, %v2014
          %2016 = vdwg.mxu0
          %2017 = vmatpush.msra.mxu0 0.0
          %2018 = vmatpush.msra.mxu0 0.0
          %2019 = vmatpush.msra.mxu0 0.0
          %2020 = vmatpush.msra.mxu0 0.0
          %2021 = vmatpush.msra.mxu0 0.0
          %2022 = vmatpush.msra.mxu0 0.0
          %2023 = vmatpush.msra.mxu0 0.0
          %2024 = vmatpush.msra.mxu0 0.0
          %2025 = vmatpush.msra.mxu0 0.0
          %2026 = vmatpush.msra.mxu0 0.0
          %2027 = vmatpush.msra.mxu0 0.0
          %2028 = vmatpush.msra.mxu0 0.0
          %2029 = vmatpush.msra.mxu0 0.0
          %2030 = vmatpush.msra.mxu0 0.0
          %v2031 = vand.u32 %v246, 4294901760
          %v2032 = vsub.f32 %v246, %v2031
          %v2033 = vand.u32 %v2032, 4294901760
          %2034 = vmatpush.msra.mxu0 %v2033
          %v2035 = vand.u32 %v245, 4294901760
          %v2036 = vsub.f32 %v245, %v2035
          %v2037 = vand.u32 %v2036, 4294901760
          %2038 = vmatpush.msra.mxu0 %v2037
          %v2039 = vand.u32 %v1906, 4294901760
          %2040 = vmatmul.f32.gmra.mxu0 %v2039
          %v2041 = vpop.f32.mrf.mxu0
          %v2042 = vadd.f32 %v2015, %v2041
          %2043 = vdwg.mxu0
          %2044 = vmatpush.msra.mxu0 0.0
          %2045 = vmatpush.msra.mxu0 0.0
          %2046 = vmatpush.msra.mxu0 0.0
          %2047 = vmatpush.msra.mxu0 0.0
          %2048 = vmatpush.msra.mxu0 0.0
          %2049 = vmatpush.msra.mxu0 0.0
          %2050 = vmatpush.msra.mxu0 0.0
          %2051 = vmatpush.msra.mxu0 0.0
          %2052 = vmatpush.msra.mxu0 0.0
          %2053 = vmatpush.msra.mxu0 0.0
          %2054 = vmatpush.msra.mxu0 0.0
          %2055 = vmatpush.msra.mxu0 0.0
          %2056 = vmatpush.msra.mxu0 0.0
          %2057 = vmatpush.msra.mxu0 0.0
          %v2058 = vand.u32 %v246, 4294901760
          %2059 = vmatpush.msra.mxu0 %v2058
          %v2060 = vand.u32 %v245, 4294901760
          %2061 = vmatpush.msra.mxu0 %v2060
          %v2062 = vand.u32 %v1906, 4294901760
          %2063 = vmatmul.f32.gmra.mxu0 %v2062
          %v2064 = vpop.f32.mrf.mxu0
          %v2065 = vadd.f32 %v2042, %v2064
          %2066 = vdwg.mxu0
          %2067 = vmatpush.msra.mxu0 0.0
          %2068 = vmatpush.msra.mxu0 0.0
          %2069 = vmatpush.msra.mxu0 0.0
          %2070 = vmatpush.msra.mxu0 0.0
          %2071 = vmatpush.msra.mxu0 0.0
          %2072 = vmatpush.msra.mxu0 0.0
          %2073 = vmatpush.msra.mxu0 0.0
          %2074 = vmatpush.msra.mxu0 0.0
          %2075 = vmatpush.msra.mxu0 0.0
          %2076 = vmatpush.msra.mxu0 0.0
          %2077 = vmatpush.msra.mxu0 0.0
          %2078 = vmatpush.msra.mxu0 0.0
          %2079 = vmatpush.msra.mxu0 0.0
          %2080 = vmatpush.msra.mxu0 0.0
          %v2081 = vand.u32 %v253, 4294901760
          %2082 = vmatpush.msra.mxu0 %v2081
          %v2083 = vand.u32 %v252, 4294901760
          %2084 = vmatpush.msra.mxu0 %v2083
          %v2085 = vand.u32 %v1906, 4294901760
          %v2086 = vsub.f32 %v1906, %v2085
          %v2087 = vand.u32 %v2086, 4294901760
          %v2088 = vsub.f32 %v2086, %v2087
          %v2089 = vand.u32 %v2088, 4294901760
          %2090 = vmatmul.f32.gmra.mxu0 %v2089
          %v2091 = vpop.f32.mrf.mxu0
          %v2092 = vadd.f32 0.0, %v2091
          %2093 = vdwg.mxu0
          %2094 = vmatpush.msra.mxu0 0.0
          %2095 = vmatpush.msra.mxu0 0.0
          %2096 = vmatpush.msra.mxu0 0.0
          %2097 = vmatpush.msra.mxu0 0.0
          %2098 = vmatpush.msra.mxu0 0.0
          %2099 = vmatpush.msra.mxu0 0.0
          %2100 = vmatpush.msra.mxu0 0.0
          %2101 = vmatpush.msra.mxu0 0.0
          %2102 = vmatpush.msra.mxu0 0.0
          %2103 = vmatpush.msra.mxu0 0.0
          %2104 = vmatpush.msra.mxu0 0.0
          %2105 = vmatpush.msra.mxu0 0.0
          %2106 = vmatpush.msra.mxu0 0.0
          %2107 = vmatpush.msra.mxu0 0.0
          %v2108 = vand.u32 %v253, 4294901760
          %v2109 = vsub.f32 %v253, %v2108
          %v2110 = vand.u32 %v2109, 4294901760
          %v2111 = vsub.f32 %v2109, %v2110
          %v2112 = vand.u32 %v2111, 4294901760
          %2113 = vmatpush.msra.mxu0 %v2112
          %v2114 = vand.u32 %v252, 4294901760
          %v2115 = vsub.f32 %v252, %v2114
          %v2116 = vand.u32 %v2115, 4294901760
          %v2117 = vsub.f32 %v2115, %v2116
          %v2118 = vand.u32 %v2117, 4294901760
          %2119 = vmatpush.msra.mxu0 %v2118
          %v2120 = vand.u32 %v1906, 4294901760
          %2121 = vmatmul.f32.gmra.mxu0 %v2120
          %v2122 = vpop.f32.mrf.mxu0
          %v2123 = vadd.f32 %v2092, %v2122
          %2124 = vdwg.mxu0
          %2125 = vmatpush.msra.mxu0 0.0
          %2126 = vmatpush.msra.mxu0 0.0
          %2127 = vmatpush.msra.mxu0 0.0
          %2128 = vmatpush.msra.mxu0 0.0
          %2129 = vmatpush.msra.mxu0 0.0
          %2130 = vmatpush.msra.mxu0 0.0
          %2131 = vmatpush.msra.mxu0 0.0
          %2132 = vmatpush.msra.mxu0 0.0
          %2133 = vmatpush.msra.mxu0 0.0
          %2134 = vmatpush.msra.mxu0 0.0
          %2135 = vmatpush.msra.mxu0 0.0
          %2136 = vmatpush.msra.mxu0 0.0
          %2137 = vmatpush.msra.mxu0 0.0
          %2138 = vmatpush.msra.mxu0 0.0
          %v2139 = vand.u32 %v253, 4294901760
          %v2140 = vsub.f32 %v253, %v2139
          %2141 = vmatpush.msra.mxu0 %v2140
          %v2142 = vand.u32 %v252, 4294901760
          %v2143 = vsub.f32 %v252, %v2142
          %2144 = vmatpush.msra.mxu0 %v2143
          %v2145 = vand.u32 %v1906, 4294901760
          %v2146 = vsub.f32 %v1906, %v2145
          %2147 = vmatmul.f32.gmra.mxu0 %v2146
          %v2148 = vpop.f32.mrf.mxu0
          %v2149 = vadd.f32 %v2123, %v2148
          %2150 = vdwg.mxu0
          %2151 = vmatpush.msra.mxu0 0.0
          %2152 = vmatpush.msra.mxu0 0.0
          %2153 = vmatpush.msra.mxu0 0.0
          %2154 = vmatpush.msra.mxu0 0.0
          %2155 = vmatpush.msra.mxu0 0.0
          %2156 = vmatpush.msra.mxu0 0.0
          %2157 = vmatpush.msra.mxu0 0.0
          %2158 = vmatpush.msra.mxu0 0.0
          %2159 = vmatpush.msra.mxu0 0.0
          %2160 = vmatpush.msra.mxu0 0.0
          %2161 = vmatpush.msra.mxu0 0.0
          %2162 = vmatpush.msra.mxu0 0.0
          %2163 = vmatpush.msra.mxu0 0.0
          %2164 = vmatpush.msra.mxu0 0.0
          %v2165 = vand.u32 %v253, 4294901760
          %2166 = vmatpush.msra.mxu0 %v2165
          %v2167 = vand.u32 %v252, 4294901760
          %2168 = vmatpush.msra.mxu0 %v2167
          %v2169 = vand.u32 %v1906, 4294901760
          %v2170 = vsub.f32 %v1906, %v2169
          %v2171 = vand.u32 %v2170, 4294901760
          %2172 = vmatmul.f32.gmra.mxu0 %v2171
          %v2173 = vpop.f32.mrf.mxu0
          %v2174 = vadd.f32 %v2149, %v2173
          %2175 = vdwg.mxu0
          %2176 = vmatpush.msra.mxu0 0.0
          %2177 = vmatpush.msra.mxu0 0.0
          %2178 = vmatpush.msra.mxu0 0.0
          %2179 = vmatpush.msra.mxu0 0.0
          %2180 = vmatpush.msra.mxu0 0.0
          %2181 = vmatpush.msra.mxu0 0.0
          %2182 = vmatpush.msra.mxu0 0.0
          %2183 = vmatpush.msra.mxu0 0.0
          %2184 = vmatpush.msra.mxu0 0.0
          %2185 = vmatpush.msra.mxu0 0.0
          %2186 = vmatpush.msra.mxu0 0.0
          %2187 = vmatpush.msra.mxu0 0.0
          %2188 = vmatpush.msra.mxu0 0.0
          %2189 = vmatpush.msra.mxu0 0.0
          %v2190 = vand.u32 %v253, 4294901760
          %v2191 = vsub.f32 %v253, %v2190
          %v2192 = vand.u32 %v2191, 4294901760
          %2193 = vmatpush.msra.mxu0 %v2192
          %v2194 = vand.u32 %v252, 4294901760
          %v2195 = vsub.f32 %v252, %v2194
          %v2196 = vand.u32 %v2195, 4294901760
          %2197 = vmatpush.msra.mxu0 %v2196
          %v2198 = vand.u32 %v1906, 4294901760
          %2199 = vmatmul.f32.gmra.mxu0 %v2198
          %v2200 = vpop.f32.mrf.mxu0
          %v2201 = vadd.f32 %v2174, %v2200
          %2202 = vdwg.mxu0
          %2203 = vmatpush.msra.mxu0 0.0
          %2204 = vmatpush.msra.mxu0 0.0
          %2205 = vmatpush.msra.mxu0 0.0
          %2206 = vmatpush.msra.mxu0 0.0
          %2207 = vmatpush.msra.mxu0 0.0
          %2208 = vmatpush.msra.mxu0 0.0
          %2209 = vmatpush.msra.mxu0 0.0
          %2210 = vmatpush.msra.mxu0 0.0
          %2211 = vmatpush.msra.mxu0 0.0
          %2212 = vmatpush.msra.mxu0 0.0
          %2213 = vmatpush.msra.mxu0 0.0
          %2214 = vmatpush.msra.mxu0 0.0
          %2215 = vmatpush.msra.mxu0 0.0
          %2216 = vmatpush.msra.mxu0 0.0
          %v2217 = vand.u32 %v253, 4294901760
          %2218 = vmatpush.msra.mxu0 %v2217
          %v2219 = vand.u32 %v252, 4294901760
          %2220 = vmatpush.msra.mxu0 %v2219
          %v2221 = vand.u32 %v1906, 4294901760
          %2222 = vmatmul.f32.gmra.mxu0 %v2221
          %v2223 = vpop.f32.mrf.mxu0
          %v2224 = vadd.f32 %v2201, %v2223
          %2225 = vdwg.mxu0
          %2227 = vset.pattern.permute.xlu0 0
          %2228 = vperm.xlu0 %2227, %v234
          %v2229 = vpop.permute.xlu0 %2228
          %v2231 = vmul.f32 %v2229, %v2065
          %2232 = vset.pattern.permute.xlu0 1
          %2233 = vperm.xlu0 %2232, %v234
          %v2234 = vpop.permute.xlu0 %2233
          %v2236 = vmul.f32 %v2234, %v1903
          %v2237 = vadd.f32 %v2231, %v2236
          %2238 = vset.pattern.permute.xlu0 2
          %2239 = vperm.xlu0 %2238, %v234
          %v2240 = vpop.permute.xlu0 %2239
          %v2242 = vmul.f32 %v2240, %v2224
          %v2243 = vadd.f32 %v2237, %v2242
          %2244 = vset.pattern.permute.xlu0 5
          %2245 = vperm.xlu0 %2244, %v1726
          %v2246 = vpop.permute.xlu0 %2245
          %v2248 = vmul.f32 %v2243, %v2246
          %2250 = vset.pattern.permute.xlu0 6
          %2251 = vperm.xlu0 %2250, %v1736
          %v2252 = vpop.permute.xlu0 %2251
          %v2254 = vadd.f32 %v2248, %v2252
          %v2255 = vmax.f32 %v2254, 0.0
          %2256 = vst.msk [vmem:[%s215] sm:$0xff] %vm1904, %v2255
          %s2257 = scalar_lea.vmem %s220, 4
          %v2258 = vld [vmem:[%s2257] sm:$0xf]
          %v2260 = vsel %vm1742, %v2258, 0
          %2262 = vmatpush.msra.mxu0 0.0
          %2263 = vmatpush.msra.mxu0 0.0
          %2264 = vmatpush.msra.mxu0 0.0
          %2265 = vmatpush.msra.mxu0 0.0
          %2266 = vmatpush.msra.mxu0 0.0
          %2267 = vmatpush.msra.mxu0 0.0
          %2268 = vmatpush.msra.mxu0 0.0
          %2269 = vmatpush.msra.mxu0 0.0
          %2270 = vmatpush.msra.mxu0 0.0
          %2271 = vmatpush.msra.mxu0 0.0
          %2272 = vmatpush.msra.mxu0 0.0
          %2273 = vmatpush.msra.mxu0 0.0
          %2274 = vmatpush.msra.mxu0 0.0
          %2275 = vmatpush.msra.mxu0 0.0
          %2276 = vmatpush.msra.mxu0 0.0
          %v2277 = vand.u32 %v2260, 4294901760
          %2278 = vmatpush.msra.mxu0 %v2277
          %v2279 = vand.u32 %v1740, 4294901760
          %v2280 = vsub.f32 %v1740, %v2279
          %v2281 = vand.u32 %v2280, 4294901760
          %v2282 = vsub.f32 %v2280, %v2281
          %v2283 = vand.u32 %v2282, 4294901760
          %2284 = vmatmul.f32.gmra.mxu0 %v2283
          %v2285 = vpop.f32.mrf.mxu0
          %v2286 = vadd.f32 0.0, %v2285
          %2287 = vdwg.mxu0
          %2288 = vmatpush.msra.mxu0 0.0
          %2289 = vmatpush.msra.mxu0 0.0
          %2290 = vmatpush.msra.mxu0 0.0
          %2291 = vmatpush.msra.mxu0 0.0
          %2292 = vmatpush.msra.mxu0 0.0
          %2293 = vmatpush.msra.mxu0 0.0
          %2294 = vmatpush.msra.mxu0 0.0
          %2295 = vmatpush.msra.mxu0 0.0
          %2296 = vmatpush.msra.mxu0 0.0
          %2297 = vmatpush.msra.mxu0 0.0
          %2298 = vmatpush.msra.mxu0 0.0
          %2299 = vmatpush.msra.mxu0 0.0
          %2300 = vmatpush.msra.mxu0 0.0
          %2301 = vmatpush.msra.mxu0 0.0
          %2302 = vmatpush.msra.mxu0 0.0
          %v2303 = vand.u32 %v2260, 4294901760
          %v2304 = vsub.f32 %v2260, %v2303
          %v2305 = vand.u32 %v2304, 4294901760
          %v2306 = vsub.f32 %v2304, %v2305
          %v2307 = vand.u32 %v2306, 4294901760
          %2308 = vmatpush.msra.mxu0 %v2307
          %v2309 = vand.u32 %v1740, 4294901760
          %2310 = vmatmul.f32.gmra.mxu0 %v2309
          %v2311 = vpop.f32.mrf.mxu0
          %v2312 = vadd.f32 %v2286, %v2311
          %2313 = vdwg.mxu0
          %2314 = vmatpush.msra.mxu0 0.0
          %2315 = vmatpush.msra.mxu0 0.0
          %2316 = vmatpush.msra.mxu0 0.0
          %2317 = vmatpush.msra.mxu0 0.0
          %2318 = vmatpush.msra.mxu0 0.0
          %2319 = vmatpush.msra.mxu0 0.0
          %2320 = vmatpush.msra.mxu0 0.0
          %2321 = vmatpush.msra.mxu0 0.0
          %2322 = vmatpush.msra.mxu0 0.0
          %2323 = vmatpush.msra.mxu0 0.0
          %2324 = vmatpush.msra.mxu0 0.0
          %2325 = vmatpush.msra.mxu0 0.0
          %2326 = vmatpush.msra.mxu0 0.0
          %2327 = vmatpush.msra.mxu0 0.0
          %2328 = vmatpush.msra.mxu0 0.0
          %v2329 = vand.u32 %v2260, 4294901760
          %v2330 = vsub.f32 %v2260, %v2329
          %2331 = vmatpush.msra.mxu0 %v2330
          %v2332 = vand.u32 %v1740, 4294901760
          %v2333 = vsub.f32 %v1740, %v2332
          %2334 = vmatmul.f32.gmra.mxu0 %v2333
          %v2335 = vpop.f32.mrf.mxu0
          %v2336 = vadd.f32 %v2312, %v2335
          %2337 = vdwg.mxu0
          %2338 = vmatpush.msra.mxu0 0.0
          %2339 = vmatpush.msra.mxu0 0.0
          %2340 = vmatpush.msra.mxu0 0.0
          %2341 = vmatpush.msra.mxu0 0.0
          %2342 = vmatpush.msra.mxu0 0.0
          %2343 = vmatpush.msra.mxu0 0.0
          %2344 = vmatpush.msra.mxu0 0.0
          %2345 = vmatpush.msra.mxu0 0.0
          %2346 = vmatpush.msra.mxu0 0.0
          %2347 = vmatpush.msra.mxu0 0.0
          %2348 = vmatpush.msra.mxu0 0.0
          %2349 = vmatpush.msra.mxu0 0.0
          %2350 = vmatpush.msra.mxu0 0.0
          %2351 = vmatpush.msra.mxu0 0.0
          %2352 = vmatpush.msra.mxu0 0.0
          %v2353 = vand.u32 %v2260, 4294901760
          %2354 = vmatpush.msra.mxu0 %v2353
          %v2355 = vand.u32 %v1740, 4294901760
          %v2356 = vsub.f32 %v1740, %v2355
          %v2357 = vand.u32 %v2356, 4294901760
          %2358 = vmatmul.f32.gmra.mxu0 %v2357
          %v2359 = vpop.f32.mrf.mxu0
          %v2360 = vadd.f32 %v2336, %v2359
          %2361 = vdwg.mxu0
          %2362 = vmatpush.msra.mxu0 0.0
          %2363 = vmatpush.msra.mxu0 0.0
          %2364 = vmatpush.msra.mxu0 0.0
          %2365 = vmatpush.msra.mxu0 0.0
          %2366 = vmatpush.msra.mxu0 0.0
          %2367 = vmatpush.msra.mxu0 0.0
          %2368 = vmatpush.msra.mxu0 0.0
          %2369 = vmatpush.msra.mxu0 0.0
          %2370 = vmatpush.msra.mxu0 0.0
          %2371 = vmatpush.msra.mxu0 0.0
          %2372 = vmatpush.msra.mxu0 0.0
          %2373 = vmatpush.msra.mxu0 0.0
          %2374 = vmatpush.msra.mxu0 0.0
          %2375 = vmatpush.msra.mxu0 0.0
          %2376 = vmatpush.msra.mxu0 0.0
          %v2377 = vand.u32 %v2260, 4294901760
          %v2378 = vsub.f32 %v2260, %v2377
          %v2379 = vand.u32 %v2378, 4294901760
          %2380 = vmatpush.msra.mxu0 %v2379
          %v2381 = vand.u32 %v1740, 4294901760
          %2382 = vmatmul.f32.gmra.mxu0 %v2381
          %v2383 = vpop.f32.mrf.mxu0
          %v2384 = vadd.f32 %v2360, %v2383
          %2385 = vdwg.mxu0
          %2386 = vmatpush.msra.mxu0 0.0
          %2387 = vmatpush.msra.mxu0 0.0
          %2388 = vmatpush.msra.mxu0 0.0
          %2389 = vmatpush.msra.mxu0 0.0
          %2390 = vmatpush.msra.mxu0 0.0
          %2391 = vmatpush.msra.mxu0 0.0
          %2392 = vmatpush.msra.mxu0 0.0
          %2393 = vmatpush.msra.mxu0 0.0
          %2394 = vmatpush.msra.mxu0 0.0
          %2395 = vmatpush.msra.mxu0 0.0
          %2396 = vmatpush.msra.mxu0 0.0
          %2397 = vmatpush.msra.mxu0 0.0
          %2398 = vmatpush.msra.mxu0 0.0
          %2399 = vmatpush.msra.mxu0 0.0
          %2400 = vmatpush.msra.mxu0 0.0
          %v2401 = vand.u32 %v2260, 4294901760
          %2402 = vmatpush.msra.mxu0 %v2401
          %v2403 = vand.u32 %v1740, 4294901760
          %2404 = vmatmul.f32.gmra.mxu0 %v2403
          %v2405 = vpop.f32.mrf.mxu0
          %v2406 = vadd.f32 %v2384, %v2405
          %2407 = vdwg.mxu0
          %v2408 = vmul.f32 %v2406, %v1894
          %v2409 = vadd.f32 %v2408, %v1900
          %v2410 = vmax.f32 %v2409, 0.0
          %v2412 = vsel %vm1904, %v2410, 0
          %2414 = vmatpush.msra.mxu0 0.0
          %2415 = vmatpush.msra.mxu0 0.0
          %2416 = vmatpush.msra.mxu0 0.0
          %2417 = vmatpush.msra.mxu0 0.0
          %2418 = vmatpush.msra.mxu0 0.0
          %2419 = vmatpush.msra.mxu0 0.0
          %2420 = vmatpush.msra.mxu0 0.0
          %2421 = vmatpush.msra.mxu0 0.0
          %2422 = vmatpush.msra.mxu0 0.0
          %2423 = vmatpush.msra.mxu0 0.0
          %2424 = vmatpush.msra.mxu0 0.0
          %2425 = vmatpush.msra.mxu0 0.0
          %2426 = vmatpush.msra.mxu0 0.0
          %2427 = vmatpush.msra.mxu0 0.0
          %v2428 = vand.u32 %v246, 4294901760
          %2429 = vmatpush.msra.mxu0 %v2428
          %v2430 = vand.u32 %v245, 4294901760
          %2431 = vmatpush.msra.mxu0 %v2430
          %v2432 = vand.u32 %v2412, 4294901760
          %v2433 = vsub.f32 %v2412, %v2432
          %v2434 = vand.u32 %v2433, 4294901760
          %v2435 = vsub.f32 %v2433, %v2434
          %v2436 = vand.u32 %v2435, 4294901760
          %2437 = vmatmul.f32.gmra.mxu0 %v2436
          %v2438 = vpop.f32.mrf.mxu0
          %v2439 = vadd.f32 0.0, %v2438
          %2440 = vdwg.mxu0
          %2441 = vmatpush.msra.mxu0 0.0
          %2442 = vmatpush.msra.mxu0 0.0
          %2443 = vmatpush.msra.mxu0 0.0
          %2444 = vmatpush.msra.mxu0 0.0
          %2445 = vmatpush.msra.mxu0 0.0
          %2446 = vmatpush.msra.mxu0 0.0
          %2447 = vmatpush.msra.mxu0 0.0
          %2448 = vmatpush.msra.mxu0 0.0
          %2449 = vmatpush.msra.mxu0 0.0
          %2450 = vmatpush.msra.mxu0 0.0
          %2451 = vmatpush.msra.mxu0 0.0
          %2452 = vmatpush.msra.mxu0 0.0
          %2453 = vmatpush.msra.mxu0 0.0
          %2454 = vmatpush.msra.mxu0 0.0
          %v2455 = vand.u32 %v246, 4294901760
          %v2456 = vsub.f32 %v246, %v2455
          %v2457 = vand.u32 %v2456, 4294901760
          %v2458 = vsub.f32 %v2456, %v2457
          %v2459 = vand.u32 %v2458, 4294901760
          %2460 = vmatpush.msra.mxu0 %v2459
          %v2461 = vand.u32 %v245, 4294901760
          %v2462 = vsub.f32 %v245, %v2461
          %v2463 = vand.u32 %v2462, 4294901760
          %v2464 = vsub.f32 %v2462, %v2463
          %v2465 = vand.u32 %v2464, 4294901760
          %2466 = vmatpush.msra.mxu0 %v2465
          %v2467 = vand.u32 %v2412, 4294901760
          %2468 = vmatmul.f32.gmra.mxu0 %v2467
          %v2469 = vpop.f32.mrf.mxu0
          %v2470 = vadd.f32 %v2439, %v2469
          %2471 = vdwg.mxu0
          %2472 = vmatpush.msra.mxu0 0.0
          %2473 = vmatpush.msra.mxu0 0.0
          %2474 = vmatpush.msra.mxu0 0.0
          %2475 = vmatpush.msra.mxu0 0.0
          %2476 = vmatpush.msra.mxu0 0.0
          %2477 = vmatpush.msra.mxu0 0.0
          %2478 = vmatpush.msra.mxu0 0.0
          %2479 = vmatpush.msra.mxu0 0.0
          %2480 = vmatpush.msra.mxu0 0.0
          %2481 = vmatpush.msra.mxu0 0.0
          %2482 = vmatpush.msra.mxu0 0.0
          %2483 = vmatpush.msra.mxu0 0.0
          %2484 = vmatpush.msra.mxu0 0.0
          %2485 = vmatpush.msra.mxu0 0.0
          %v2486 = vand.u32 %v246, 4294901760
          %v2487 = vsub.f32 %v246, %v2486
          %2488 = vmatpush.msra.mxu0 %v2487
          %v2489 = vand.u32 %v245, 4294901760
          %v2490 = vsub.f32 %v245, %v2489
          %2491 = vmatpush.msra.mxu0 %v2490
          %v2492 = vand.u32 %v2412, 4294901760
          %v2493 = vsub.f32 %v2412, %v2492
          %2494 = vmatmul.f32.gmra.mxu0 %v2493
          %v2495 = vpop.f32.mrf.mxu0
          %v2496 = vadd.f32 %v2470, %v2495
          %2497 = vdwg.mxu0
          %2498 = vmatpush.msra.mxu0 0.0
          %2499 = vmatpush.msra.mxu0 0.0
          %2500 = vmatpush.msra.mxu0 0.0
          %2501 = vmatpush.msra.mxu0 0.0
          %2502 = vmatpush.msra.mxu0 0.0
          %2503 = vmatpush.msra.mxu0 0.0
          %2504 = vmatpush.msra.mxu0 0.0
          %2505 = vmatpush.msra.mxu0 0.0
          %2506 = vmatpush.msra.mxu0 0.0
          %2507 = vmatpush.msra.mxu0 0.0
          %2508 = vmatpush.msra.mxu0 0.0
          %2509 = vmatpush.msra.mxu0 0.0
          %2510 = vmatpush.msra.mxu0 0.0
          %2511 = vmatpush.msra.mxu0 0.0
          %v2512 = vand.u32 %v246, 4294901760
          %2513 = vmatpush.msra.mxu0 %v2512
          %v2514 = vand.u32 %v245, 4294901760
          %2515 = vmatpush.msra.mxu0 %v2514
          %v2516 = vand.u32 %v2412, 4294901760
          %v2517 = vsub.f32 %v2412, %v2516
          %v2518 = vand.u32 %v2517, 4294901760
          %2519 = vmatmul.f32.gmra.mxu0 %v2518
          %v2520 = vpop.f32.mrf.mxu0
          %v2521 = vadd.f32 %v2496, %v2520
          %2522 = vdwg.mxu0
          %2523 = vmatpush.msra.mxu0 0.0
          %2524 = vmatpush.msra.mxu0 0.0
          %2525 = vmatpush.msra.mxu0 0.0
          %2526 = vmatpush.msra.mxu0 0.0
          %2527 = vmatpush.msra.mxu0 0.0
          %2528 = vmatpush.msra.mxu0 0.0
          %2529 = vmatpush.msra.mxu0 0.0
          %2530 = vmatpush.msra.mxu0 0.0
          %2531 = vmatpush.msra.mxu0 0.0
          %2532 = vmatpush.msra.mxu0 0.0
          %2533 = vmatpush.msra.mxu0 0.0
          %2534 = vmatpush.msra.mxu0 0.0
          %2535 = vmatpush.msra.mxu0 0.0
          %2536 = vmatpush.msra.mxu0 0.0
          %v2537 = vand.u32 %v246, 4294901760
          %v2538 = vsub.f32 %v246, %v2537
          %v2539 = vand.u32 %v2538, 4294901760
          %2540 = vmatpush.msra.mxu0 %v2539
          %v2541 = vand.u32 %v245, 4294901760
          %v2542 = vsub.f32 %v245, %v2541
          %v2543 = vand.u32 %v2542, 4294901760
          %2544 = vmatpush.msra.mxu0 %v2543
          %v2545 = vand.u32 %v2412, 4294901760
          %2546 = vmatmul.f32.gmra.mxu0 %v2545
          %v2547 = vpop.f32.mrf.mxu0
          %v2548 = vadd.f32 %v2521, %v2547
          %2549 = vdwg.mxu0
          %2550 = vmatpush.msra.mxu0 0.0
          %2551 = vmatpush.msra.mxu0 0.0
          %2552 = vmatpush.msra.mxu0 0.0
          %2553 = vmatpush.msra.mxu0 0.0
          %2554 = vmatpush.msra.mxu0 0.0
          %2555 = vmatpush.msra.mxu0 0.0
          %2556 = vmatpush.msra.mxu0 0.0
          %2557 = vmatpush.msra.mxu0 0.0
          %2558 = vmatpush.msra.mxu0 0.0
          %2559 = vmatpush.msra.mxu0 0.0
          %2560 = vmatpush.msra.mxu0 0.0
          %2561 = vmatpush.msra.mxu0 0.0
          %2562 = vmatpush.msra.mxu0 0.0
          %2563 = vmatpush.msra.mxu0 0.0
          %v2564 = vand.u32 %v246, 4294901760
          %2565 = vmatpush.msra.mxu0 %v2564
          %v2566 = vand.u32 %v245, 4294901760
          %2567 = vmatpush.msra.mxu0 %v2566
          %v2568 = vand.u32 %v2412, 4294901760
          %2569 = vmatmul.f32.gmra.mxu0 %v2568
          %v2570 = vpop.f32.mrf.mxu0
          %v2571 = vadd.f32 %v2548, %v2570
          %2572 = vdwg.mxu0
          %2573 = vmatpush.msra.mxu0 0.0
          %2574 = vmatpush.msra.mxu0 0.0
          %2575 = vmatpush.msra.mxu0 0.0
          %2576 = vmatpush.msra.mxu0 0.0
          %2577 = vmatpush.msra.mxu0 0.0
          %2578 = vmatpush.msra.mxu0 0.0
          %2579 = vmatpush.msra.mxu0 0.0
          %2580 = vmatpush.msra.mxu0 0.0
          %2581 = vmatpush.msra.mxu0 0.0
          %2582 = vmatpush.msra.mxu0 0.0
          %2583 = vmatpush.msra.mxu0 0.0
          %2584 = vmatpush.msra.mxu0 0.0
          %2585 = vmatpush.msra.mxu0 0.0
          %2586 = vmatpush.msra.mxu0 0.0
          %v2587 = vand.u32 %v253, 4294901760
          %2588 = vmatpush.msra.mxu0 %v2587
          %v2589 = vand.u32 %v252, 4294901760
          %2590 = vmatpush.msra.mxu0 %v2589
          %v2591 = vand.u32 %v2412, 4294901760
          %v2592 = vsub.f32 %v2412, %v2591
          %v2593 = vand.u32 %v2592, 4294901760
          %v2594 = vsub.f32 %v2592, %v2593
          %v2595 = vand.u32 %v2594, 4294901760
          %2596 = vmatmul.f32.gmra.mxu0 %v2595
          %v2597 = vpop.f32.mrf.mxu0
          %v2598 = vadd.f32 0.0, %v2597
          %2599 = vdwg.mxu0
          %2600 = vmatpush.msra.mxu0 0.0
          %2601 = vmatpush.msra.mxu0 0.0
          %2602 = vmatpush.msra.mxu0 0.0
          %2603 = vmatpush.msra.mxu0 0.0
          %2604 = vmatpush.msra.mxu0 0.0
          %2605 = vmatpush.msra.mxu0 0.0
          %2606 = vmatpush.msra.mxu0 0.0
          %2607 = vmatpush.msra.mxu0 0.0
          %2608 = vmatpush.msra.mxu0 0.0
          %2609 = vmatpush.msra.mxu0 0.0
          %2610 = vmatpush.msra.mxu0 0.0
          %2611 = vmatpush.msra.mxu0 0.0
          %2612 = vmatpush.msra.mxu0 0.0
          %2613 = vmatpush.msra.mxu0 0.0
          %v2614 = vand.u32 %v253, 4294901760
          %v2615 = vsub.f32 %v253, %v2614
          %v2616 = vand.u32 %v2615, 4294901760
          %v2617 = vsub.f32 %v2615, %v2616
          %v2618 = vand.u32 %v2617, 4294901760
          %2619 = vmatpush.msra.mxu0 %v2618
          %v2620 = vand.u32 %v252, 4294901760
          %v2621 = vsub.f32 %v252, %v2620
          %v2622 = vand.u32 %v2621, 4294901760
          %v2623 = vsub.f32 %v2621, %v2622
          %v2624 = vand.u32 %v2623, 4294901760
          %2625 = vmatpush.msra.mxu0 %v2624
          %v2626 = vand.u32 %v2412, 4294901760
          %2627 = vmatmul.f32.gmra.mxu0 %v2626
          %v2628 = vpop.f32.mrf.mxu0
          %v2629 = vadd.f32 %v2598, %v2628
          %2630 = vdwg.mxu0
          %2631 = vmatpush.msra.mxu0 0.0
          %2632 = vmatpush.msra.mxu0 0.0
          %2633 = vmatpush.msra.mxu0 0.0
          %2634 = vmatpush.msra.mxu0 0.0
          %2635 = vmatpush.msra.mxu0 0.0
          %2636 = vmatpush.msra.mxu0 0.0
          %2637 = vmatpush.msra.mxu0 0.0
          %2638 = vmatpush.msra.mxu0 0.0
          %2639 = vmatpush.msra.mxu0 0.0
          %2640 = vmatpush.msra.mxu0 0.0
          %2641 = vmatpush.msra.mxu0 0.0
          %2642 = vmatpush.msra.mxu0 0.0
          %2643 = vmatpush.msra.mxu0 0.0
          %2644 = vmatpush.msra.mxu0 0.0
          %v2645 = vand.u32 %v253, 4294901760
          %v2646 = vsub.f32 %v253, %v2645
          %2647 = vmatpush.msra.mxu0 %v2646
          %v2648 = vand.u32 %v252, 4294901760
          %v2649 = vsub.f32 %v252, %v2648
          %2650 = vmatpush.msra.mxu0 %v2649
          %v2651 = vand.u32 %v2412, 4294901760
          %v2652 = vsub.f32 %v2412, %v2651
          %2653 = vmatmul.f32.gmra.mxu0 %v2652
          %v2654 = vpop.f32.mrf.mxu0
          %v2655 = vadd.f32 %v2629, %v2654
          %2656 = vdwg.mxu0
          %2657 = vmatpush.msra.mxu0 0.0
          %2658 = vmatpush.msra.mxu0 0.0
          %2659 = vmatpush.msra.mxu0 0.0
          %2660 = vmatpush.msra.mxu0 0.0
          %2661 = vmatpush.msra.mxu0 0.0
          %2662 = vmatpush.msra.mxu0 0.0
          %2663 = vmatpush.msra.mxu0 0.0
          %2664 = vmatpush.msra.mxu0 0.0
          %2665 = vmatpush.msra.mxu0 0.0
          %2666 = vmatpush.msra.mxu0 0.0
          %2667 = vmatpush.msra.mxu0 0.0
          %2668 = vmatpush.msra.mxu0 0.0
          %2669 = vmatpush.msra.mxu0 0.0
          %2670 = vmatpush.msra.mxu0 0.0
          %v2671 = vand.u32 %v253, 4294901760
          %2672 = vmatpush.msra.mxu0 %v2671
          %v2673 = vand.u32 %v252, 4294901760
          %2674 = vmatpush.msra.mxu0 %v2673
          %v2675 = vand.u32 %v2412, 4294901760
          %v2676 = vsub.f32 %v2412, %v2675
          %v2677 = vand.u32 %v2676, 4294901760
          %2678 = vmatmul.f32.gmra.mxu0 %v2677
          %v2679 = vpop.f32.mrf.mxu0
          %v2680 = vadd.f32 %v2655, %v2679
          %2681 = vdwg.mxu0
          %2682 = vmatpush.msra.mxu0 0.0
          %2683 = vmatpush.msra.mxu0 0.0
          %2684 = vmatpush.msra.mxu0 0.0
          %2685 = vmatpush.msra.mxu0 0.0
          %2686 = vmatpush.msra.mxu0 0.0
          %2687 = vmatpush.msra.mxu0 0.0
          %2688 = vmatpush.msra.mxu0 0.0
          %2689 = vmatpush.msra.mxu0 0.0
          %2690 = vmatpush.msra.mxu0 0.0
          %2691 = vmatpush.msra.mxu0 0.0
          %2692 = vmatpush.msra.mxu0 0.0
          %2693 = vmatpush.msra.mxu0 0.0
          %2694 = vmatpush.msra.mxu0 0.0
          %2695 = vmatpush.msra.mxu0 0.0
          %v2696 = vand.u32 %v253, 4294901760
          %v2697 = vsub.f32 %v253, %v2696
          %v2698 = vand.u32 %v2697, 4294901760
          %2699 = vmatpush.msra.mxu0 %v2698
          %v2700 = vand.u32 %v252, 4294901760
          %v2701 = vsub.f32 %v252, %v2700
          %v2702 = vand.u32 %v2701, 4294901760
          %2703 = vmatpush.msra.mxu0 %v2702
          %v2704 = vand.u32 %v2412, 4294901760
          %2705 = vmatmul.f32.gmra.mxu0 %v2704
          %v2706 = vpop.f32.mrf.mxu0
          %v2707 = vadd.f32 %v2680, %v2706
          %2708 = vdwg.mxu0
          %2709 = vmatpush.msra.mxu0 0.0
          %2710 = vmatpush.msra.mxu0 0.0
          %2711 = vmatpush.msra.mxu0 0.0
          %2712 = vmatpush.msra.mxu0 0.0
          %2713 = vmatpush.msra.mxu0 0.0
          %2714 = vmatpush.msra.mxu0 0.0
          %2715 = vmatpush.msra.mxu0 0.0
          %2716 = vmatpush.msra.mxu0 0.0
          %2717 = vmatpush.msra.mxu0 0.0
          %2718 = vmatpush.msra.mxu0 0.0
          %2719 = vmatpush.msra.mxu0 0.0
          %2720 = vmatpush.msra.mxu0 0.0
          %2721 = vmatpush.msra.mxu0 0.0
          %2722 = vmatpush.msra.mxu0 0.0
          %v2723 = vand.u32 %v253, 4294901760
          %2724 = vmatpush.msra.mxu0 %v2723
          %v2725 = vand.u32 %v252, 4294901760
          %2726 = vmatpush.msra.mxu0 %v2725
          %v2727 = vand.u32 %v2412, 4294901760
          %2728 = vmatmul.f32.gmra.mxu0 %v2727
          %v2729 = vpop.f32.mrf.mxu0
          %v2730 = vadd.f32 %v2707, %v2729
          %2731 = vdwg.mxu0
          %v2732 = vmul.f32 %v2229, %v2571
          %v2733 = vmul.f32 %v2234, %v2410
          %v2734 = vadd.f32 %v2732, %v2733
          %v2735 = vmul.f32 %v2240, %v2730
          %v2736 = vadd.f32 %v2734, %v2735
          %v2737 = vmul.f32 %v2736, %v2246
          %v2738 = vadd.f32 %v2737, %v2252
          %v2739 = vmax.f32 %v2738, 0.0
          %s2740 = scalar_lea.vmem %s215, 8 [#allocation6]
          %2741 = vst.msk [vmem:[%s2740] sm:$0xff] %vm1904, %v2739
        $region48: #{branch1_forward.1} parent=31 // pred_fallthru
          _
        %s2742 = sand.u32 %s128, 1
        %s2743 = scalar_lea.sflag [#allocation7], %s2742
        %s2744 = sand.u32 %s128, 1
        %s2745 = smul.addr %s2744, 16
        %s2746 = scalar_lea.vmem [#allocation6], %s2745
        // Predicated region
        $region49: #{branch1_forward.1} parent=31 // pred_check
          %p2747 = pneg %p138
        $region50: #{branch1_forward.1} parent=31 // pred_check_branch
          %2749 = sbr.rel (%p2747) target = $region52
        $region51: #{branch1_forward.1} parent=31 // pred_region
          %p2750 = scmp.eq.s32.totalorder %s23, 2
          %s2751 = scalar_select %p2750, %s24, 0
          %s2752 = smul.u32 2, %s2751
          %2754 = vsyncadd %s2743, 0
          %s2755 = sadd.s32 %s22, %s2752
          %s2756 = smul.addr %s2755, 8
          %s2757 = scalar_lea.hbm %s3, %s2756
          %s2758 = sshll.u32 %s2746, 4
          %s2759 = int_to_ptr.vmem [resolvable:$true] %s2758
          %s2760 = sshll.u32 %s2757, 4
          %s2761 = int_to_ptr.hbm [resolvable:$true] %s2760
          %2766 = dma.vmem_to_hbm [thread:$0]  %s2759, 256, %s2761, %s2743, 128, 128, 8
        $region52: #{branch1_forward.1} parent=31 // pred_fallthru
          _
      $region32: #{branch1_forward.1} parent=5 // pred_fallthru
        _
      %p2767 = scmp.le.s32.totalorder 2, %s12
      // Predicated region
      $region53: #{branch1_forward.1} parent=5 // pred_check
        %p2768 = pneg %p2767
      $region54: #{branch1_forward.1} parent=5 // pred_check_branch
        %2770 = sbr.rel (%p2768) target = $region56
      $region55: #{branch1_forward.1} parent=5 // pred_region
        %s2771 = ssub.s32 %s12, 2
        // Predicated region
        $region57: #{branch1_forward.1} parent=55 // pred_check
          %p2772 = pneg %p144
        $region58: #{branch1_forward.1} parent=55 // pred_check_branch
          %2774 = sbr.rel (%p2772) target = $region60
        $region59: #{branch1_forward.1} parent=55 // pred_region
          %s2775 = sand.u32 %s129, 1
          %s2776 = scalar_lea.sflag [#allocation7], %s2775
          %s2777 = sand.u32 %s129, 1
          %s2778 = smul.addr %s2777, 16
          %s2779 = scalar_lea.vmem [#allocation6], %s2778
          %2781 = dma.done %s2776, 256
        $region60: #{branch1_forward.1} parent=55 // pred_fallthru
          _
      $region56: #{branch1_forward.1} parent=5 // pred_fallthru
        _
    $region6: #{branch1_forward.1} parent=1 // loop_footer
      %s16 = sadd.s32 1, %s12
    $region7: #{branch1_forward.1} parent=1 // loop_footer_branch
      %11 = sbr.rel target = $region3
    $region8: #{branch1_forward.1} parent=1 // loop_exit
      _
    %2782 = vsyncpa [#allocation7], 1
    %s2783 = scalar_lea.sflag [#allocation7], 1
    %2784 = vsyncpa %s2783, 1

</llo_original>
